<compile_context>
chip_gen: v7x
topology: tpu7x:2x2x1
jax: 0.10.0
libtpu: 0.0.40
codegen_flags: <defaults>
</compile_context>

<pallas_src>
import functools

import jax
import jax.numpy as jnp
import numpy as np
from jax import lax
from jax.experimental import pallas as pl
from jax.experimental.pallas import tpu as pltpu


def mha_fused_kernel(x_ref, wqkv_ref, wout_ref, bout_ref, *out_and_scratch,
                     slopes, num_heads, head_dim, tq, num_q_tiles, seq_len,
                     masked, compute_dtype, return_weights):
    """One (batch, q_tile) step: fused all-head QKV projection, per-head ALiBi-biased
    softmax attention and accumulated output projection — all resident in VMEM."""
    if return_weights:
        out_ref, attn_ref, qkv_scratch = out_and_scratch
    else:
        out_ref, qkv_scratch = out_and_scratch
        attn_ref = None

    H, hd = num_heads, head_dim
    E = out_ref.shape[-1]
    kv_len = qkv_scratch.shape[0]          # padded sequence length
    qt = pl.program_id(1)

    # Fused Q/K/V projection for ALL heads, computed once per batch element.
    @pl.when(qt == 0)
    def _():
        qkv_scratch[...] = jnp.dot(
            x_ref[0], wqkv_ref[...],
            preferred_element_type=jnp.float32).astype(qkv_scratch.dtype)

    # ALiBi bias base (head-independent), generated in-kernel: no O(T^2) HBM stream.
    q_start = qt * tq
    rows = q_start + lax.broadcasted_iota(jnp.int32, (tq, kv_len), 0)
    cols = lax.broadcasted_iota(jnp.int32, (tq, kv_len), 1)
    rel = (cols - rows).astype(jnp.float32)
    if masked:
        bias_base = jnp.where(cols > rows, float("-inf"), rel)
    else:
        bias_base = -jnp.abs(rel)
    if kv_len != seq_len:                   # padded key rows must never be attended to
        bias_base = jnp.where(cols >= seq_len, float("-inf"), bias_base)

    out_acc = jnp.zeros((tq, E), jnp.float32)
    for h in range(H):                      # static unroll over heads
        # Ref-sliced reads: touch only the hd columns used by this head.
        if num_q_tiles == 1:
            q = qkv_scratch[:, h * hd:(h + 1) * hd]                       # (TQ, hd)
        else:
            qs = pl.multiple_of(qt * tq, tq)
            q = qkv_scratch[pl.ds(qs, tq), h * hd:(h + 1) * hd]           # (TQ, hd)
        k = qkv_scratch[:, (H + h) * hd:(H + h + 1) * hd]                 # (T, hd)
        v = qkv_scratch[:, (2 * H + h) * hd:(2 * H + h + 1) * hd]         # (T, hd)

        # scores = (Q * scale) @ K^T — scale is folded into W_q in the wrapper.
        scores = lax.dot_general(q, k, dimension_numbers=(((1,), (1,)), ((), ())),
                                 preferred_element_type=jnp.float32)      # (TQ, T)
        scores = scores + bias_base * slopes[h]     # slope = compile-time scalar

        m = jnp.max(scores, axis=-1, keepdims=True)
        p = jnp.exp(scores - m)
        denom = jnp.sum(p, axis=-1, keepdims=True)

        if attn_ref is not None:
            attn = p * pl.reciprocal(denom)                                # exact
            attn_ref[0, h] = attn
            ctx = jnp.dot(attn.astype(compute_dtype), v,
                          preferred_element_type=jnp.float32)              # (TQ, hd)
        else:
            # Deferred normalization: normalize the (TQ, hd) context, not (TQ, T) attn.
            ctx = jnp.dot(p.astype(compute_dtype), v,
                          preferred_element_type=jnp.float32)
            ctx = ctx * pl.reciprocal(denom, approx=True)

        # Accumulated output projection (no cross-lane head concat).
        out_acc = out_acc + jnp.dot(
            ctx.astype(compute_dtype), wout_ref[h * hd:(h + 1) * hd, :],
            preferred_element_type=jnp.float32)

    out_ref[0] = (out_acc + bout_ref[...]).astype(out_ref.dtype)


def _q_tiling(T):
    """Pick (query_tile, padded_T). Small sequences use one full-length tile; long
    sequences use 256-row tiles and pad T up (instead of falling back to tiny tiles)."""
    if T <= 256:
        return T, T
    tq = 256
    return tq, ((T + tq - 1) // tq) * tq


def _vmem_limit_bytes(T_pad, E, H, hd, tq, compute_dtype, return_weights):
    cb = jnp.dtype(compute_dtype).itemsize
    f32 = 4
    scratch = T_pad * 3 * H * hd * cb
    x_blk = 2 * T_pad * E * cb                              # double-buffered input
    weights = (E * 3 * H * hd + H * hd * E + E) * cb        # single-buffered constants
    out_blk = 2 * tq * E * f32
    attn_blk = (2 * H * tq * T_pad * f32) if return_weights else 0
    temps = 6 * tq * T_pad * f32 + 8 * tq * max(hd, E) * f32
    need = scratch + x_blk + weights + out_blk + attn_blk + temps
    try:
        info = pltpu.get_tpu_info()
        cap = getattr(info, "vmem_capacity_bytes", None) or (64 << 20)
    except Exception:
        cap = 64 << 20                                      # safe on every generation
    return min(int(cap * 0.9), max(32 << 20, int(need * 1.25)))


def multi_head_attention(x, wq, wk, wv, w_out, b_out, slopes, *, masked,
                         compute_dtype=jnp.float32, return_weights=True):
    """x:(B,T,E); wq/wk/wv:(H,E,hd) (transposed nn.Linear weights); w_out:(H*hd,E);
    b_out:(1,E); slopes: per-head ALiBi slopes (length H).
    compute_dtype=jnp.bfloat16 is the recommended fast path on v6e/v7x."""
    B, T, E = x.shape
    H, _, hd = wq.shape
    scale = float(hd) ** -0.5
    slopes_static = tuple(float(s) for s in np.asarray(slopes))

    tq, T_pad = _q_tiling(T)
    nq = T_pad // tq
    if T_pad != T:
        x = jnp.pad(x, ((0, 0), (0, T_pad - T), (0, 0)))

    # Fused projection weight: (E, 3*H*hd) = [all-head Q | all-head K | all-head V],
    # head-major inside each third; the softmax scale is folded into the Q third.
    def _fuse(w):                                           # (H, E, hd) -> (E, H*hd)
        return jnp.transpose(w, (1, 0, 2)).reshape(E, H * hd)
    w_qkv = jnp.concatenate([_fuse(wq) * scale, _fuse(wk), _fuse(wv)],
                            axis=1).astype(compute_dtype)

    kernel = functools.partial(
        mha_fused_kernel, slopes=slopes_static, num_heads=H, head_dim=hd, tq=tq,
        num_q_tiles=nq, seq_len=T, masked=masked, compute_dtype=compute_dtype,
        return_weights=return_weights)

    if return_weights:
        out_shape = (jax.ShapeDtypeStruct((B, T_pad, E), jnp.float32),
                     jax.ShapeDtypeStruct((B, H, T_pad, T_pad), jnp.float32))
        out_specs = (pl.BlockSpec((1, tq, E), lambda b, q: (b, q, 0)),
                     pl.BlockSpec((1, H, tq, T_pad), lambda b, q: (b, 0, q, 0)))
    else:
        out_shape = jax.ShapeDtypeStruct((B, T_pad, E), jnp.float32)
        out_specs = pl.BlockSpec((1, tq, E), lambda b, q: (b, q, 0))

    vmem_limit = _vmem_limit_bytes(T_pad, E, H, hd, tq, compute_dtype, return_weights)

    x_c = x.astype(compute_dtype)
    w_out_c = w_out.astype(compute_dtype)
    b_out_c = b_out.astype(jnp.float32)

    def _run(single_buffer_consts):
        pmode = pl.Buffered(1) if single_buffer_consts else None
        in_specs = [
            pl.BlockSpec((1, T_pad, E), lambda b, q: (b, 0, 0)),       # x (per batch)
            pl.BlockSpec((E, 3 * H * hd), lambda b, q: (0, 0),
                         pipeline_mode=pmode),                          # fused W_qkv
            pl.BlockSpec((H * hd, E), lambda b, q: (0, 0),
                         pipeline_mode=pmode),                          # W_out
            pl.BlockSpec((1, E), lambda b, q: (0, 0),
                         pipeline_mode=pmode),                          # b_out
        ]
        call = pl.pallas_call(
            kernel,
            out_shape=out_shape,
            grid_spec=pltpu.PrefetchScalarGridSpec(
                num_scalar_prefetch=0,
                grid=(B, nq),                       # q-tile axis last (scratch carry)
                in_specs=in_specs,
                out_specs=out_specs,
                scratch_shapes=[pltpu.VMEM((T_pad, 3 * H * hd), compute_dtype)]),
            compiler_params=pltpu.CompilerParams(
                dimension_semantics=("parallel", "arbitrary"),
                vmem_limit_bytes=vmem_limit),
        )
        return jax.block_until_ready(call(x_c, w_qkv, w_out_c, b_out_c))

    try:
        results = _run(True)
    except Exception:
        # Fallback if single-buffering via pl.Buffered(1) is unsupported on this jax.
        results = _run(False)

    if return_weights:
        out, attn = results
        out = out[:, :T]
        attn = attn[:, :, :T, :T]
        return out, [attn[:, h] for h in range(H)]
    return results[:, :T], None


def reference(x, wq, wk, wv, w_out, b_out, slopes, *, masked):
    """Pure-JAX reference reproducing the PyTorch forward semantics."""
    B, T, E = x.shape
    H, _, hd = wq.shape
    row = jnp.arange(T)[:, None]
    col = jnp.arange(T)[None, :]
    rel = (col - row).astype(jnp.float32)
    outs, attns = [], []
    for h in range(H):
        q = x @ wq[h]
        k = x @ wk[h]
        v = x @ wv[h]
        s = (q @ jnp.swapaxes(k, -2, -1)) * (hd ** -0.5)
        if masked:
            bias = jnp.where(col > row, -jnp.inf, rel * slopes[h])
        else:
            bias = -jnp.abs(rel) * slopes[h]
        s = s + bias[None]
        a = jax.nn.softmax(s, axis=-1)
        attns.append(a)
        outs.append(a @ v)
    cat = jnp.concatenate(outs, axis=-1)
    return cat @ w_out + b_out[0], attns


def _make_inputs(key, B, T, E, H):
    hd = E // H
    k_x, k_q, k_k, k_v, k_w, k_b = jax.random.split(key, 6)
    x = jax.random.normal(k_x, (B, T, E), jnp.float32)
    wq = jax.random.normal(k_q, (H, E, hd), jnp.float32) * 0.1
    wk = jax.random.normal(k_k, (H, E, hd), jnp.float32) * 0.1
    wv = jax.random.normal(k_v, (H, E, hd), jnp.float32) * 0.1
    w_out = jax.random.normal(k_w, (H * hd, E), jnp.float32) * 0.1
    b_out = jax.random.normal(k_b, (1, E), jnp.float32) * 0.1
    base = 2.0 ** (-8.0 / H)
    slopes = jnp.array([base ** (i + 1) for i in range(H)], jnp.float32)
    return x, wq, wk, wv, w_out, b_out, slopes


if __name__ == "__main__":
    B, T, E, H = 2, 8, 32, 4
    key = jax.random.PRNGKey(0)
    x, wq, wk, wv, w_out, b_out, slopes = _make_inputs(key, B, T, E, H)

    # f32 path, masked and unmasked, with attention weights.
    for m in (True, False):
        out, attn_list = multi_head_attention(
            x, wq, wk, wv, w_out, b_out, slopes, masked=m,
            compute_dtype=jnp.float32, return_weights=True)
        out = jax.block_until_ready(out)
        ref_out, ref_attns = reference(x, wq, wk, wv, w_out, b_out, slopes, masked=m)
        np.testing.assert_allclose(np.asarray(out), np.asarray(ref_out),
                                   rtol=1e-2, atol=1e-2)
        for h in range(H):
            np.testing.assert_allclose(np.asarray(attn_list[h]),
                                       np.asarray(ref_attns[h]),
                                       rtol=1e-2, atol=1e-2)

    ref_out_masked, _ = reference(x, wq, wk, wv, w_out, b_out, slopes, masked=True)

    # bf16 MXU-operand path (v6e/v7x fast path) — looser tolerance.
    out_bf16, _ = multi_head_attention(
        x, wq, wk, wv, w_out, b_out, slopes, masked=True,
        compute_dtype=jnp.bfloat16, return_weights=True)
    np.testing.assert_allclose(np.asarray(jax.block_until_ready(out_bf16)),
                               np.asarray(ref_out_masked), rtol=5e-2, atol=5e-2)

    # weights-free fast path (deferred normalization, no O(T^2) writeback).
    out_nw, attn_none = multi_head_attention(
        x, wq, wk, wv, w_out, b_out, slopes, masked=True,
        compute_dtype=jnp.float32, return_weights=False)
    jax.block_until_ready(out_nw)
    np.testing.assert_allclose(np.asarray(out_nw), np.asarray(ref_out_masked),
                               rtol=1e-2, atol=1e-2)
    assert attn_none is None

    # Non-divisible sequence length: exercises q-tiling + padding + scratch carry.
    Bp, Tp = 1, 300
    xp, wqp, wkp, wvp, w_outp, b_outp, slopesp = _make_inputs(
        jax.random.PRNGKey(1), Bp, Tp, E, H)
    out_p, attn_p = multi_head_attention(
        xp, wqp, wkp, wvp, w_outp, b_outp, slopesp, masked=True,
        compute_dtype=jnp.float32, return_weights=True)
    out_p = jax.block_until_ready(out_p)
    ref_out_p, ref_attns_p = reference(
        xp, wqp, wkp, wvp, w_outp, b_outp, slopesp, masked=True)
    np.testing.assert_allclose(np.asarray(out_p), np.asarray(ref_out_p),
                               rtol=1e-2, atol=1e-2)
    for h in range(H):
        np.testing.assert_allclose(np.asarray(attn_p[h]),
                                   np.asarray(ref_attns_p[h]),
                                   rtol=1e-2, atol=1e-2)

    print("KERNEL_OK")
</pallas_src>

<mosaic_0001>
module attributes {stable_mosaic.version = 11 : i64} {
  func.func @mha_fused_kernel(%arg0: i32, %arg1: i32, %arg2: memref<1x8x32xf32, #tpu.memory_space<vmem>>, %arg3: memref<32x96xf32, #tpu.memory_space<vmem>>, %arg4: memref<32x32xf32, #tpu.memory_space<vmem>>, %arg5: memref<1x32xf32, #tpu.memory_space<vmem>>, %arg6: memref<1x8x32xf32, #tpu.memory_space<vmem>>, %arg7: memref<1x4x8x8xf32, #tpu.memory_space<vmem>>, %arg8: memref<8x96xf32, #tpu.memory_space<vmem>>) attributes {dimension_semantics = [#tpu.dimension_semantics<parallel>, #tpu.dimension_semantics<arbitrary>], iteration_bounds = array<i64: 2, 1>, scalar_prefetch = 0 : i64, scratch_operands = 1 : i64, tpu.core_type = #tpu.core_type<tc>, window_params = [{transform_indices = @transform_0, window_bounds = array<i64: 1, 8, 32>}, {pipeline_mode = #tpu.pipeline_mode<synchronous>, transform_indices = @transform_1, window_bounds = array<i64: 32, 96>}, {pipeline_mode = #tpu.pipeline_mode<synchronous>, transform_indices = @transform_2, window_bounds = array<i64: 32, 32>}, {pipeline_mode = #tpu.pipeline_mode<synchronous>, transform_indices = @transform_3, window_bounds = array<i64: 1, 32>}, {transform_indices = @transform_4, window_bounds = array<i64: 1, 8, 32>}, {transform_indices = @transform_5, window_bounds = array<i64: 1, 4, 8, 8>}]} {
    %c0_i32 = arith.constant 0 : i32
    %0 = arith.cmpi eq, %arg1, %c0_i32 : i32
    %1 = arith.extui %0 : i1 to i32
    %c0_i32_0 = arith.constant 0 : i32
    %2 = arith.cmpi ne, %1, %c0_i32_0 : i32
    scf.if %2 {
      %c0_64 = arith.constant 0 : index
      %c0_65 = arith.constant 0 : index
      %c0_66 = arith.constant 0 : index
      %116 = vector.load %arg2[%c0_64, %c0_65, %c0_66] : memref<1x8x32xf32, #tpu.memory_space<vmem>>, vector<1x8x32xf32>
      %117 = vector.shape_cast %116 : vector<1x8x32xf32> to vector<8x32xf32>
      %c0_67 = arith.constant 0 : index
      %c0_68 = arith.constant 0 : index
      %118 = vector.load %arg3[%c0_67, %c0_68] : memref<32x96xf32, #tpu.memory_space<vmem>>, vector<32x96xf32>
      %cst_69 = arith.constant dense<0.000000e+00> : vector<8x96xf32>
      %119 = tpu.matmul %117, %118, %cst_69 {dimension_numbers = #tpu.dot_dimension_numbers<[1], [0], [0], [1], [0, 0, 1, 1], [], []>} : vector<8x32xf32>, vector<32x96xf32>, vector<8x96xf32> -> vector<8x96xf32>
      %c0_70 = arith.constant 0 : index
      %c0_71 = arith.constant 0 : index
      %120 = vector.load %arg8[%c0_70, %c0_71] : memref<8x96xf32, #tpu.memory_space<vmem>>, vector<8x96xf32>
      tpu.vector_store %arg8[%c0_70, %c0_71], %119 {strides = array<i32>} : memref<8x96xf32, #tpu.memory_space<vmem>>, vector<8x96xf32>,
    } else {
    }
    %c8_i32 = arith.constant 8 : i32
    %3 = arith.muli %arg1, %c8_i32 : i32
    %4 = tpu.iota {dimensions = array<i32: 0>} : vector<8x8xi32>
    %5 = vector.broadcast %3 : i32 to vector<8x8xi32>
    %6 = arith.addi %5, %4 : vector<8x8xi32>
    %7 = tpu.iota {dimensions = array<i32: 1>} : vector<8x8xi32>
    %8 = arith.subi %7, %6 : vector<8x8xi32>
    %9 = arith.sitofp %8 : vector<8x8xi32> to vector<8x8xf32>
    %10 = arith.cmpi sgt, %7, %6 : vector<8x8xi32>
    %cst = arith.constant 0xFF800000 : f32
    %11 = vector.broadcast %cst : f32 to vector<8x8xf32>
    %12 = arith.select %10, %11, %9 : vector<8x8xi1>, vector<8x8xf32>
    %cst_1 = arith.constant 0.000000e+00 : f32
    %13 = vector.broadcast %cst_1 : f32 to vector<8x32xf32>
    %c0 = arith.constant 0 : index
    %c0_2 = arith.constant 0 : index
    %14 = vector.load %arg8[%c0, %c0_2] : memref<8x96xf32, #tpu.memory_space<vmem>>, vector<8x8xf32>
    %c0_3 = arith.constant 0 : index
    %c32 = arith.constant 32 : index
    %15 = vector.load %arg8[%c0_3, %c32] : memref<8x96xf32, #tpu.memory_space<vmem>>, vector<8x8xf32>
    %c0_4 = arith.constant 0 : index
    %c64 = arith.constant 64 : index
    %16 = vector.load %arg8[%c0_4, %c64] : memref<8x96xf32, #tpu.memory_space<vmem>>, vector<8x8xf32>
    %cst_5 = arith.constant dense<0.000000e+00> : vector<8x8xf32>
    %17 = tpu.matmul %14, %15, %cst_5 {dimension_numbers = #tpu.dot_dimension_numbers<[1], [1], [0], [0], [0, 0, 1, 0], [], []>} : vector<8x8xf32>, vector<8x8xf32>, vector<8x8xf32> -> vector<8x8xf32>
    %cst_6 = arith.constant 2.500000e-01 : f32
    %18 = vector.broadcast %cst_6 : f32 to vector<8x8xf32>
    %19 = arith.mulf %12, %18 : vector<8x8xf32>
    %20 = arith.addf %17, %19 : vector<8x8xf32>
    %cst_7 = arith.constant dense<0xFF800000> : vector<8xf32>
    %21 = vector.multi_reduction <maximumf>, %20, %cst_7 [1] : vector<8x8xf32> to vector<8xf32>
    %22 = vector.shape_cast %21 : vector<8xf32> to vector<8x1xf32>
    %23 = vector.broadcast %22 : vector<8x1xf32> to vector<8x8xf32>
    %24 = arith.subf %20, %23 : vector<8x8xf32>
    %25 = math.exp %24 : vector<8x8xf32>
    %cst_8 = arith.constant dense<0.000000e+00> : vector<8xf32>
    %26 = vector.multi_reduction <add>, %25, %cst_8 [1] : vector<8x8xf32> to vector<8xf32>
    %27 = vector.shape_cast %26 : vector<8xf32> to vector<8x1xf32>
    %28 = tpu.reciprocal %27 : vector<8x1xf32> -> vector<8x1xf32>
    %29 = vector.broadcast %28 : vector<8x1xf32> to vector<8x8xf32>
    %30 = arith.mulf %25, %29 : vector<8x8xf32>
    %c0_9 = arith.constant 0 : index
    %c0_10 = arith.constant 0 : index
    %c0_11 = arith.constant 0 : index
    %c0_12 = arith.constant 0 : index
    %31 = vector.load %arg7[%c0_9, %c0_10, %c0_11, %c0_12] : memref<1x4x8x8xf32, #tpu.memory_space<vmem>>, vector<1x1x8x8xf32>
    %32 = vector.shape_cast %31 : vector<1x1x8x8xf32> to vector<8x8xf32>
    %33 = vector.shape_cast %30 : vector<8x8xf32> to vector<1x1x8x8xf32>
    tpu.vector_store %arg7[%c0_9, %c0_10, %c0_11, %c0_12], %33 {strides = array<i32>} : memref<1x4x8x8xf32, #tpu.memory_space<vmem>>, vector<1x1x8x8xf32>,
    %cst_13 = arith.constant dense<0.000000e+00> : vector<8x8xf32>
    %34 = tpu.matmul %30, %16, %cst_13 {dimension_numbers = #tpu.dot_dimension_numbers<[1], [0], [0], [1], [0, 0, 1, 1], [], []>} : vector<8x8xf32>, vector<8x8xf32>, vector<8x8xf32> -> vector<8x8xf32>
    %c0_14 = arith.constant 0 : index
    %c0_15 = arith.constant 0 : index
    %35 = vector.load %arg4[%c0_14, %c0_15] : memref<32x32xf32, #tpu.memory_space<vmem>>, vector<8x32xf32>
    %cst_16 = arith.constant dense<0.000000e+00> : vector<8x32xf32>
    %36 = tpu.matmul %34, %35, %cst_16 {dimension_numbers = #tpu.dot_dimension_numbers<[1], [0], [0], [1], [0, 0, 1, 1], [], []>} : vector<8x8xf32>, vector<8x32xf32>, vector<8x32xf32> -> vector<8x32xf32>
    %37 = arith.addf %13, %36 : vector<8x32xf32>
    %c0_17 = arith.constant 0 : index
    %c8 = arith.constant 8 : index
    %38 = vector.load %arg8[%c0_17, %c8] : memref<8x96xf32, #tpu.memory_space<vmem>>, vector<8x8xf32>
    %c0_18 = arith.constant 0 : index
    %c40 = arith.constant 40 : index
    %39 = vector.load %arg8[%c0_18, %c40] : memref<8x96xf32, #tpu.memory_space<vmem>>, vector<8x8xf32>
    %c0_19 = arith.constant 0 : index
    %c72 = arith.constant 72 : index
    %40 = vector.load %arg8[%c0_19, %c72] : memref<8x96xf32, #tpu.memory_space<vmem>>, vector<8x8xf32>
    %cst_20 = arith.constant dense<0.000000e+00> : vector<8x8xf32>
    %41 = tpu.matmul %38, %39, %cst_20 {dimension_numbers = #tpu.dot_dimension_numbers<[1], [1], [0], [0], [0, 0, 1, 0], [], []>} : vector<8x8xf32>, vector<8x8xf32>, vector<8x8xf32> -> vector<8x8xf32>
    %cst_21 = arith.constant 6.250000e-02 : f32
    %42 = vector.broadcast %cst_21 : f32 to vector<8x8xf32>
    %43 = arith.mulf %12, %42 : vector<8x8xf32>
    %44 = arith.addf %41, %43 : vector<8x8xf32>
    %cst_22 = arith.constant dense<0xFF800000> : vector<8xf32>
    %45 = vector.multi_reduction <maximumf>, %44, %cst_22 [1] : vector<8x8xf32> to vector<8xf32>
    %46 = vector.shape_cast %45 : vector<8xf32> to vector<8x1xf32>
    %47 = vector.broadcast %46 : vector<8x1xf32> to vector<8x8xf32>
    %48 = arith.subf %44, %47 : vector<8x8xf32>
    %49 = math.exp %48 : vector<8x8xf32>
    %cst_23 = arith.constant dense<0.000000e+00> : vector<8xf32>
    %50 = vector.multi_reduction <add>, %49, %cst_23 [1] : vector<8x8xf32> to vector<8xf32>
    %51 = vector.shape_cast %50 : vector<8xf32> to vector<8x1xf32>
    %52 = tpu.reciprocal %51 : vector<8x1xf32> -> vector<8x1xf32>
    %53 = vector.broadcast %52 : vector<8x1xf32> to vector<8x8xf32>
    %54 = arith.mulf %49, %53 : vector<8x8xf32>
    %c0_24 = arith.constant 0 : index
    %c1 = arith.constant 1 : index
    %c0_25 = arith.constant 0 : index
    %c0_26 = arith.constant 0 : index
    %55 = vector.load %arg7[%c0_24, %c1, %c0_25, %c0_26] : memref<1x4x8x8xf32, #tpu.memory_space<vmem>>, vector<1x1x8x8xf32>
    %56 = vector.shape_cast %55 : vector<1x1x8x8xf32> to vector<8x8xf32>
    %57 = vector.shape_cast %54 : vector<8x8xf32> to vector<1x1x8x8xf32>
    tpu.vector_store %arg7[%c0_24, %c1, %c0_25, %c0_26], %57 {strides = array<i32>} : memref<1x4x8x8xf32, #tpu.memory_space<vmem>>, vector<1x1x8x8xf32>,
    %cst_27 = arith.constant dense<0.000000e+00> : vector<8x8xf32>
    %58 = tpu.matmul %54, %40, %cst_27 {dimension_numbers = #tpu.dot_dimension_numbers<[1], [0], [0], [1], [0, 0, 1, 1], [], []>} : vector<8x8xf32>, vector<8x8xf32>, vector<8x8xf32> -> vector<8x8xf32>
    %c8_28 = arith.constant 8 : index
    %c0_29 = arith.constant 0 : index
    %59 = vector.load %arg4[%c8_28, %c0_29] : memref<32x32xf32, #tpu.memory_space<vmem>>, vector<8x32xf32>
    %cst_30 = arith.constant dense<0.000000e+00> : vector<8x32xf32>
    %60 = tpu.matmul %58, %59, %cst_30 {dimension_numbers = #tpu.dot_dimension_numbers<[1], [0], [0], [1], [0, 0, 1, 1], [], []>} : vector<8x8xf32>, vector<8x32xf32>, vector<8x32xf32> -> vector<8x32xf32>
    %61 = arith.addf %37, %60 : vector<8x32xf32>
    %c0_31 = arith.constant 0 : index
    %c16 = arith.constant 16 : index
    %62 = vector.load %arg8[%c0_31, %c16] : memref<8x96xf32, #tpu.memory_space<vmem>>, vector<8x8xf32>
    %c0_32 = arith.constant 0 : index
    %c48 = arith.constant 48 : index
    %63 = vector.load %arg8[%c0_32, %c48] : memref<8x96xf32, #tpu.memory_space<vmem>>, vector<8x8xf32>
    %c0_33 = arith.constant 0 : index
    %c80 = arith.constant 80 : index
    %64 = vector.load %arg8[%c0_33, %c80] : memref<8x96xf32, #tpu.memory_space<vmem>>, vector<8x8xf32>
    %cst_34 = arith.constant dense<0.000000e+00> : vector<8x8xf32>
    %65 = tpu.matmul %62, %63, %cst_34 {dimension_numbers = #tpu.dot_dimension_numbers<[1], [1], [0], [0], [0, 0, 1, 0], [], []>} : vector<8x8xf32>, vector<8x8xf32>, vector<8x8xf32> -> vector<8x8xf32>
    %cst_35 = arith.constant 1.562500e-02 : f32
    %66 = vector.broadcast %cst_35 : f32 to vector<8x8xf32>
    %67 = arith.mulf %12, %66 : vector<8x8xf32>
    %68 = arith.addf %65, %67 : vector<8x8xf32>
    %cst_36 = arith.constant dense<0xFF800000> : vector<8xf32>
    %69 = vector.multi_reduction <maximumf>, %68, %cst_36 [1] : vector<8x8xf32> to vector<8xf32>
    %70 = vector.shape_cast %69 : vector<8xf32> to vector<8x1xf32>
    %71 = vector.broadcast %70 : vector<8x1xf32> to vector<8x8xf32>
    %72 = arith.subf %68, %71 : vector<8x8xf32>
    %73 = math.exp %72 : vector<8x8xf32>
    %cst_37 = arith.constant dense<0.000000e+00> : vector<8xf32>
    %74 = vector.multi_reduction <add>, %73, %cst_37 [1] : vector<8x8xf32> to vector<8xf32>
    %75 = vector.shape_cast %74 : vector<8xf32> to vector<8x1xf32>
    %76 = tpu.reciprocal %75 : vector<8x1xf32> -> vector<8x1xf32>
    %77 = vector.broadcast %76 : vector<8x1xf32> to vector<8x8xf32>
    %78 = arith.mulf %73, %77 : vector<8x8xf32>
    %c0_38 = arith.constant 0 : index
    %c2 = arith.constant 2 : index
    %c0_39 = arith.constant 0 : index
    %c0_40 = arith.constant 0 : index
    %79 = vector.load %arg7[%c0_38, %c2, %c0_39, %c0_40] : memref<1x4x8x8xf32, #tpu.memory_space<vmem>>, vector<1x1x8x8xf32>
    %80 = vector.shape_cast %79 : vector<1x1x8x8xf32> to vector<8x8xf32>
    %81 = vector.shape_cast %78 : vector<8x8xf32> to vector<1x1x8x8xf32>
    tpu.vector_store %arg7[%c0_38, %c2, %c0_39, %c0_40], %81 {strides = array<i32>} : memref<1x4x8x8xf32, #tpu.memory_space<vmem>>, vector<1x1x8x8xf32>,
    %cst_41 = arith.constant dense<0.000000e+00> : vector<8x8xf32>
    %82 = tpu.matmul %78, %64, %cst_41 {dimension_numbers = #tpu.dot_dimension_numbers<[1], [0], [0], [1], [0, 0, 1, 1], [], []>} : vector<8x8xf32>, vector<8x8xf32>, vector<8x8xf32> -> vector<8x8xf32>
    %c16_42 = arith.constant 16 : index
    %c0_43 = arith.constant 0 : index
    %83 = vector.load %arg4[%c16_42, %c0_43] : memref<32x32xf32, #tpu.memory_space<vmem>>, vector<8x32xf32>
    %cst_44 = arith.constant dense<0.000000e+00> : vector<8x32xf32>
    %84 = tpu.matmul %82, %83, %cst_44 {dimension_numbers = #tpu.dot_dimension_numbers<[1], [0], [0], [1], [0, 0, 1, 1], [], []>} : vector<8x8xf32>, vector<8x32xf32>, vector<8x32xf32> -> vector<8x32xf32>
    %85 = arith.addf %61, %84 : vector<8x32xf32>
    %c0_45 = arith.constant 0 : index
    %c24 = arith.constant 24 : index
    %86 = vector.load %arg8[%c0_45, %c24] : memref<8x96xf32, #tpu.memory_space<vmem>>, vector<8x8xf32>
    %c0_46 = arith.constant 0 : index
    %c56 = arith.constant 56 : index
    %87 = vector.load %arg8[%c0_46, %c56] : memref<8x96xf32, #tpu.memory_space<vmem>>, vector<8x8xf32>
    %c0_47 = arith.constant 0 : index
    %c88 = arith.constant 88 : index
    %88 = vector.load %arg8[%c0_47, %c88] : memref<8x96xf32, #tpu.memory_space<vmem>>, vector<8x8xf32>
    %cst_48 = arith.constant dense<0.000000e+00> : vector<8x8xf32>
    %89 = tpu.matmul %86, %87, %cst_48 {dimension_numbers = #tpu.dot_dimension_numbers<[1], [1], [0], [0], [0, 0, 1, 0], [], []>} : vector<8x8xf32>, vector<8x8xf32>, vector<8x8xf32> -> vector<8x8xf32>
    %cst_49 = arith.constant 3.906250e-03 : f32
    %90 = vector.broadcast %cst_49 : f32 to vector<8x8xf32>
    %91 = arith.mulf %12, %90 : vector<8x8xf32>
    %92 = arith.addf %89, %91 : vector<8x8xf32>
    %cst_50 = arith.constant dense<0xFF800000> : vector<8xf32>
    %93 = vector.multi_reduction <maximumf>, %92, %cst_50 [1] : vector<8x8xf32> to vector<8xf32>
    %94 = vector.shape_cast %93 : vector<8xf32> to vector<8x1xf32>
    %95 = vector.broadcast %94 : vector<8x1xf32> to vector<8x8xf32>
    %96 = arith.subf %92, %95 : vector<8x8xf32>
    %97 = math.exp %96 : vector<8x8xf32>
    %cst_51 = arith.constant dense<0.000000e+00> : vector<8xf32>
    %98 = vector.multi_reduction <add>, %97, %cst_51 [1] : vector<8x8xf32> to vector<8xf32>
    %99 = vector.shape_cast %98 : vector<8xf32> to vector<8x1xf32>
    %100 = tpu.reciprocal %99 : vector<8x1xf32> -> vector<8x1xf32>
    %101 = vector.broadcast %100 : vector<8x1xf32> to vector<8x8xf32>
    %102 = arith.mulf %97, %101 : vector<8x8xf32>
    %c0_52 = arith.constant 0 : index
    %c3 = arith.constant 3 : index
    %c0_53 = arith.constant 0 : index
    %c0_54 = arith.constant 0 : index
    %103 = vector.load %arg7[%c0_52, %c3, %c0_53, %c0_54] : memref<1x4x8x8xf32, #tpu.memory_space<vmem>>, vector<1x1x8x8xf32>
    %104 = vector.shape_cast %103 : vector<1x1x8x8xf32> to vector<8x8xf32>
    %105 = vector.shape_cast %102 : vector<8x8xf32> to vector<1x1x8x8xf32>
    tpu.vector_store %arg7[%c0_52, %c3, %c0_53, %c0_54], %105 {strides = array<i32>} : memref<1x4x8x8xf32, #tpu.memory_space<vmem>>, vector<1x1x8x8xf32>,
    %cst_55 = arith.constant dense<0.000000e+00> : vector<8x8xf32>
    %106 = tpu.matmul %102, %88, %cst_55 {dimension_numbers = #tpu.dot_dimension_numbers<[1], [0], [0], [1], [0, 0, 1, 1], [], []>} : vector<8x8xf32>, vector<8x8xf32>, vector<8x8xf32> -> vector<8x8xf32>
    %c24_56 = arith.constant 24 : index
    %c0_57 = arith.constant 0 : index
    %107 = vector.load %arg4[%c24_56, %c0_57] : memref<32x32xf32, #tpu.memory_space<vmem>>, vector<8x32xf32>
    %cst_58 = arith.constant dense<0.000000e+00> : vector<8x32xf32>
    %108 = tpu.matmul %106, %107, %cst_58 {dimension_numbers = #tpu.dot_dimension_numbers<[1], [0], [0], [1], [0, 0, 1, 1], [], []>} : vector<8x8xf32>, vector<8x32xf32>, vector<8x32xf32> -> vector<8x32xf32>
    %109 = arith.addf %85, %108 : vector<8x32xf32>
    %c0_59 = arith.constant 0 : index
    %c0_60 = arith.constant 0 : index
    %110 = vector.load %arg5[%c0_59, %c0_60] : memref<1x32xf32, #tpu.memory_space<vmem>>, vector<1x32xf32>
    %111 = vector.broadcast %110 : vector<1x32xf32> to vector<8x32xf32>
    %112 = arith.addf %109, %111 : vector<8x32xf32>
    %c0_61 = arith.constant 0 : index
    %c0_62 = arith.constant 0 : index
    %c0_63 = arith.constant 0 : index
    %113 = vector.load %arg6[%c0_61, %c0_62, %c0_63] : memref<1x8x32xf32, #tpu.memory_space<vmem>>, vector<1x8x32xf32>
    %114 = vector.shape_cast %113 : vector<1x8x32xf32> to vector<8x32xf32>
    %115 = vector.shape_cast %112 : vector<8x32xf32> to vector<1x8x32xf32>
    tpu.vector_store %arg6[%c0_61, %c0_62, %c0_63], %115 {strides = array<i32>} : memref<1x8x32xf32, #tpu.memory_space<vmem>>, vector<1x8x32xf32>,
    return
  }
  func.func @transform_0(%arg0: i32, %arg1: i32) -> (i32, i32, i32) {
    %c0_i32 = arith.constant 0 : i32
    %c0_i32_0 = arith.constant 0 : i32
    %c0_i32_1 = arith.constant 0 : i32
    return %arg0, %c0_i32, %c0_i32_0 : i32, i32, i32
  }
  func.func @transform_1(%arg0: i32, %arg1: i32) -> (i32, i32) {
    %c0_i32 = arith.constant 0 : i32
    %c0_i32_0 = arith.constant 0 : i32
    %c0_i32_1 = arith.constant 0 : i32
    return %c0_i32, %c0_i32_0 : i32, i32
  }
  func.func @transform_2(%arg0: i32, %arg1: i32) -> (i32, i32) {
    %c0_i32 = arith.constant 0 : i32
    %c0_i32_0 = arith.constant 0 : i32
    %c0_i32_1 = arith.constant 0 : i32
    return %c0_i32, %c0_i32_0 : i32, i32
  }
  func.func @transform_3(%arg0: i32, %arg1: i32) -> (i32, i32) {
    %c0_i32 = arith.constant 0 : i32
    %c0_i32_0 = arith.constant 0 : i32
    %c0_i32_1 = arith.constant 0 : i32
    return %c0_i32, %c0_i32_0 : i32, i32
  }
  func.func @transform_4(%arg0: i32, %arg1: i32) -> (i32, i32, i32) {
    %c0_i32 = arith.constant 0 : i32
    %c0_i32_0 = arith.constant 0 : i32
    return %arg0, %arg1, %c0_i32 : i32, i32, i32
  }
  func.func @transform_5(%arg0: i32, %arg1: i32) -> (i32, i32, i32, i32) {
    %c0_i32 = arith.constant 0 : i32
    %c0_i32_0 = arith.constant 0 : i32
    %c0_i32_1 = arith.constant 0 : i32
    return %arg0, %c0_i32, %arg1, %c0_i32_0 : i32, i32, i32, i32
  }
}

module attributes {stable_mosaic.version = 11 : i64} {
  func.func @mha_fused_kernel(%arg0: i32, %arg1: i32, %arg2: memref<1x8x32xf32, #tpu.memory_space<vmem>>, %arg3: memref<32x96xf32, #tpu.memory_space<vmem>>, %arg4: memref<32x32xf32, #tpu.memory_space<vmem>>, %arg5: memref<1x32xf32, #tpu.memory_space<vmem>>, %arg6: memref<1x8x32xf32, #tpu.memory_space<vmem>>, %arg7: memref<1x4x8x8xf32, #tpu.memory_space<vmem>>, %arg8: memref<8x96xf32, #tpu.memory_space<vmem>>) attributes {dimension_semantics = [#tpu.dimension_semantics<parallel>, #tpu.dimension_semantics<arbitrary>], iteration_bounds = array<i64: 2, 1>, scalar_prefetch = 0 : i64, scratch_operands = 1 : i64, tpu.core_type = #tpu.core_type<tc>, window_params = [{transform_indices = @transform_0, window_bounds = array<i64: 1, 8, 32>}, {pipeline_mode = #tpu.pipeline_mode<synchronous>, transform_indices = @transform_1, window_bounds = array<i64: 32, 96>}, {pipeline_mode = #tpu.pipeline_mode<synchronous>, transform_indices = @transform_2, window_bounds = array<i64: 32, 32>}, {pipeline_mode = #tpu.pipeline_mode<synchronous>, transform_indices = @transform_3, window_bounds = array<i64: 1, 32>}, {transform_indices = @transform_4, window_bounds = array<i64: 1, 8, 32>}, {transform_indices = @transform_5, window_bounds = array<i64: 1, 4, 8, 8>}]} {
    %c0_i32 = arith.constant 0 : i32
    %0 = arith.cmpi eq, %arg1, %c0_i32 : i32
    %1 = arith.extui %0 : i1 to i32
    %c0_i32_0 = arith.constant 0 : i32
    %2 = arith.cmpi ne, %1, %c0_i32_0 : i32
    scf.if %2 {
      %c0_64 = arith.constant 0 : index
      %c0_65 = arith.constant 0 : index
      %c0_66 = arith.constant 0 : index
      %116 = vector.load %arg2[%c0_64, %c0_65, %c0_66] : memref<1x8x32xf32, #tpu.memory_space<vmem>>, vector<1x8x32xf32>
      %117 = vector.shape_cast %116 : vector<1x8x32xf32> to vector<8x32xf32>
      %c0_67 = arith.constant 0 : index
      %c0_68 = arith.constant 0 : index
      %118 = vector.load %arg3[%c0_67, %c0_68] : memref<32x96xf32, #tpu.memory_space<vmem>>, vector<32x96xf32>
      %cst_69 = arith.constant dense<0.000000e+00> : vector<8x96xf32>
      %119 = tpu.matmul %117, %118, %cst_69 {dimension_numbers = #tpu.dot_dimension_numbers<[1], [0], [0], [1], [0, 0, 1, 1], [], []>} : vector<8x32xf32>, vector<32x96xf32>, vector<8x96xf32> -> vector<8x96xf32>
      %c0_70 = arith.constant 0 : index
      %c0_71 = arith.constant 0 : index
      %120 = vector.load %arg8[%c0_70, %c0_71] : memref<8x96xf32, #tpu.memory_space<vmem>>, vector<8x96xf32>
      tpu.vector_store %arg8[%c0_70, %c0_71], %119 {strides = array<i32>} : memref<8x96xf32, #tpu.memory_space<vmem>>, vector<8x96xf32>,
    } else {
    }
    %c8_i32 = arith.constant 8 : i32
    %3 = arith.muli %arg1, %c8_i32 : i32
    %4 = tpu.iota {dimensions = array<i32: 0>} : vector<8x8xi32>
    %5 = vector.broadcast %3 : i32 to vector<8x8xi32>
    %6 = arith.addi %5, %4 : vector<8x8xi32>
    %7 = tpu.iota {dimensions = array<i32: 1>} : vector<8x8xi32>
    %8 = arith.subi %7, %6 : vector<8x8xi32>
    %9 = arith.sitofp %8 : vector<8x8xi32> to vector<8x8xf32>
    %10 = arith.cmpi sgt, %7, %6 : vector<8x8xi32>
    %cst = arith.constant 0xFF800000 : f32
    %11 = vector.broadcast %cst : f32 to vector<8x8xf32>
    %12 = arith.select %10, %11, %9 : vector<8x8xi1>, vector<8x8xf32>
    %cst_1 = arith.constant 0.000000e+00 : f32
    %13 = vector.broadcast %cst_1 : f32 to vector<8x32xf32>
    %c0 = arith.constant 0 : index
    %c0_2 = arith.constant 0 : index
    %14 = vector.load %arg8[%c0, %c0_2] : memref<8x96xf32, #tpu.memory_space<vmem>>, vector<8x8xf32>
    %c0_3 = arith.constant 0 : index
    %c32 = arith.constant 32 : index
    %15 = vector.load %arg8[%c0_3, %c32] : memref<8x96xf32, #tpu.memory_space<vmem>>, vector<8x8xf32>
    %c0_4 = arith.constant 0 : index
    %c64 = arith.constant 64 : index
    %16 = vector.load %arg8[%c0_4, %c64] : memref<8x96xf32, #tpu.memory_space<vmem>>, vector<8x8xf32>
    %cst_5 = arith.constant dense<0.000000e+00> : vector<8x8xf32>
    %17 = tpu.matmul %14, %15, %cst_5 {dimension_numbers = #tpu.dot_dimension_numbers<[1], [1], [0], [0], [0, 0, 1, 0], [], []>} : vector<8x8xf32>, vector<8x8xf32>, vector<8x8xf32> -> vector<8x8xf32>
    %cst_6 = arith.constant 2.500000e-01 : f32
    %18 = vector.broadcast %cst_6 : f32 to vector<8x8xf32>
    %19 = arith.mulf %12, %18 : vector<8x8xf32>
    %20 = arith.addf %17, %19 : vector<8x8xf32>
    %cst_7 = arith.constant dense<0xFF800000> : vector<8xf32>
    %21 = vector.multi_reduction <maximumf>, %20, %cst_7 [1] : vector<8x8xf32> to vector<8xf32>
    %22 = vector.shape_cast %21 : vector<8xf32> to vector<8x1xf32>
    %23 = vector.broadcast %22 : vector<8x1xf32> to vector<8x8xf32>
    %24 = arith.subf %20, %23 : vector<8x8xf32>
    %25 = math.exp %24 : vector<8x8xf32>
    %cst_8 = arith.constant dense<0.000000e+00> : vector<8xf32>
    %26 = vector.multi_reduction <add>, %25, %cst_8 [1] : vector<8x8xf32> to vector<8xf32>
    %27 = vector.shape_cast %26 : vector<8xf32> to vector<8x1xf32>
    %28 = tpu.reciprocal %27 : vector<8x1xf32> -> vector<8x1xf32>
    %29 = vector.broadcast %28 : vector<8x1xf32> to vector<8x8xf32>
    %30 = arith.mulf %25, %29 : vector<8x8xf32>
    %c0_9 = arith.constant 0 : index
    %c0_10 = arith.constant 0 : index
    %c0_11 = arith.constant 0 : index
    %c0_12 = arith.constant 0 : index
    %31 = vector.load %arg7[%c0_9, %c0_10, %c0_11, %c0_12] : memref<1x4x8x8xf32, #tpu.memory_space<vmem>>, vector<1x1x8x8xf32>
    %32 = vector.shape_cast %31 : vector<1x1x8x8xf32> to vector<8x8xf32>
    %33 = vector.shape_cast %30 : vector<8x8xf32> to vector<1x1x8x8xf32>
    tpu.vector_store %arg7[%c0_9, %c0_10, %c0_11, %c0_12], %33 {strides = array<i32>} : memref<1x4x8x8xf32, #tpu.memory_space<vmem>>, vector<1x1x8x8xf32>,
    %cst_13 = arith.constant dense<0.000000e+00> : vector<8x8xf32>
    %34 = tpu.matmul %30, %16, %cst_13 {dimension_numbers = #tpu.dot_dimension_numbers<[1], [0], [0], [1], [0, 0, 1, 1], [], []>} : vector<8x8xf32>, vector<8x8xf32>, vector<8x8xf32> -> vector<8x8xf32>
    %c0_14 = arith.constant 0 : index
    %c0_15 = arith.constant 0 : index
    %35 = vector.load %arg4[%c0_14, %c0_15] : memref<32x32xf32, #tpu.memory_space<vmem>>, vector<8x32xf32>
    %cst_16 = arith.constant dense<0.000000e+00> : vector<8x32xf32>
    %36 = tpu.matmul %34, %35, %cst_16 {dimension_numbers = #tpu.dot_dimension_numbers<[1], [0], [0], [1], [0, 0, 1, 1], [], []>} : vector<8x8xf32>, vector<8x32xf32>, vector<8x32xf32> -> vector<8x32xf32>
    %37 = arith.addf %13, %36 : vector<8x32xf32>
    %c0_17 = arith.constant 0 : index
    %c8 = arith.constant 8 : index
    %38 = vector.load %arg8[%c0_17, %c8] : memref<8x96xf32, #tpu.memory_space<vmem>>, vector<8x8xf32>
    %c0_18 = arith.constant 0 : index
    %c40 = arith.constant 40 : index
    %39 = vector.load %arg8[%c0_18, %c40] : memref<8x96xf32, #tpu.memory_space<vmem>>, vector<8x8xf32>
    %c0_19 = arith.constant 0 : index
    %c72 = arith.constant 72 : index
    %40 = vector.load %arg8[%c0_19, %c72] : memref<8x96xf32, #tpu.memory_space<vmem>>, vector<8x8xf32>
    %cst_20 = arith.constant dense<0.000000e+00> : vector<8x8xf32>
    %41 = tpu.matmul %38, %39, %cst_20 {dimension_numbers = #tpu.dot_dimension_numbers<[1], [1], [0], [0], [0, 0, 1, 0], [], []>} : vector<8x8xf32>, vector<8x8xf32>, vector<8x8xf32> -> vector<8x8xf32>
    %cst_21 = arith.constant 6.250000e-02 : f32
    %42 = vector.broadcast %cst_21 : f32 to vector<8x8xf32>
    %43 = arith.mulf %12, %42 : vector<8x8xf32>
    %44 = arith.addf %41, %43 : vector<8x8xf32>
    %cst_22 = arith.constant dense<0xFF800000> : vector<8xf32>
    %45 = vector.multi_reduction <maximumf>, %44, %cst_22 [1] : vector<8x8xf32> to vector<8xf32>
    %46 = vector.shape_cast %45 : vector<8xf32> to vector<8x1xf32>
    %47 = vector.broadcast %46 : vector<8x1xf32> to vector<8x8xf32>
    %48 = arith.subf %44, %47 : vector<8x8xf32>
    %49 = math.exp %48 : vector<8x8xf32>
    %cst_23 = arith.constant dense<0.000000e+00> : vector<8xf32>
    %50 = vector.multi_reduction <add>, %49, %cst_23 [1] : vector<8x8xf32> to vector<8xf32>
    %51 = vector.shape_cast %50 : vector<8xf32> to vector<8x1xf32>
    %52 = tpu.reciprocal %51 : vector<8x1xf32> -> vector<8x1xf32>
    %53 = vector.broadcast %52 : vector<8x1xf32> to vector<8x8xf32>
    %54 = arith.mulf %49, %53 : vector<8x8xf32>
    %c0_24 = arith.constant 0 : index
    %c1 = arith.constant 1 : index
    %c0_25 = arith.constant 0 : index
    %c0_26 = arith.constant 0 : index
    %55 = vector.load %arg7[%c0_24, %c1, %c0_25, %c0_26] : memref<1x4x8x8xf32, #tpu.memory_space<vmem>>, vector<1x1x8x8xf32>
    %56 = vector.shape_cast %55 : vector<1x1x8x8xf32> to vector<8x8xf32>
    %57 = vector.shape_cast %54 : vector<8x8xf32> to vector<1x1x8x8xf32>
    tpu.vector_store %arg7[%c0_24, %c1, %c0_25, %c0_26], %57 {strides = array<i32>} : memref<1x4x8x8xf32, #tpu.memory_space<vmem>>, vector<1x1x8x8xf32>,
    %cst_27 = arith.constant dense<0.000000e+00> : vector<8x8xf32>
    %58 = tpu.matmul %54, %40, %cst_27 {dimension_numbers = #tpu.dot_dimension_numbers<[1], [0], [0], [1], [0, 0, 1, 1], [], []>} : vector<8x8xf32>, vector<8x8xf32>, vector<8x8xf32> -> vector<8x8xf32>
    %c8_28 = arith.constant 8 : index
    %c0_29 = arith.constant 0 : index
    %59 = vector.load %arg4[%c8_28, %c0_29] : memref<32x32xf32, #tpu.memory_space<vmem>>, vector<8x32xf32>
    %cst_30 = arith.constant dense<0.000000e+00> : vector<8x32xf32>
    %60 = tpu.matmul %58, %59, %cst_30 {dimension_numbers = #tpu.dot_dimension_numbers<[1], [0], [0], [1], [0, 0, 1, 1], [], []>} : vector<8x8xf32>, vector<8x32xf32>, vector<8x32xf32> -> vector<8x32xf32>
    %61 = arith.addf %37, %60 : vector<8x32xf32>
    %c0_31 = arith.constant 0 : index
    %c16 = arith.constant 16 : index
    %62 = vector.load %arg8[%c0_31, %c16] : memref<8x96xf32, #tpu.memory_space<vmem>>, vector<8x8xf32>
    %c0_32 = arith.constant 0 : index
    %c48 = arith.constant 48 : index
    %63 = vector.load %arg8[%c0_32, %c48] : memref<8x96xf32, #tpu.memory_space<vmem>>, vector<8x8xf32>
    %c0_33 = arith.constant 0 : index
    %c80 = arith.constant 80 : index
    %64 = vector.load %arg8[%c0_33, %c80] : memref<8x96xf32, #tpu.memory_space<vmem>>, vector<8x8xf32>
    %cst_34 = arith.constant dense<0.000000e+00> : vector<8x8xf32>
    %65 = tpu.matmul %62, %63, %cst_34 {dimension_numbers = #tpu.dot_dimension_numbers<[1], [1], [0], [0], [0, 0, 1, 0], [], []>} : vector<8x8xf32>, vector<8x8xf32>, vector<8x8xf32> -> vector<8x8xf32>
    %cst_35 = arith.constant 1.562500e-02 : f32
    %66 = vector.broadcast %cst_35 : f32 to vector<8x8xf32>
    %67 = arith.mulf %12, %66 : vector<8x8xf32>
    %68 = arith.addf %65, %67 : vector<8x8xf32>
    %cst_36 = arith.constant dense<0xFF800000> : vector<8xf32>
    %69 = vector.multi_reduction <maximumf>, %68, %cst_36 [1] : vector<8x8xf32> to vector<8xf32>
    %70 = vector.shape_cast %69 : vector<8xf32> to vector<8x1xf32>
    %71 = vector.broadcast %70 : vector<8x1xf32> to vector<8x8xf32>
    %72 = arith.subf %68, %71 : vector<8x8xf32>
    %73 = math.exp %72 : vector<8x8xf32>
    %cst_37 = arith.constant dense<0.000000e+00> : vector<8xf32>
    %74 = vector.multi_reduction <add>, %73, %cst_37 [1] : vector<8x8xf32> to vector<8xf32>
    %75 = vector.shape_cast %74 : vector<8xf32> to vector<8x1xf32>
    %76 = tpu.reciprocal %75 : vector<8x1xf32> -> vector<8x1xf32>
    %77 = vector.broadcast %76 : vector<8x1xf32> to vector<8x8xf32>
    %78 = arith.mulf %73, %77 : vector<8x8xf32>
    %c0_38 = arith.constant 0 : index
    %c2 = arith.constant 2 : index
    %c0_39 = arith.constant 0 : index
    %c0_40 = arith.constant 0 : index
    %79 = vector.load %arg7[%c0_38, %c2, %c0_39, %c0_40] : memref<1x4x8x8xf32, #tpu.memory_space<vmem>>, vector<1x1x8x8xf32>
    %80 = vector.shape_cast %79 : vector<1x1x8x8xf32> to vector<8x8xf32>
    %81 = vector.shape_cast %78 : vector<8x8xf32> to vector<1x1x8x8xf32>
    tpu.vector_store %arg7[%c0_38, %c2, %c0_39, %c0_40], %81 {strides = array<i32>} : memref<1x4x8x8xf32, #tpu.memory_space<vmem>>, vector<1x1x8x8xf32>,
    %cst_41 = arith.constant dense<0.000000e+00> : vector<8x8xf32>
    %82 = tpu.matmul %78, %64, %cst_41 {dimension_numbers = #tpu.dot_dimension_numbers<[1], [0], [0], [1], [0, 0, 1, 1], [], []>} : vector<8x8xf32>, vector<8x8xf32>, vector<8x8xf32> -> vector<8x8xf32>
    %c16_42 = arith.constant 16 : index
    %c0_43 = arith.constant 0 : index
    %83 = vector.load %arg4[%c16_42, %c0_43] : memref<32x32xf32, #tpu.memory_space<vmem>>, vector<8x32xf32>
    %cst_44 = arith.constant dense<0.000000e+00> : vector<8x32xf32>
    %84 = tpu.matmul %82, %83, %cst_44 {dimension_numbers = #tpu.dot_dimension_numbers<[1], [0], [0], [1], [0, 0, 1, 1], [], []>} : vector<8x8xf32>, vector<8x32xf32>, vector<8x32xf32> -> vector<8x32xf32>
    %85 = arith.addf %61, %84 : vector<8x32xf32>
    %c0_45 = arith.constant 0 : index
    %c24 = arith.constant 24 : index
    %86 = vector.load %arg8[%c0_45, %c24] : memref<8x96xf32, #tpu.memory_space<vmem>>, vector<8x8xf32>
    %c0_46 = arith.constant 0 : index
    %c56 = arith.constant 56 : index
    %87 = vector.load %arg8[%c0_46, %c56] : memref<8x96xf32, #tpu.memory_space<vmem>>, vector<8x8xf32>
    %c0_47 = arith.constant 0 : index
    %c88 = arith.constant 88 : index
    %88 = vector.load %arg8[%c0_47, %c88] : memref<8x96xf32, #tpu.memory_space<vmem>>, vector<8x8xf32>
    %cst_48 = arith.constant dense<0.000000e+00> : vector<8x8xf32>
    %89 = tpu.matmul %86, %87, %cst_48 {dimension_numbers = #tpu.dot_dimension_numbers<[1], [1], [0], [0], [0, 0, 1, 0], [], []>} : vector<8x8xf32>, vector<8x8xf32>, vector<8x8xf32> -> vector<8x8xf32>
    %cst_49 = arith.constant 3.906250e-03 : f32
    %90 = vector.broadcast %cst_49 : f32 to vector<8x8xf32>
    %91 = arith.mulf %12, %90 : vector<8x8xf32>
    %92 = arith.addf %89, %91 : vector<8x8xf32>
    %cst_50 = arith.constant dense<0xFF800000> : vector<8xf32>
    %93 = vector.multi_reduction <maximumf>, %92, %cst_50 [1] : vector<8x8xf32> to vector<8xf32>
    %94 = vector.shape_cast %93 : vector<8xf32> to vector<8x1xf32>
    %95 = vector.broadcast %94 : vector<8x1xf32> to vector<8x8xf32>
    %96 = arith.subf %92, %95 : vector<8x8xf32>
    %97 = math.exp %96 : vector<8x8xf32>
    %cst_51 = arith.constant dense<0.000000e+00> : vector<8xf32>
    %98 = vector.multi_reduction <add>, %97, %cst_51 [1] : vector<8x8xf32> to vector<8xf32>
    %99 = vector.shape_cast %98 : vector<8xf32> to vector<8x1xf32>
    %100 = tpu.reciprocal %99 : vector<8x1xf32> -> vector<8x1xf32>
    %101 = vector.broadcast %100 : vector<8x1xf32> to vector<8x8xf32>
    %102 = arith.mulf %97, %101 : vector<8x8xf32>
    %c0_52 = arith.constant 0 : index
    %c3 = arith.constant 3 : index
    %c0_53 = arith.constant 0 : index
    %c0_54 = arith.constant 0 : index
    %103 = vector.load %arg7[%c0_52, %c3, %c0_53, %c0_54] : memref<1x4x8x8xf32, #tpu.memory_space<vmem>>, vector<1x1x8x8xf32>
    %104 = vector.shape_cast %103 : vector<1x1x8x8xf32> to vector<8x8xf32>
    %105 = vector.shape_cast %102 : vector<8x8xf32> to vector<1x1x8x8xf32>
    tpu.vector_store %arg7[%c0_52, %c3, %c0_53, %c0_54], %105 {strides = array<i32>} : memref<1x4x8x8xf32, #tpu.memory_space<vmem>>, vector<1x1x8x8xf32>,
    %cst_55 = arith.constant dense<0.000000e+00> : vector<8x8xf32>
    %106 = tpu.matmul %102, %88, %cst_55 {dimension_numbers = #tpu.dot_dimension_numbers<[1], [0], [0], [1], [0, 0, 1, 1], [], []>} : vector<8x8xf32>, vector<8x8xf32>, vector<8x8xf32> -> vector<8x8xf32>
    %c24_56 = arith.constant 24 : index
    %c0_57 = arith.constant 0 : index
    %107 = vector.load %arg4[%c24_56, %c0_57] : memref<32x32xf32, #tpu.memory_space<vmem>>, vector<8x32xf32>
    %cst_58 = arith.constant dense<0.000000e+00> : vector<8x32xf32>
    %108 = tpu.matmul %106, %107, %cst_58 {dimension_numbers = #tpu.dot_dimension_numbers<[1], [0], [0], [1], [0, 0, 1, 1], [], []>} : vector<8x8xf32>, vector<8x32xf32>, vector<8x32xf32> -> vector<8x32xf32>
    %109 = arith.addf %85, %108 : vector<8x32xf32>
    %c0_59 = arith.constant 0 : index
    %c0_60 = arith.constant 0 : index
    %110 = vector.load %arg5[%c0_59, %c0_60] : memref<1x32xf32, #tpu.memory_space<vmem>>, vector<1x32xf32>
    %111 = vector.broadcast %110 : vector<1x32xf32> to vector<8x32xf32>
    %112 = arith.addf %109, %111 : vector<8x32xf32>
    %c0_61 = arith.constant 0 : index
    %c0_62 = arith.constant 0 : index
    %c0_63 = arith.constant 0 : index
    %113 = vector.load %arg6[%c0_61, %c0_62, %c0_63] : memref<1x8x32xf32, #tpu.memory_space<vmem>>, vector<1x8x32xf32>
    %114 = vector.shape_cast %113 : vector<1x8x32xf32> to vector<8x32xf32>
    %115 = vector.shape_cast %112 : vector<8x32xf32> to vector<1x8x32xf32>
    tpu.vector_store %arg6[%c0_61, %c0_62, %c0_63], %115 {strides = array<i32>} : memref<1x8x32xf32, #tpu.memory_space<vmem>>, vector<1x8x32xf32>,
    return
  }
  func.func @transform_0(%arg0: i32, %arg1: i32) -> (i32, i32, i32) {
    %c0_i32 = arith.constant 0 : i32
    %c0_i32_0 = arith.constant 0 : i32
    %c0_i32_1 = arith.constant 0 : i32
    return %arg0, %c0_i32, %c0_i32_0 : i32, i32, i32
  }
  func.func @transform_1(%arg0: i32, %arg1: i32) -> (i32, i32) {
    %c0_i32 = arith.constant 0 : i32
    %c0_i32_0 = arith.constant 0 : i32
    %c0_i32_1 = arith.constant 0 : i32
    return %c0_i32, %c0_i32_0 : i32, i32
  }
  func.func @transform_2(%arg0: i32, %arg1: i32) -> (i32, i32) {
    %c0_i32 = arith.constant 0 : i32
    %c0_i32_0 = arith.constant 0 : i32
    %c0_i32_1 = arith.constant 0 : i32
    return %c0_i32, %c0_i32_0 : i32, i32
  }
  func.func @transform_3(%arg0: i32, %arg1: i32) -> (i32, i32) {
    %c0_i32 = arith.constant 0 : i32
    %c0_i32_0 = arith.constant 0 : i32
    %c0_i32_1 = arith.constant 0 : i32
    return %c0_i32, %c0_i32_0 : i32, i32
  }
  func.func @transform_4(%arg0: i32, %arg1: i32) -> (i32, i32, i32) {
    %c0_i32 = arith.constant 0 : i32
    %c0_i32_0 = arith.constant 0 : i32
    return %arg0, %arg1, %c0_i32 : i32, i32, i32
  }
  func.func @transform_5(%arg0: i32, %arg1: i32) -> (i32, i32, i32, i32) {
    %c0_i32 = arith.constant 0 : i32
    %c0_i32_0 = arith.constant 0 : i32
    %c0_i32_1 = arith.constant 0 : i32
    return %arg0, %c0_i32, %arg1, %c0_i32_0 : i32, i32, i32, i32
  }
}

</mosaic_0001>

<llo_original>
// kernel: tpu_custom_call.1
$region0: #{tpu_custom_call.1}
  #allocation0 [shape = 'u32[]', space=smem, size = 0x4, offset = 0x4, fixed_abs, tag = 'smem constant byte address 0x4 - core index']
  #allocation1 [shape = 'u32[144,128]{1,0:T(1,128)}', space=vmem, size = 0x12000, scoped, tag = 'internal scratch']
  #allocation2 [shape = 'f32[8,96]{1,0:T(8,128)}', space=vmem, size = 0x1000, scoped, tag = 'scratch operand']
  %s0 = inlined_call_operand.hbm [shape: f32[2,8,32], index: 0, kind: input, shape index: {}]
  %s1 = inlined_call_operand.hbm [shape: f32[32,96], index: 1, kind: input, shape index: {}]
  %s2 = inlined_call_operand.hbm [shape: f32[32,32], index: 2, kind: input, shape index: {}]
  %s3 = inlined_call_operand.vmem [shape: f32[1,32], index: 3, kind: input, shape index: {}]
  %s4 = inlined_call_operand.hbm [shape: f32[2,8,32], index: 4, kind: output, shape index: {0}]
  %s5 = inlined_call_operand.hbm [shape: f32[2,4,8,8], index: 5, kind: output, shape index: {1}]
  %6 = xla_tuple %s4, %s5
  %s7 = sld [smem:[#allocation0]]
  $region73: #{tpu_custom_call.1} parent=0
    _
  %s9 = ssub.s32 1, %s7
  %s10 = scalar_select 0, %s9, %s7
  $region1: #{tpu_custom_call.1} parent=0
    #allocation3 [shape = 'u8[8192]{0}', space=vmem, size = 0x2000, scoped, tag = 'input window, operand 0']
    #allocation4 [shape = 's32[2]{0}', space=sflag, size = 0x8, scoped, tag = 'scoped memory for tpu_custom_call.1']
    #allocation5 [shape = 's32[2]{0}', space=sflag, size = 0x8, scoped, tag = 'scoped memory for tpu_custom_call.1']
    #allocation6 [shape = 'u8[16384]{0}', space=vmem, size = 0x4000, scoped, tag = 'input window, operand 1, single buffered']
    #allocation7 [shape = 's32[1]{0}', space=sflag, size = 0x4, scoped, tag = 'scoped memory for tpu_custom_call.1']
    #allocation8 [shape = 'u8[16384]{0}', space=vmem, size = 0x4000, scoped, tag = 'input window, operand 2, single buffered']
    #allocation9 [shape = 'u8[8192]{0}', space=vmem, size = 0x2000, scoped, tag = 'output window, operand 0']
    #allocation10 [shape = 'u8[32768]{0}', space=vmem, size = 0x8000, scoped, tag = 'output window, operand 1']
    #allocation11 [shape = 's32[2]{0}', space=sflag, size = 0x8, scoped, tag = 'scoped memory for tpu_custom_call.1']
    %11 = vsyncpa [#allocation4], 0
    %s12 = scalar_lea.sflag [#allocation4], 1
    %13 = vsyncpa %s12, 0
    %14 = vsyncpa [#allocation7], 0
    %15 = vsyncpa [#allocation5], 0
    %s16 = scalar_lea.sflag [#allocation5], 1
    %17 = vsyncpa %s16, 0
    %18 = vsyncpa [#allocation11], 0
    %s19 = scalar_lea.sflag [#allocation11], 1
    %20 = vsyncpa %s19, 0
    loop: start=0, step=1, limit=4
    $region2: #{tpu_custom_call.1} parent=1 // loop_pre_header
      _
    $region3: #{tpu_custom_call.1} parent=1 // loop_header
      %s22 = sphi 0, %s26
      %p23 = scmp.ge.s32.totalorder %s22, 4
      %s29 = sphi 0, %s41
      %s30 = sphi 0, %s37
      %s31 = sphi 0, %s29
      %s32 = sphi 0, %s30
      %s33 = sphi 0, %s31
      %s34 = sphi 0, %s32
      %s44 = sphi 0, %s46
      %s47 = sphi 0, %s44
      %s48 = sphi 0, %s47
      %s64 = sphi 0, %s48
      %s68 = sphi 0, %s68
      %s70 = sphi 0, %s68
      %s71 = sphi 0, %s70
      %s85 = sphi 0, %s71
      %s89 = sphi 0, %s89
      %s91 = sphi 0, %s89
      %s92 = sphi 0, %s91
      %s106 = sphi 0, %s92
      %s110 = sphi 0, %s110
      %s112 = sphi 0, %s110
      %s113 = sphi 0, %s112
      %s127 = sphi 0, %s113
      %s135 = sphi 0, %s137
      %s138 = sphi 0, %s135
      %s139 = sphi 0, %s138
      %s155 = sphi 0, %s139
      %s163 = sphi 0, %s165
      %s166 = sphi 0, %s163
      %s167 = sphi 0, %s166
      %s183 = sphi 0, %s167
    $region4: #{tpu_custom_call.1} parent=1 // loop_header_branch
      %25 = sbr.rel (%p23) target = $region8
    $region5: #{tpu_custom_call.1} parent=1 // loop_body
      %s27 = ssub.s32 %s22, 1
      %s28 = ssub.s32 %s22, 2
      %s35 = sadd.s32 1, %s30
      %p36 = scmp.ge.s32.totalorder %s35, 1
      %s37 = scalar_select %p36, 0, %s35
      %s38 = sadd.s32 1, %s29
      %s39 = scalar_select %p36, %s38, %s29
      %p40 = scmp.ge.s32.totalorder %s39, 2
      %s41 = scalar_select %p40, 0, %s39
      %s42 = ssub.s32 %s29, %s41
      %p43 = scmp.eq.s32.totalorder %s42, 0
      %s45 = sadd.s32 %s44, 1
      %s46 = scalar_select %p43, %s44, %s45
      %p49 = pneg %p43
      %p50 = scmp.eq.s32.totalorder %s22, 1
      %p51 = por %p49, %p50
      %p52 = scmp.ne.s32.totalorder %s44, %s47
      %p53 = scmp.eq.s32.totalorder %s22, 0
      %p54 = por %p52, %p53
      %p55 = scmp.ne.s32.totalorder %s44, %s47
      %p56 = scmp.eq.s32.totalorder %s27, 1
      %p57 = por %p55, %p56
      %p58 = scmp.ne.s32.totalorder %s47, %s48
      %p59 = scmp.eq.s32.totalorder %s27, 0
      %p60 = por %p58, %p59
      %p61 = scmp.ne.s32.totalorder %s47, %s48
      %p62 = scmp.eq.s32.totalorder %s28, 1
      %p63 = por %p61, %p62
      %p65 = scmp.ne.s32.totalorder %s48, %s64
      %p66 = scmp.eq.s32.totalorder %s28, 0
      %p67 = por %p65, %p66
      %s69 = sadd.s32 %s68, 1
      %p72 = scmp.eq.s32.totalorder %s22, 1
      %p73 = scmp.ne.s32.totalorder %s68, %s70
      %p74 = scmp.eq.s32.totalorder %s22, 0
      %p75 = por %p73, %p74
      %p76 = scmp.ne.s32.totalorder %s68, %s70
      %p77 = scmp.eq.s32.totalorder %s27, 1
      %p78 = por %p76, %p77
      %p79 = scmp.ne.s32.totalorder %s70, %s71
      %p80 = scmp.eq.s32.totalorder %s27, 0
      %p81 = por %p79, %p80
      %p82 = scmp.ne.s32.totalorder %s70, %s71
      %p83 = scmp.eq.s32.totalorder %s28, 1
      %p84 = por %p82, %p83
      %p86 = scmp.ne.s32.totalorder %s71, %s85
      %p87 = scmp.eq.s32.totalorder %s28, 0
      %p88 = por %p86, %p87
      %s90 = sadd.s32 %s89, 1
      %p93 = scmp.eq.s32.totalorder %s22, 1
      %p94 = scmp.ne.s32.totalorder %s89, %s91
      %p95 = scmp.eq.s32.totalorder %s22, 0
      %p96 = por %p94, %p95
      %p97 = scmp.ne.s32.totalorder %s89, %s91
      %p98 = scmp.eq.s32.totalorder %s27, 1
      %p99 = por %p97, %p98
      %p100 = scmp.ne.s32.totalorder %s91, %s92
      %p101 = scmp.eq.s32.totalorder %s27, 0
      %p102 = por %p100, %p101
      %p103 = scmp.ne.s32.totalorder %s91, %s92
      %p104 = scmp.eq.s32.totalorder %s28, 1
      %p105 = por %p103, %p104
      %p107 = scmp.ne.s32.totalorder %s92, %s106
      %p108 = scmp.eq.s32.totalorder %s28, 0
      %p109 = por %p107, %p108
      %s111 = sadd.s32 %s110, 1
      %p114 = scmp.eq.s32.totalorder %s22, 1
      %p115 = scmp.ne.s32.totalorder %s110, %s112
      %p116 = scmp.eq.s32.totalorder %s22, 0
      %p117 = por %p115, %p116
      %p118 = scmp.ne.s32.totalorder %s110, %s112
      %p119 = scmp.eq.s32.totalorder %s27, 1
      %p120 = por %p118, %p119
      %p121 = scmp.ne.s32.totalorder %s112, %s113
      %p122 = scmp.eq.s32.totalorder %s27, 0
      %p123 = por %p121, %p122
      %p124 = scmp.ne.s32.totalorder %s112, %s113
      %p125 = scmp.eq.s32.totalorder %s28, 1
      %p126 = por %p124, %p125
      %p128 = scmp.ne.s32.totalorder %s113, %s127
      %p129 = scmp.eq.s32.totalorder %s28, 0
      %p130 = por %p128, %p129
      %s131 = ssub.s32 %s29, %s41
      %s132 = ssub.s32 %s30, %s37
      %s133 = sor.u32 %s131, %s132
      %p134 = scmp.eq.s32.totalorder %s133, 0
      %s136 = sadd.s32 %s135, 1
      %s137 = scalar_select %p134, %s135, %s136
      %p140 = pneg %p134
      %p141 = scmp.eq.s32.totalorder %s22, 1
      %p142 = por %p140, %p141
      %p143 = scmp.ne.s32.totalorder %s135, %s138
      %p144 = scmp.eq.s32.totalorder %s22, 0
      %p145 = por %p143, %p144
      %p146 = scmp.ne.s32.totalorder %s135, %s138
      %p147 = scmp.eq.s32.totalorder %s27, 1
      %p148 = por %p146, %p147
      %p149 = scmp.ne.s32.totalorder %s138, %s139
      %p150 = scmp.eq.s32.totalorder %s27, 0
      %p151 = por %p149, %p150
      %p152 = scmp.ne.s32.totalorder %s138, %s139
      %p153 = scmp.eq.s32.totalorder %s28, 1
      %p154 = por %p152, %p153
      %p156 = scmp.ne.s32.totalorder %s139, %s155
      %p157 = scmp.eq.s32.totalorder %s28, 0
      %p158 = por %p156, %p157
      %s159 = ssub.s32 %s29, %s41
      %s160 = ssub.s32 %s30, %s37
      %s161 = sor.u32 %s159, %s160
      %p162 = scmp.eq.s32.totalorder %s161, 0
      %s164 = sadd.s32 %s163, 1
      %s165 = scalar_select %p162, %s163, %s164
      %p168 = pneg %p162
      %p169 = scmp.eq.s32.totalorder %s22, 1
      %p170 = por %p168, %p169
      %p171 = scmp.ne.s32.totalorder %s163, %s166
      %p172 = scmp.eq.s32.totalorder %s22, 0
      %p173 = por %p171, %p172
      %p174 = scmp.ne.s32.totalorder %s163, %s166
      %p175 = scmp.eq.s32.totalorder %s27, 1
      %p176 = por %p174, %p175
      %p177 = scmp.ne.s32.totalorder %s166, %s167
      %p178 = scmp.eq.s32.totalorder %s27, 0
      %p179 = por %p177, %p178
      %p180 = scmp.ne.s32.totalorder %s166, %s167
      %p181 = scmp.eq.s32.totalorder %s28, 1
      %p182 = por %p180, %p181
      %p184 = scmp.ne.s32.totalorder %s167, %s183
      %p185 = scmp.eq.s32.totalorder %s28, 0
      %p186 = por %p184, %p185
      %p187 = scmp.le.s32.totalorder 1, %s22
      %p188 = scmp.lt.s32.totalorder %s22, 3
      %p189 = pnand %p187, %p188
      %p190 = pneg %p189
      // Predicated region
      $region9: #{tpu_custom_call.1} parent=5 // pred_check
        _
      $region10: #{tpu_custom_call.1} parent=5 // pred_check_branch
        %192 = sbr.rel (%p189) target = $region12
      $region11: #{tpu_custom_call.1} parent=5 // pred_region
        %s193 = ssub.s32 %s22, 1
        // Predicated region
        $region13: #{tpu_custom_call.1} parent=11 // pred_check
          %p194 = pneg %p81
        $region14: #{tpu_custom_call.1} parent=11 // pred_check_branch
          %196 = sbr.rel (%p194) target = $region16
        $region15: #{tpu_custom_call.1} parent=11 // pred_region
          %s198 = ssub.s32 512, 512
          %199 = vsyncadd [#allocation7], %s198
          %s200 = sshll.u32 [#allocation6], 4
          %s201 = int_to_ptr.vmem [resolvable:$true] %s200
          %206 = dma.hbm_to_vmem [thread:$0]  %s1, 512, %s201, [#allocation7], 128, 128, 8
        $region16: #{tpu_custom_call.1} parent=11 // pred_fallthru
          _
        // Predicated region
        $region17: #{tpu_custom_call.1} parent=11 // pred_check
          %p207 = pneg %p102
        $region18: #{tpu_custom_call.1} parent=11 // pred_check_branch
          %209 = sbr.rel (%p207) target = $region20
        $region19: #{tpu_custom_call.1} parent=11 // pred_region
          %s211 = ssub.s32 512, 512
          %212 = vsyncadd [#allocation7], %s211
          %s213 = sshll.u32 [#allocation8], 4
          %s214 = int_to_ptr.vmem [resolvable:$true] %s213
          %219 = dma.hbm_to_vmem [thread:$0]  %s2, 512, %s214, [#allocation7], 128, 128, 8
        $region20: #{tpu_custom_call.1} parent=11 // pred_fallthru
          _
        // Predicated region
        $region21: #{tpu_custom_call.1} parent=11 // pred_check
          %p220 = pneg %p123
        $region22: #{tpu_custom_call.1} parent=11 // pred_check_branch
          %222 = sbr.rel (%p220) target = $region24
        $region23: #{tpu_custom_call.1} parent=11 // pred_region
          _
        $region24: #{tpu_custom_call.1} parent=11 // pred_fallthru
          _
      $region12: #{tpu_custom_call.1} parent=5 // pred_fallthru
        _
      %p223 = scmp.lt.s32.totalorder %s22, 2
      // Predicated region
      $region25: #{tpu_custom_call.1} parent=5 // pred_check
        %p224 = pneg %p223
      $region26: #{tpu_custom_call.1} parent=5 // pred_check_branch
        %226 = sbr.rel (%p224) target = $region28
      $region27: #{tpu_custom_call.1} parent=5 // pred_region
        // Predicated region
        $region29: #{tpu_custom_call.1} parent=27 // pred_check
          %p227 = pneg %p54
        $region30: #{tpu_custom_call.1} parent=27 // pred_check_branch
          %229 = sbr.rel (%p227) target = $region32
        $region31: #{tpu_custom_call.1} parent=27 // pred_region
          %s230 = sand.u32 %s44, 1
          %s231 = scalar_lea.sflag [#allocation4], %s230
          %s232 = sand.u32 %s44, 1
          %s233 = smul.addr %s232, 8
          %s234 = scalar_lea.vmem [#allocation3], %s233
          %s236 = ssub.s32 128, 128
          %237 = vsyncadd %s231, %s236
          %s238 = smul.addr %s29, 128
          %s239 = scalar_lea.hbm %s0, %s238
          %s241 = sshll.u32 %s234, 4
          %s242 = int_to_ptr.vmem [resolvable:$true] %s241
          %244 = dma.hbm_to_vmem [thread:$0]  %s239, 128, %s242, %s231
        $region32: #{tpu_custom_call.1} parent=27 // pred_fallthru
          _
      $region28: #{tpu_custom_call.1} parent=5 // pred_fallthru
        _
      %p245 = scmp.le.s32.totalorder 1, %s22
      %p246 = scmp.lt.s32.totalorder %s22, 3
      %p247 = pnand %p245, %p246
      %p248 = pneg %p247
      // Predicated region
      $region33: #{tpu_custom_call.1} parent=5 // pred_check
        _
      $region34: #{tpu_custom_call.1} parent=5 // pred_check_branch
        %250 = sbr.rel (%p247) target = $region36
      $region35: #{tpu_custom_call.1} parent=5 // pred_region
        %s251 = ssub.s32 %s22, 1
        %s252 = sand.u32 %s47, 1
        %s253 = scalar_lea.sflag [#allocation4], %s252
        %s254 = sand.u32 %s47, 1
        %s255 = smul.addr %s254, 8
        %s256 = scalar_lea.vmem [#allocation3], %s255
        // Predicated region
        $region37: #{tpu_custom_call.1} parent=35 // pred_check
          %p257 = pneg %p60
        $region38: #{tpu_custom_call.1} parent=35 // pred_check_branch
          %259 = sbr.rel (%p257) target = $region40
        $region39: #{tpu_custom_call.1} parent=35 // pred_region
          %260 = dma.done %s253, 128
        $region40: #{tpu_custom_call.1} parent=35 // pred_fallthru
          _
        // Predicated region
        $region41: #{tpu_custom_call.1} parent=35 // pred_check
          %p261 = pneg %p81
        $region42: #{tpu_custom_call.1} parent=35 // pred_check_branch
          %263 = sbr.rel (%p261) target = $region44
        $region43: #{tpu_custom_call.1} parent=35 // pred_region
          %264 = dma.done [#allocation7], 512
        $region44: #{tpu_custom_call.1} parent=35 // pred_fallthru
          _
        // Predicated region
        $region45: #{tpu_custom_call.1} parent=35 // pred_check
          %p265 = pneg %p102
        $region46: #{tpu_custom_call.1} parent=35 // pred_check_branch
          %267 = sbr.rel (%p265) target = $region48
        $region47: #{tpu_custom_call.1} parent=35 // pred_region
          %268 = dma.done [#allocation7], 512
        $region48: #{tpu_custom_call.1} parent=35 // pred_fallthru
          _
        %s269 = sand.u32 %s47, 1
        %s270 = scalar_lea.sflag [#allocation4], %s269
        %s271 = sand.u32 %s47, 1
        %s272 = smul.addr %s271, 8
        %s273 = scalar_lea.vmem [#allocation3], %s272
        %p274 = pneg %p60
        %p275 = pneg %p57
        %p276 = pneg %p81
        %p277 = pneg %p78
        %p278 = pneg %p102
        %p279 = pneg %p99
        %p280 = pneg %p123
        %p281 = pneg %p120
        %p282 = pneg %p151
        %p283 = pneg %p148
        %s284 = sand.u32 %s138, 1
        %s285 = scalar_lea.sflag [#allocation5], %s284
        %s286 = sand.u32 %s138, 1
        %s287 = smul.addr %s286, 8
        %s288 = scalar_lea.vmem [#allocation9], %s287
        %p289 = pneg %p179
        %p290 = pneg %p176
        %s291 = sand.u32 %s166, 1
        %s292 = scalar_lea.sflag [#allocation11], %s291
        %s293 = sand.u32 %s166, 1
        %s294 = smul.addr %s293, 32
        %s295 = scalar_lea.vmem [#allocation10], %s294
        %p296 = scmp.eq.s32.totalorder %s32, 0
        // Predicated region
        $region49: #{tpu_custom_call.1} parent=35 // pred_check
          %p297 = pneg %p296
        $region50: #{tpu_custom_call.1} parent=35 // pred_check_branch
          %299 = sbr.rel (%p297) target = $region52
        $region51: #{tpu_custom_call.1} parent=35 // pred_region
          %v300 = vld [vmem:[%s256] sm:$0xff]
          %v301 = vld [vmem:[#allocation6] sm:$0xff]
          %v302 = vld [vmem:[#allocation6 + $0x8] sm:$0xff]
          %v303 = vld [vmem:[#allocation6 + $0x10] sm:$0xff]
          %v304 = vld [vmem:[#allocation6 + $0x18] sm:$0xff]
          %vm305 = vcmask 261120
          %v307 = vsel %vm305, %v300, 0
          %309 = vmatprep.subr.mxu0 0.0
          %310 = vmatpush1.msra.mxu0 %v301
          %311 = vmatprep.subr.mxu0 0.0
          %312 = vmatpush1.msra.mxu0 %v302
          %313 = vmatprep.subr.mxu0 0.0
          %314 = vmatpush1.msra.mxu0 %v303
          %315 = vmatprep.subr.mxu0 0.0
          %316 = vmatpush1.msra.mxu0 %v304
          %317 = vmatprep.subr.mxu0 0.0
          %318 = vmatpush1.msra.mxu0 0.0
          %319 = vmatprep.subr.mxu0 0.0
          %320 = vmatpush1.msra.mxu0 0.0
          %321 = vmatprep.subr.mxu0 0.0
          %322 = vmatpush1.msra.mxu0 0.0
          %323 = vmatprep.subr.mxu0 0.0
          %324 = vmatpush1.msra.mxu0 0.0
          %325 = vmatprep.subr.mxu0 0.0
          %326 = vmatpush1.msra.mxu0 0.0
          %327 = vmatprep.subr.mxu0 0.0
          %328 = vmatpush1.msra.mxu0 0.0
          %329 = vmatprep.subr.mxu0 0.0
          %330 = vmatpush1.msra.mxu0 0.0
          %331 = vmatprep.subr.mxu0 0.0
          %332 = vmatpush1.msra.mxu0 0.0
          %333 = vmatprep.subr.mxu0 0.0
          %334 = vmatpush1.msra.mxu0 0.0
          %335 = vmatprep.subr.mxu0 0.0
          %336 = vmatpush1.msra.mxu0 0.0
          %337 = vmatprep.subr.mxu0 0.0
          %338 = vmatpush1.msra.mxu0 0.0
          %339 = vmatprep.subr.mxu0 0.0
          %340 = vmatpush1.msra.mxu0 0.0
          %341 = vmatprep.subr.mxu0 0.0
          %342 = vmatpush1.msra.mxu0 0.0
          %343 = vmatprep.subr.mxu0 0.0
          %344 = vmatpush1.msra.mxu0 0.0
          %345 = vmatprep.subr.mxu0 0.0
          %346 = vmatpush1.msra.mxu0 0.0
          %347 = vmatprep.subr.mxu0 0.0
          %348 = vmatpush1.msra.mxu0 0.0
          %349 = vmatprep.subr.mxu0 0.0
          %350 = vmatpush1.msra.mxu0 0.0
          %351 = vmatprep.subr.mxu0 0.0
          %352 = vmatpush1.msra.mxu0 0.0
          %353 = vmatprep.subr.mxu0 0.0
          %354 = vmatpush1.msra.mxu0 0.0
          %355 = vmatprep.subr.mxu0 0.0
          %356 = vmatpush1.msra.mxu0 0.0
          %357 = vmatprep.subr.mxu0 0.0
          %358 = vmatpush1.msra.mxu0 0.0
          %359 = vmatprep.subr.mxu0 0.0
          %360 = vmatpush1.msra.mxu0 0.0
          %361 = vmatprep.subr.mxu0 0.0
          %362 = vmatpush1.msra.mxu0 0.0
          %363 = vmatprep.subr.mxu0 0.0
          %364 = vmatpush1.msra.mxu0 0.0
          %365 = vmatprep.subr.mxu0 0.0
          %366 = vmatpush1.msra.mxu0 0.0
          %367 = vmatprep.subr.mxu0 0.0
          %368 = vmatpush1.msra.mxu0 0.0
          %369 = vmatprep.subr.mxu0 0.0
          %370 = vmatpush1.msra.mxu0 0.0
          %371 = vmatprep.subr.mxu0 0.0
          %372 = vmatpush1.msra.mxu0 0.0
          %373 = vmatprep.mubr.f32.mxu0 0.0
          %374 = vmatmul.mubr.f32.gmra.mrb[0].mxu0 %v307
          %v375 = vpop.f32.mrb[0].mxu0
          %v376 = vadd.f32 0.0, %v375
          %v377 = vpop.f32.mrb[0].mxu0
          %378 = vdwg.mxu0
          %vm379 = vcmask 785408
          %380 = vst.msk [vmem:[#allocation2] sm:$0xff] %vm379, %v376
        $region52: #{tpu_custom_call.1} parent=35 // pred_fallthru
          _
        %s381 = smul.u32 %s32, 8
        %v382 = vlaneseq
        %v383 = vshrl.u32 %v382, 7
        %v384 = vstv %s381
        %v385 = vadd.s32 %v384, %v383
        %v386 = vlaneseq
        %v387 = vand.u32 %v386, 127
        %v388 = vsub.s32 %v387, %v385
        %v389 = vcvt.s32.f32 %v388
        %vm390 = vcmp.gt.s32.totalorder %v387, %v385
        %v391 = vsel %vm390, -inf, %v389
        %v392 = vld [vmem:[#allocation2] sm:$0xff]
        %v393 = vmul.f32 %v391, 0.25
        %395 = vrot.lane.b32.xlu0 %v392, 96
        %v396 = vpop.permute.xlu0 %395
        %vm397 = vcmask 64512
        %v398 = vsel %vm397, %v392, 0
        %v400 = vsel %vm397, %v396, 0
        %402 = vmatprep.subr.mxu0 0.0
        %403 = vmatpush1.xpose.msra.mxu0 %v400
        %404 = vmatprep.subr.mxu0 0.0
        %405 = vmatpush1.xpose.msra.mxu0 0.0
        %406 = vmatprep.subr.mxu0 0.0
        %407 = vmatpush1.xpose.msra.mxu0 0.0
        %408 = vmatprep.subr.mxu0 0.0
        %409 = vmatpush1.xpose.msra.mxu0 0.0
        %410 = vmatprep.subr.mxu0 0.0
        %411 = vmatpush1.xpose.msra.mxu0 0.0
        %412 = vmatprep.subr.mxu0 0.0
        %413 = vmatpush1.xpose.msra.mxu0 0.0
        %414 = vmatprep.subr.mxu0 0.0
        %415 = vmatpush1.xpose.msra.mxu0 0.0
        %416 = vmatprep.subr.mxu0 0.0
        %417 = vmatpush1.xpose.msra.mxu0 0.0
        %418 = vmatprep.subr.mxu0 0.0
        %419 = vmatpush1.xpose.msra.mxu0 0.0
        %420 = vmatprep.subr.mxu0 0.0
        %421 = vmatpush1.xpose.msra.mxu0 0.0
        %422 = vmatprep.subr.mxu0 0.0
        %423 = vmatpush1.xpose.msra.mxu0 0.0
        %424 = vmatprep.subr.mxu0 0.0
        %425 = vmatpush1.xpose.msra.mxu0 0.0
        %426 = vmatprep.subr.mxu0 0.0
        %427 = vmatpush1.xpose.msra.mxu0 0.0
        %428 = vmatprep.subr.mxu0 0.0
        %429 = vmatpush1.xpose.msra.mxu0 0.0
        %430 = vmatprep.subr.mxu0 0.0
        %431 = vmatpush1.xpose.msra.mxu0 0.0
        %432 = vmatprep.subr.mxu0 0.0
        %433 = vmatpush1.xpose.msra.mxu0 0.0
        %434 = vmatprep.subr.mxu0 0.0
        %435 = vmatpush1.xpose.msra.mxu0 0.0
        %436 = vmatprep.subr.mxu0 0.0
        %437 = vmatpush1.xpose.msra.mxu0 0.0
        %438 = vmatprep.subr.mxu0 0.0
        %439 = vmatpush1.xpose.msra.mxu0 0.0
        %440 = vmatprep.subr.mxu0 0.0
        %441 = vmatpush1.xpose.msra.mxu0 0.0
        %442 = vmatprep.subr.mxu0 0.0
        %443 = vmatpush1.xpose.msra.mxu0 0.0
        %444 = vmatprep.subr.mxu0 0.0
        %445 = vmatpush1.xpose.msra.mxu0 0.0
        %446 = vmatprep.subr.mxu0 0.0
        %447 = vmatpush1.xpose.msra.mxu0 0.0
        %448 = vmatprep.subr.mxu0 0.0
        %449 = vmatpush1.xpose.msra.mxu0 0.0
        %450 = vmatprep.subr.mxu0 0.0
        %451 = vmatpush1.xpose.msra.mxu0 0.0
        %452 = vmatprep.subr.mxu0 0.0
        %453 = vmatpush1.xpose.msra.mxu0 0.0
        %454 = vmatprep.subr.mxu0 0.0
        %455 = vmatpush1.xpose.msra.mxu0 0.0
        %456 = vmatprep.subr.mxu0 0.0
        %457 = vmatpush1.xpose.msra.mxu0 0.0
        %458 = vmatprep.subr.mxu0 0.0
        %459 = vmatpush1.xpose.msra.mxu0 0.0
        %460 = vmatprep.subr.mxu0 0.0
        %461 = vmatpush1.xpose.msra.mxu0 0.0
        %462 = vmatprep.subr.mxu0 0.0
        %463 = vmatpush1.xpose.msra.mxu0 0.0
        %464 = vmatprep.subr.mxu0 0.0
        %465 = vmatpush1.xpose.msra.mxu0 0.0
        %466 = vmatprep.mubr.f32.mxu0 0.0
        %467 = vmatmul.mubr.f32.gmra.mrb[0].mxu0 %v398
        %v468 = vpop.f32.mrb[0].mxu0
        %v469 = vadd.f32 %v393, %v468
        %v470 = vpop.f32.mrb[0].mxu0
        %471 = vdwg.mxu0
        %v472 = vsel %vm397, %v469, -inf
        %473 = vmax.xlane.f32.xlu0 %v472
        %v474 = vpop.xlane.xlu0 %473
        %v475 = vsub.f32 %v469, %v474
        %v476 = vmul.f32 %v475, 1.442695
        %v477 = vpow.pop %v476
        %v478 = vsel %vm397, %v477, 0.0
        %479 = vadd.xlane.f32.xlu0 %v478
        %v480 = vpop.xlane.xlu0 %479
        %v481 = vrcp.pop %v480
        %v482 = vmul.f32 %v477, %v481
        %483 = vst.msk [vmem:[%s295] sm:$0xff] %vm397, %v482
        %484 = vrot.lane.b32.xlu0 %v392, 64
        %v485 = vpop.permute.xlu0 %484
        %v488 = vsel %vm397, %v482, 0
        %490 = vmatprep.subr.mxu0 0.0
        %491 = vmatpush1.msra.mxu0 %v485
        %492 = vmatprep.subr.mxu0 0.0
        %493 = vmatpush1.msra.mxu0 0.0
        %494 = vmatprep.subr.mxu0 0.0
        %495 = vmatpush1.msra.mxu0 0.0
        %496 = vmatprep.subr.mxu0 0.0
        %497 = vmatpush1.msra.mxu0 0.0
        %498 = vmatprep.subr.mxu0 0.0
        %499 = vmatpush1.msra.mxu0 0.0
        %500 = vmatprep.subr.mxu0 0.0
        %501 = vmatpush1.msra.mxu0 0.0
        %502 = vmatprep.subr.mxu0 0.0
        %503 = vmatpush1.msra.mxu0 0.0
        %504 = vmatprep.subr.mxu0 0.0
        %505 = vmatpush1.msra.mxu0 0.0
        %506 = vmatprep.subr.mxu0 0.0
        %507 = vmatpush1.msra.mxu0 0.0
        %508 = vmatprep.subr.mxu0 0.0
        %509 = vmatpush1.msra.mxu0 0.0
        %510 = vmatprep.subr.mxu0 0.0
        %511 = vmatpush1.msra.mxu0 0.0
        %512 = vmatprep.subr.mxu0 0.0
        %513 = vmatpush1.msra.mxu0 0.0
        %514 = vmatprep.subr.mxu0 0.0
        %515 = vmatpush1.msra.mxu0 0.0
        %516 = vmatprep.subr.mxu0 0.0
        %517 = vmatpush1.msra.mxu0 0.0
        %518 = vmatprep.subr.mxu0 0.0
        %519 = vmatpush1.msra.mxu0 0.0
        %520 = vmatprep.subr.mxu0 0.0
        %521 = vmatpush1.msra.mxu0 0.0
        %522 = vmatprep.subr.mxu0 0.0
        %523 = vmatpush1.msra.mxu0 0.0
        %524 = vmatprep.subr.mxu0 0.0
        %525 = vmatpush1.msra.mxu0 0.0
        %526 = vmatprep.subr.mxu0 0.0
        %527 = vmatpush1.msra.mxu0 0.0
        %528 = vmatprep.subr.mxu0 0.0
        %529 = vmatpush1.msra.mxu0 0.0
        %530 = vmatprep.subr.mxu0 0.0
        %531 = vmatpush1.msra.mxu0 0.0
        %532 = vmatprep.subr.mxu0 0.0
        %533 = vmatpush1.msra.mxu0 0.0
        %534 = vmatprep.subr.mxu0 0.0
        %535 = vmatpush1.msra.mxu0 0.0
        %536 = vmatprep.subr.mxu0 0.0
        %537 = vmatpush1.msra.mxu0 0.0
        %538 = vmatprep.subr.mxu0 0.0
        %539 = vmatpush1.msra.mxu0 0.0
        %540 = vmatprep.subr.mxu0 0.0
        %541 = vmatpush1.msra.mxu0 0.0
        %542 = vmatprep.subr.mxu0 0.0
        %543 = vmatpush1.msra.mxu0 0.0
        %544 = vmatprep.subr.mxu0 0.0
        %545 = vmatpush1.msra.mxu0 0.0
        %546 = vmatprep.subr.mxu0 0.0
        %547 = vmatpush1.msra.mxu0 0.0
        %548 = vmatprep.subr.mxu0 0.0
        %549 = vmatpush1.msra.mxu0 0.0
        %550 = vmatprep.subr.mxu0 0.0
        %551 = vmatpush1.msra.mxu0 0.0
        %552 = vmatprep.subr.mxu0 0.0
        %553 = vmatpush1.msra.mxu0 0.0
        %554 = vmatprep.mubr.f32.mxu0 0.0
        %555 = vmatmul.mubr.f32.gmra.mrb[0].mxu0 %v488
        %v556 = vpop.f32.mrb[0].mxu0
        %v557 = vadd.f32 0.0, %v556
        %v558 = vpop.f32.mrb[0].mxu0
        %559 = vdwg.mxu0
        %v560 = vld [vmem:[#allocation8] sm:$0xff]
        %v561 = vld [vmem:[#allocation2] sm:$0xff]
        %v562 = vmul.f32 %v391, 0.0625
        %564 = vrot.lane.b32.xlu0 %v561, 120
        %v565 = vpop.permute.xlu0 %564
        %566 = vrot.lane.b32.xlu0 %v561, 88
        %v567 = vpop.permute.xlu0 %566
        %v568 = vsel %vm397, %v565, 0
        %v570 = vsel %vm397, %v567, 0
        %572 = vmatprep.subr.mxu0 0.0
        %573 = vmatpush1.xpose.msra.mxu0 %v570
        %574 = vmatprep.subr.mxu0 0.0
        %575 = vmatpush1.xpose.msra.mxu0 0.0
        %576 = vmatprep.subr.mxu0 0.0
        %577 = vmatpush1.xpose.msra.mxu0 0.0
        %578 = vmatprep.subr.mxu0 0.0
        %579 = vmatpush1.xpose.msra.mxu0 0.0
        %580 = vmatprep.subr.mxu0 0.0
        %581 = vmatpush1.xpose.msra.mxu0 0.0
        %582 = vmatprep.subr.mxu0 0.0
        %583 = vmatpush1.xpose.msra.mxu0 0.0
        %584 = vmatprep.subr.mxu0 0.0
        %585 = vmatpush1.xpose.msra.mxu0 0.0
        %586 = vmatprep.subr.mxu0 0.0
        %587 = vmatpush1.xpose.msra.mxu0 0.0
        %588 = vmatprep.subr.mxu0 0.0
        %589 = vmatpush1.xpose.msra.mxu0 0.0
        %590 = vmatprep.subr.mxu0 0.0
        %591 = vmatpush1.xpose.msra.mxu0 0.0
        %592 = vmatprep.subr.mxu0 0.0
        %593 = vmatpush1.xpose.msra.mxu0 0.0
        %594 = vmatprep.subr.mxu0 0.0
        %595 = vmatpush1.xpose.msra.mxu0 0.0
        %596 = vmatprep.subr.mxu0 0.0
        %597 = vmatpush1.xpose.msra.mxu0 0.0
        %598 = vmatprep.subr.mxu0 0.0
        %599 = vmatpush1.xpose.msra.mxu0 0.0
        %600 = vmatprep.subr.mxu0 0.0
        %601 = vmatpush1.xpose.msra.mxu0 0.0
        %602 = vmatprep.subr.mxu0 0.0
        %603 = vmatpush1.xpose.msra.mxu0 0.0
        %604 = vmatprep.subr.mxu0 0.0
        %605 = vmatpush1.xpose.msra.mxu0 0.0
        %606 = vmatprep.subr.mxu0 0.0
        %607 = vmatpush1.xpose.msra.mxu0 0.0
        %608 = vmatprep.subr.mxu0 0.0
        %609 = vmatpush1.xpose.msra.mxu0 0.0
        %610 = vmatprep.subr.mxu0 0.0
        %611 = vmatpush1.xpose.msra.mxu0 0.0
        %612 = vmatprep.subr.mxu0 0.0
        %613 = vmatpush1.xpose.msra.mxu0 0.0
        %614 = vmatprep.subr.mxu0 0.0
        %615 = vmatpush1.xpose.msra.mxu0 0.0
        %616 = vmatprep.subr.mxu0 0.0
        %617 = vmatpush1.xpose.msra.mxu0 0.0
        %618 = vmatprep.subr.mxu0 0.0
        %619 = vmatpush1.xpose.msra.mxu0 0.0
        %620 = vmatprep.subr.mxu0 0.0
        %621 = vmatpush1.xpose.msra.mxu0 0.0
        %622 = vmatprep.subr.mxu0 0.0
        %623 = vmatpush1.xpose.msra.mxu0 0.0
        %624 = vmatprep.subr.mxu0 0.0
        %625 = vmatpush1.xpose.msra.mxu0 0.0
        %626 = vmatprep.subr.mxu0 0.0
        %627 = vmatpush1.xpose.msra.mxu0 0.0
        %628 = vmatprep.subr.mxu0 0.0
        %629 = vmatpush1.xpose.msra.mxu0 0.0
        %630 = vmatprep.subr.mxu0 0.0
        %631 = vmatpush1.xpose.msra.mxu0 0.0
        %632 = vmatprep.subr.mxu0 0.0
        %633 = vmatpush1.xpose.msra.mxu0 0.0
        %634 = vmatprep.subr.mxu0 0.0
        %635 = vmatpush1.xpose.msra.mxu0 0.0
        %636 = vmatprep.mubr.f32.mxu0 0.0
        %637 = vmatmul.mubr.f32.gmra.mrb[0].mxu0 %v568
        %v638 = vpop.f32.mrb[0].mxu0
        %v639 = vadd.f32 %v562, %v638
        %v640 = vpop.f32.mrb[0].mxu0
        %641 = vdwg.mxu0
        %v642 = vsel %vm397, %v639, -inf
        %643 = vmax.xlane.f32.xlu0 %v642
        %v644 = vpop.xlane.xlu0 %643
        %v645 = vsub.f32 %v639, %v644
        %v646 = vmul.f32 %v645, 1.442695
        %v647 = vpow.pop %v646
        %v648 = vsel %vm397, %v647, 0.0
        %649 = vadd.xlane.f32.xlu0 %v648
        %v650 = vpop.xlane.xlu0 %649
        %v651 = vrcp.pop %v650
        %v652 = vmul.f32 %v647, %v651
        %s653 = scalar_lea.vmem %s295, 8 [#allocation10]
        %654 = vst.msk [vmem:[%s653] sm:$0xff] %vm397, %v652
        %655 = vrot.lane.b32.xlu0 %v561, 56
        %v656 = vpop.permute.xlu0 %655
        %v659 = vsel %vm397, %v652, 0
        %661 = vmatprep.subr.mxu0 0.0
        %662 = vmatpush1.msra.mxu0 %v656
        %663 = vmatprep.subr.mxu0 0.0
        %664 = vmatpush1.msra.mxu0 0.0
        %665 = vmatprep.subr.mxu0 0.0
        %666 = vmatpush1.msra.mxu0 0.0
        %667 = vmatprep.subr.mxu0 0.0
        %668 = vmatpush1.msra.mxu0 0.0
        %669 = vmatprep.subr.mxu0 0.0
        %670 = vmatpush1.msra.mxu0 0.0
        %671 = vmatprep.subr.mxu0 0.0
        %672 = vmatpush1.msra.mxu0 0.0
        %673 = vmatprep.subr.mxu0 0.0
        %674 = vmatpush1.msra.mxu0 0.0
        %675 = vmatprep.subr.mxu0 0.0
        %676 = vmatpush1.msra.mxu0 0.0
        %677 = vmatprep.subr.mxu0 0.0
        %678 = vmatpush1.msra.mxu0 0.0
        %679 = vmatprep.subr.mxu0 0.0
        %680 = vmatpush1.msra.mxu0 0.0
        %681 = vmatprep.subr.mxu0 0.0
        %682 = vmatpush1.msra.mxu0 0.0
        %683 = vmatprep.subr.mxu0 0.0
        %684 = vmatpush1.msra.mxu0 0.0
        %685 = vmatprep.subr.mxu0 0.0
        %686 = vmatpush1.msra.mxu0 0.0
        %687 = vmatprep.subr.mxu0 0.0
        %688 = vmatpush1.msra.mxu0 0.0
        %689 = vmatprep.subr.mxu0 0.0
        %690 = vmatpush1.msra.mxu0 0.0
        %691 = vmatprep.subr.mxu0 0.0
        %692 = vmatpush1.msra.mxu0 0.0
        %693 = vmatprep.subr.mxu0 0.0
        %694 = vmatpush1.msra.mxu0 0.0
        %695 = vmatprep.subr.mxu0 0.0
        %696 = vmatpush1.msra.mxu0 0.0
        %697 = vmatprep.subr.mxu0 0.0
        %698 = vmatpush1.msra.mxu0 0.0
        %699 = vmatprep.subr.mxu0 0.0
        %700 = vmatpush1.msra.mxu0 0.0
        %701 = vmatprep.subr.mxu0 0.0
        %702 = vmatpush1.msra.mxu0 0.0
        %703 = vmatprep.subr.mxu0 0.0
        %704 = vmatpush1.msra.mxu0 0.0
        %705 = vmatprep.subr.mxu0 0.0
        %706 = vmatpush1.msra.mxu0 0.0
        %707 = vmatprep.subr.mxu0 0.0
        %708 = vmatpush1.msra.mxu0 0.0
        %709 = vmatprep.subr.mxu0 0.0
        %710 = vmatpush1.msra.mxu0 0.0
        %711 = vmatprep.subr.mxu0 0.0
        %712 = vmatpush1.msra.mxu0 0.0
        %713 = vmatprep.subr.mxu0 0.0
        %714 = vmatpush1.msra.mxu0 0.0
        %715 = vmatprep.subr.mxu0 0.0
        %716 = vmatpush1.msra.mxu0 0.0
        %717 = vmatprep.subr.mxu0 0.0
        %718 = vmatpush1.msra.mxu0 0.0
        %719 = vmatprep.subr.mxu0 0.0
        %720 = vmatpush1.msra.mxu0 0.0
        %721 = vmatprep.subr.mxu0 0.0
        %722 = vmatpush1.msra.mxu0 0.0
        %723 = vmatprep.subr.mxu0 0.0
        %724 = vmatpush1.msra.mxu0 0.0
        %725 = vmatprep.mubr.f32.mxu0 0.0
        %726 = vmatmul.mubr.f32.gmra.mrb[0].mxu0 %v659
        %v727 = vpop.f32.mrb[0].mxu0
        %v728 = vadd.f32 0.0, %v727
        %v729 = vpop.f32.mrb[0].mxu0
        %730 = vdwg.mxu0
        %v731 = vld [vmem:[#allocation8 + $0x8] sm:$0xff]
        %v733 = vsel %vm397, %v728, 0
        %735 = vmatprep.subr.mxu0 0.0
        %736 = vmatpush1.msra.mxu0 %v731
        %737 = vmatprep.subr.mxu0 0.0
        %738 = vmatpush1.msra.mxu0 0.0
        %739 = vmatprep.subr.mxu0 0.0
        %740 = vmatpush1.msra.mxu0 0.0
        %741 = vmatprep.subr.mxu0 0.0
        %742 = vmatpush1.msra.mxu0 0.0
        %743 = vmatprep.subr.mxu0 0.0
        %744 = vmatpush1.msra.mxu0 0.0
        %745 = vmatprep.subr.mxu0 0.0
        %746 = vmatpush1.msra.mxu0 0.0
        %747 = vmatprep.subr.mxu0 0.0
        %748 = vmatpush1.msra.mxu0 0.0
        %749 = vmatprep.subr.mxu0 0.0
        %750 = vmatpush1.msra.mxu0 0.0
        %751 = vmatprep.subr.mxu0 0.0
        %752 = vmatpush1.msra.mxu0 0.0
        %753 = vmatprep.subr.mxu0 0.0
        %754 = vmatpush1.msra.mxu0 0.0
        %755 = vmatprep.subr.mxu0 0.0
        %756 = vmatpush1.msra.mxu0 0.0
        %757 = vmatprep.subr.mxu0 0.0
        %758 = vmatpush1.msra.mxu0 0.0
        %759 = vmatprep.subr.mxu0 0.0
        %760 = vmatpush1.msra.mxu0 0.0
        %761 = vmatprep.subr.mxu0 0.0
        %762 = vmatpush1.msra.mxu0 0.0
        %763 = vmatprep.subr.mxu0 0.0
        %764 = vmatpush1.msra.mxu0 0.0
        %765 = vmatprep.subr.mxu0 0.0
        %766 = vmatpush1.msra.mxu0 0.0
        %767 = vmatprep.subr.mxu0 0.0
        %768 = vmatpush1.msra.mxu0 0.0
        %769 = vmatprep.subr.mxu0 0.0
        %770 = vmatpush1.msra.mxu0 0.0
        %771 = vmatprep.subr.mxu0 0.0
        %772 = vmatpush1.msra.mxu0 0.0
        %773 = vmatprep.subr.mxu0 0.0
        %774 = vmatpush1.msra.mxu0 0.0
        %775 = vmatprep.subr.mxu0 0.0
        %776 = vmatpush1.msra.mxu0 0.0
        %777 = vmatprep.subr.mxu0 0.0
        %778 = vmatpush1.msra.mxu0 0.0
        %779 = vmatprep.subr.mxu0 0.0
        %780 = vmatpush1.msra.mxu0 0.0
        %781 = vmatprep.subr.mxu0 0.0
        %782 = vmatpush1.msra.mxu0 0.0
        %783 = vmatprep.subr.mxu0 0.0
        %784 = vmatpush1.msra.mxu0 0.0
        %785 = vmatprep.subr.mxu0 0.0
        %786 = vmatpush1.msra.mxu0 0.0
        %787 = vmatprep.subr.mxu0 0.0
        %788 = vmatpush1.msra.mxu0 0.0
        %789 = vmatprep.subr.mxu0 0.0
        %790 = vmatpush1.msra.mxu0 0.0
        %791 = vmatprep.subr.mxu0 0.0
        %792 = vmatpush1.msra.mxu0 0.0
        %793 = vmatprep.subr.mxu0 0.0
        %794 = vmatpush1.msra.mxu0 0.0
        %795 = vmatprep.subr.mxu0 0.0
        %796 = vmatpush1.msra.mxu0 0.0
        %797 = vmatprep.subr.mxu0 0.0
        %798 = vmatpush1.msra.mxu0 0.0
        %799 = vmatprep.mubr.f32.mxu0 0.0
        %800 = vmatmul.mubr.f32.gmra.mrb[0].mxu0 %v733
        %v801 = vpop.f32.mrb[0].mxu0
        %v802 = vadd.f32 0.0, %v801
        %v803 = vpop.f32.mrb[0].mxu0
        %804 = vdwg.mxu0
        %v806 = vsel %vm397, %v557, 0
        %808 = vmatprep.subr.mxu0 0.0
        %809 = vmatpush1.msra.mxu0 %v560
        %810 = vmatprep.subr.mxu0 0.0
        %811 = vmatpush1.msra.mxu0 0.0
        %812 = vmatprep.subr.mxu0 0.0
        %813 = vmatpush1.msra.mxu0 0.0
        %814 = vmatprep.subr.mxu0 0.0
        %815 = vmatpush1.msra.mxu0 0.0
        %816 = vmatprep.subr.mxu0 0.0
        %817 = vmatpush1.msra.mxu0 0.0
        %818 = vmatprep.subr.mxu0 0.0
        %819 = vmatpush1.msra.mxu0 0.0
        %820 = vmatprep.subr.mxu0 0.0
        %821 = vmatpush1.msra.mxu0 0.0
        %822 = vmatprep.subr.mxu0 0.0
        %823 = vmatpush1.msra.mxu0 0.0
        %824 = vmatprep.subr.mxu0 0.0
        %825 = vmatpush1.msra.mxu0 0.0
        %826 = vmatprep.subr.mxu0 0.0
        %827 = vmatpush1.msra.mxu0 0.0
        %828 = vmatprep.subr.mxu0 0.0
        %829 = vmatpush1.msra.mxu0 0.0
        %830 = vmatprep.subr.mxu0 0.0
        %831 = vmatpush1.msra.mxu0 0.0
        %832 = vmatprep.subr.mxu0 0.0
        %833 = vmatpush1.msra.mxu0 0.0
        %834 = vmatprep.subr.mxu0 0.0
        %835 = vmatpush1.msra.mxu0 0.0
        %836 = vmatprep.subr.mxu0 0.0
        %837 = vmatpush1.msra.mxu0 0.0
        %838 = vmatprep.subr.mxu0 0.0
        %839 = vmatpush1.msra.mxu0 0.0
        %840 = vmatprep.subr.mxu0 0.0
        %841 = vmatpush1.msra.mxu0 0.0
        %842 = vmatprep.subr.mxu0 0.0
        %843 = vmatpush1.msra.mxu0 0.0
        %844 = vmatprep.subr.mxu0 0.0
        %845 = vmatpush1.msra.mxu0 0.0
        %846 = vmatprep.subr.mxu0 0.0
        %847 = vmatpush1.msra.mxu0 0.0
        %848 = vmatprep.subr.mxu0 0.0
        %849 = vmatpush1.msra.mxu0 0.0
        %850 = vmatprep.subr.mxu0 0.0
        %851 = vmatpush1.msra.mxu0 0.0
        %852 = vmatprep.subr.mxu0 0.0
        %853 = vmatpush1.msra.mxu0 0.0
        %854 = vmatprep.subr.mxu0 0.0
        %855 = vmatpush1.msra.mxu0 0.0
        %856 = vmatprep.subr.mxu0 0.0
        %857 = vmatpush1.msra.mxu0 0.0
        %858 = vmatprep.subr.mxu0 0.0
        %859 = vmatpush1.msra.mxu0 0.0
        %860 = vmatprep.subr.mxu0 0.0
        %861 = vmatpush1.msra.mxu0 0.0
        %862 = vmatprep.subr.mxu0 0.0
        %863 = vmatpush1.msra.mxu0 0.0
        %864 = vmatprep.subr.mxu0 0.0
        %865 = vmatpush1.msra.mxu0 0.0
        %866 = vmatprep.subr.mxu0 0.0
        %867 = vmatpush1.msra.mxu0 0.0
        %868 = vmatprep.subr.mxu0 0.0
        %869 = vmatpush1.msra.mxu0 0.0
        %870 = vmatprep.subr.mxu0 0.0
        %871 = vmatpush1.msra.mxu0 0.0
        %872 = vmatprep.mubr.f32.mxu0 0.0
        %873 = vmatmul.mubr.f32.gmra.mrb[0].mxu0 %v806
        %v874 = vpop.f32.mrb[0].mxu0
        %v875 = vadd.f32 %v802, %v874
        %v876 = vpop.f32.mrb[0].mxu0
        %877 = vdwg.mxu0
        %v878 = vld [vmem:[#allocation2] sm:$0xff]
        %v879 = vmul.f32 %v391, 0.015625
        %881 = vrot.lane.b32.xlu0 %v878, 112
        %v882 = vpop.permute.xlu0 %881
        %883 = vrot.lane.b32.xlu0 %v878, 80
        %v884 = vpop.permute.xlu0 %883
        %v885 = vsel %vm397, %v882, 0
        %v887 = vsel %vm397, %v884, 0
        %889 = vmatprep.subr.mxu0 0.0
        %890 = vmatpush1.xpose.msra.mxu0 %v887
        %891 = vmatprep.subr.mxu0 0.0
        %892 = vmatpush1.xpose.msra.mxu0 0.0
        %893 = vmatprep.subr.mxu0 0.0
        %894 = vmatpush1.xpose.msra.mxu0 0.0
        %895 = vmatprep.subr.mxu0 0.0
        %896 = vmatpush1.xpose.msra.mxu0 0.0
        %897 = vmatprep.subr.mxu0 0.0
        %898 = vmatpush1.xpose.msra.mxu0 0.0
        %899 = vmatprep.subr.mxu0 0.0
        %900 = vmatpush1.xpose.msra.mxu0 0.0
        %901 = vmatprep.subr.mxu0 0.0
        %902 = vmatpush1.xpose.msra.mxu0 0.0
        %903 = vmatprep.subr.mxu0 0.0
        %904 = vmatpush1.xpose.msra.mxu0 0.0
        %905 = vmatprep.subr.mxu0 0.0
        %906 = vmatpush1.xpose.msra.mxu0 0.0
        %907 = vmatprep.subr.mxu0 0.0
        %908 = vmatpush1.xpose.msra.mxu0 0.0
        %909 = vmatprep.subr.mxu0 0.0
        %910 = vmatpush1.xpose.msra.mxu0 0.0
        %911 = vmatprep.subr.mxu0 0.0
        %912 = vmatpush1.xpose.msra.mxu0 0.0
        %913 = vmatprep.subr.mxu0 0.0
        %914 = vmatpush1.xpose.msra.mxu0 0.0
        %915 = vmatprep.subr.mxu0 0.0
        %916 = vmatpush1.xpose.msra.mxu0 0.0
        %917 = vmatprep.subr.mxu0 0.0
        %918 = vmatpush1.xpose.msra.mxu0 0.0
        %919 = vmatprep.subr.mxu0 0.0
        %920 = vmatpush1.xpose.msra.mxu0 0.0
        %921 = vmatprep.subr.mxu0 0.0
        %922 = vmatpush1.xpose.msra.mxu0 0.0
        %923 = vmatprep.subr.mxu0 0.0
        %924 = vmatpush1.xpose.msra.mxu0 0.0
        %925 = vmatprep.subr.mxu0 0.0
        %926 = vmatpush1.xpose.msra.mxu0 0.0
        %927 = vmatprep.subr.mxu0 0.0
        %928 = vmatpush1.xpose.msra.mxu0 0.0
        %929 = vmatprep.subr.mxu0 0.0
        %930 = vmatpush1.xpose.msra.mxu0 0.0
        %931 = vmatprep.subr.mxu0 0.0
        %932 = vmatpush1.xpose.msra.mxu0 0.0
        %933 = vmatprep.subr.mxu0 0.0
        %934 = vmatpush1.xpose.msra.mxu0 0.0
        %935 = vmatprep.subr.mxu0 0.0
        %936 = vmatpush1.xpose.msra.mxu0 0.0
        %937 = vmatprep.subr.mxu0 0.0
        %938 = vmatpush1.xpose.msra.mxu0 0.0
        %939 = vmatprep.subr.mxu0 0.0
        %940 = vmatpush1.xpose.msra.mxu0 0.0
        %941 = vmatprep.subr.mxu0 0.0
        %942 = vmatpush1.xpose.msra.mxu0 0.0
        %943 = vmatprep.subr.mxu0 0.0
        %944 = vmatpush1.xpose.msra.mxu0 0.0
        %945 = vmatprep.subr.mxu0 0.0
        %946 = vmatpush1.xpose.msra.mxu0 0.0
        %947 = vmatprep.subr.mxu0 0.0
        %948 = vmatpush1.xpose.msra.mxu0 0.0
        %949 = vmatprep.subr.mxu0 0.0
        %950 = vmatpush1.xpose.msra.mxu0 0.0
        %951 = vmatprep.subr.mxu0 0.0
        %952 = vmatpush1.xpose.msra.mxu0 0.0
        %953 = vmatprep.mubr.f32.mxu0 0.0
        %954 = vmatmul.mubr.f32.gmra.mrb[0].mxu0 %v885
        %v955 = vpop.f32.mrb[0].mxu0
        %v956 = vadd.f32 %v879, %v955
        %v957 = vpop.f32.mrb[0].mxu0
        %958 = vdwg.mxu0
        %v959 = vsel %vm397, %v956, -inf
        %960 = vmax.xlane.f32.xlu0 %v959
        %v961 = vpop.xlane.xlu0 %960
        %v962 = vsub.f32 %v956, %v961
        %v963 = vmul.f32 %v962, 1.442695
        %v964 = vpow.pop %v963
        %v965 = vsel %vm397, %v964, 0.0
        %966 = vadd.xlane.f32.xlu0 %v965
        %v967 = vpop.xlane.xlu0 %966
        %v968 = vrcp.pop %v967
        %v969 = vmul.f32 %v964, %v968
        %s970 = scalar_lea.vmem %s295, 16 [#allocation10]
        %971 = vst.msk [vmem:[%s970] sm:$0xff] %vm397, %v969
        %972 = vrot.lane.b32.xlu0 %v878, 48
        %v973 = vpop.permute.xlu0 %972
        %v976 = vsel %vm397, %v969, 0
        %978 = vmatprep.subr.mxu0 0.0
        %979 = vmatpush1.msra.mxu0 %v973
        %980 = vmatprep.subr.mxu0 0.0
        %981 = vmatpush1.msra.mxu0 0.0
        %982 = vmatprep.subr.mxu0 0.0
        %983 = vmatpush1.msra.mxu0 0.0
        %984 = vmatprep.subr.mxu0 0.0
        %985 = vmatpush1.msra.mxu0 0.0
        %986 = vmatprep.subr.mxu0 0.0
        %987 = vmatpush1.msra.mxu0 0.0
        %988 = vmatprep.subr.mxu0 0.0
        %989 = vmatpush1.msra.mxu0 0.0
        %990 = vmatprep.subr.mxu0 0.0
        %991 = vmatpush1.msra.mxu0 0.0
        %992 = vmatprep.subr.mxu0 0.0
        %993 = vmatpush1.msra.mxu0 0.0
        %994 = vmatprep.subr.mxu0 0.0
        %995 = vmatpush1.msra.mxu0 0.0
        %996 = vmatprep.subr.mxu0 0.0
        %997 = vmatpush1.msra.mxu0 0.0
        %998 = vmatprep.subr.mxu0 0.0
        %999 = vmatpush1.msra.mxu0 0.0
        %1000 = vmatprep.subr.mxu0 0.0
        %1001 = vmatpush1.msra.mxu0 0.0
        %1002 = vmatprep.subr.mxu0 0.0
        %1003 = vmatpush1.msra.mxu0 0.0
        %1004 = vmatprep.subr.mxu0 0.0
        %1005 = vmatpush1.msra.mxu0 0.0
        %1006 = vmatprep.subr.mxu0 0.0
        %1007 = vmatpush1.msra.mxu0 0.0
        %1008 = vmatprep.subr.mxu0 0.0
        %1009 = vmatpush1.msra.mxu0 0.0
        %1010 = vmatprep.subr.mxu0 0.0
        %1011 = vmatpush1.msra.mxu0 0.0
        %1012 = vmatprep.subr.mxu0 0.0
        %1013 = vmatpush1.msra.mxu0 0.0
        %1014 = vmatprep.subr.mxu0 0.0
        %1015 = vmatpush1.msra.mxu0 0.0
        %1016 = vmatprep.subr.mxu0 0.0
        %1017 = vmatpush1.msra.mxu0 0.0
        %1018 = vmatprep.subr.mxu0 0.0
        %1019 = vmatpush1.msra.mxu0 0.0
        %1020 = vmatprep.subr.mxu0 0.0
        %1021 = vmatpush1.msra.mxu0 0.0
        %1022 = vmatprep.subr.mxu0 0.0
        %1023 = vmatpush1.msra.mxu0 0.0
        %1024 = vmatprep.subr.mxu0 0.0
        %1025 = vmatpush1.msra.mxu0 0.0
        %1026 = vmatprep.subr.mxu0 0.0
        %1027 = vmatpush1.msra.mxu0 0.0
        %1028 = vmatprep.subr.mxu0 0.0
        %1029 = vmatpush1.msra.mxu0 0.0
        %1030 = vmatprep.subr.mxu0 0.0
        %1031 = vmatpush1.msra.mxu0 0.0
        %1032 = vmatprep.subr.mxu0 0.0
        %1033 = vmatpush1.msra.mxu0 0.0
        %1034 = vmatprep.subr.mxu0 0.0
        %1035 = vmatpush1.msra.mxu0 0.0
        %1036 = vmatprep.subr.mxu0 0.0
        %1037 = vmatpush1.msra.mxu0 0.0
        %1038 = vmatprep.subr.mxu0 0.0
        %1039 = vmatpush1.msra.mxu0 0.0
        %1040 = vmatprep.subr.mxu0 0.0
        %1041 = vmatpush1.msra.mxu0 0.0
        %1042 = vmatprep.mubr.f32.mxu0 0.0
        %1043 = vmatmul.mubr.f32.gmra.mrb[0].mxu0 %v976
        %v1044 = vpop.f32.mrb[0].mxu0
        %v1045 = vadd.f32 0.0, %v1044
        %v1046 = vpop.f32.mrb[0].mxu0
        %1047 = vdwg.mxu0
        %v1048 = vld [vmem:[#allocation8 + $0x10] sm:$0xff]
        %v1050 = vsel %vm397, %v1045, 0
        %1052 = vmatprep.subr.mxu0 0.0
        %1053 = vmatpush1.msra.mxu0 %v1048
        %1054 = vmatprep.subr.mxu0 0.0
        %1055 = vmatpush1.msra.mxu0 0.0
        %1056 = vmatprep.subr.mxu0 0.0
        %1057 = vmatpush1.msra.mxu0 0.0
        %1058 = vmatprep.subr.mxu0 0.0
        %1059 = vmatpush1.msra.mxu0 0.0
        %1060 = vmatprep.subr.mxu0 0.0
        %1061 = vmatpush1.msra.mxu0 0.0
        %1062 = vmatprep.subr.mxu0 0.0
        %1063 = vmatpush1.msra.mxu0 0.0
        %1064 = vmatprep.subr.mxu0 0.0
        %1065 = vmatpush1.msra.mxu0 0.0
        %1066 = vmatprep.subr.mxu0 0.0
        %1067 = vmatpush1.msra.mxu0 0.0
        %1068 = vmatprep.subr.mxu0 0.0
        %1069 = vmatpush1.msra.mxu0 0.0
        %1070 = vmatprep.subr.mxu0 0.0
        %1071 = vmatpush1.msra.mxu0 0.0
        %1072 = vmatprep.subr.mxu0 0.0
        %1073 = vmatpush1.msra.mxu0 0.0
        %1074 = vmatprep.subr.mxu0 0.0
        %1075 = vmatpush1.msra.mxu0 0.0
        %1076 = vmatprep.subr.mxu0 0.0
        %1077 = vmatpush1.msra.mxu0 0.0
        %1078 = vmatprep.subr.mxu0 0.0
        %1079 = vmatpush1.msra.mxu0 0.0
        %1080 = vmatprep.subr.mxu0 0.0
        %1081 = vmatpush1.msra.mxu0 0.0
        %1082 = vmatprep.subr.mxu0 0.0
        %1083 = vmatpush1.msra.mxu0 0.0
        %1084 = vmatprep.subr.mxu0 0.0
        %1085 = vmatpush1.msra.mxu0 0.0
        %1086 = vmatprep.subr.mxu0 0.0
        %1087 = vmatpush1.msra.mxu0 0.0
        %1088 = vmatprep.subr.mxu0 0.0
        %1089 = vmatpush1.msra.mxu0 0.0
        %1090 = vmatprep.subr.mxu0 0.0
        %1091 = vmatpush1.msra.mxu0 0.0
        %1092 = vmatprep.subr.mxu0 0.0
        %1093 = vmatpush1.msra.mxu0 0.0
        %1094 = vmatprep.subr.mxu0 0.0
        %1095 = vmatpush1.msra.mxu0 0.0
        %1096 = vmatprep.subr.mxu0 0.0
        %1097 = vmatpush1.msra.mxu0 0.0
        %1098 = vmatprep.subr.mxu0 0.0
        %1099 = vmatpush1.msra.mxu0 0.0
        %1100 = vmatprep.subr.mxu0 0.0
        %1101 = vmatpush1.msra.mxu0 0.0
        %1102 = vmatprep.subr.mxu0 0.0
        %1103 = vmatpush1.msra.mxu0 0.0
        %1104 = vmatprep.subr.mxu0 0.0
        %1105 = vmatpush1.msra.mxu0 0.0
        %1106 = vmatprep.subr.mxu0 0.0
        %1107 = vmatpush1.msra.mxu0 0.0
        %1108 = vmatprep.subr.mxu0 0.0
        %1109 = vmatpush1.msra.mxu0 0.0
        %1110 = vmatprep.subr.mxu0 0.0
        %1111 = vmatpush1.msra.mxu0 0.0
        %1112 = vmatprep.subr.mxu0 0.0
        %1113 = vmatpush1.msra.mxu0 0.0
        %1114 = vmatprep.subr.mxu0 0.0
        %1115 = vmatpush1.msra.mxu0 0.0
        %1116 = vmatprep.mubr.f32.mxu0 0.0
        %1117 = vmatmul.mubr.f32.gmra.mrb[0].mxu0 %v1050
        %v1118 = vpop.f32.mrb[0].mxu0
        %v1119 = vadd.f32 0.0, %v1118
        %v1120 = vpop.f32.mrb[0].mxu0
        %1121 = vdwg.mxu0
        %v1122 = vadd.f32 %v875, %v1119
        %v1123 = vld [vmem:[#allocation2] sm:$0xff]
        %v1124 = vmul.f32 %v391, 0.00390625
        %1126 = vrot.lane.b32.xlu0 %v1123, 104
        %v1127 = vpop.permute.xlu0 %1126
        %1128 = vrot.lane.b32.xlu0 %v1123, 72
        %v1129 = vpop.permute.xlu0 %1128
        %v1130 = vsel %vm397, %v1127, 0
        %v1132 = vsel %vm397, %v1129, 0
        %1134 = vmatprep.subr.mxu0 0.0
        %1135 = vmatpush1.xpose.msra.mxu0 %v1132
        %1136 = vmatprep.subr.mxu0 0.0
        %1137 = vmatpush1.xpose.msra.mxu0 0.0
        %1138 = vmatprep.subr.mxu0 0.0
        %1139 = vmatpush1.xpose.msra.mxu0 0.0
        %1140 = vmatprep.subr.mxu0 0.0
        %1141 = vmatpush1.xpose.msra.mxu0 0.0
        %1142 = vmatprep.subr.mxu0 0.0
        %1143 = vmatpush1.xpose.msra.mxu0 0.0
        %1144 = vmatprep.subr.mxu0 0.0
        %1145 = vmatpush1.xpose.msra.mxu0 0.0
        %1146 = vmatprep.subr.mxu0 0.0
        %1147 = vmatpush1.xpose.msra.mxu0 0.0
        %1148 = vmatprep.subr.mxu0 0.0
        %1149 = vmatpush1.xpose.msra.mxu0 0.0
        %1150 = vmatprep.subr.mxu0 0.0
        %1151 = vmatpush1.xpose.msra.mxu0 0.0
        %1152 = vmatprep.subr.mxu0 0.0
        %1153 = vmatpush1.xpose.msra.mxu0 0.0
        %1154 = vmatprep.subr.mxu0 0.0
        %1155 = vmatpush1.xpose.msra.mxu0 0.0
        %1156 = vmatprep.subr.mxu0 0.0
        %1157 = vmatpush1.xpose.msra.mxu0 0.0
        %1158 = vmatprep.subr.mxu0 0.0
        %1159 = vmatpush1.xpose.msra.mxu0 0.0
        %1160 = vmatprep.subr.mxu0 0.0
        %1161 = vmatpush1.xpose.msra.mxu0 0.0
        %1162 = vmatprep.subr.mxu0 0.0
        %1163 = vmatpush1.xpose.msra.mxu0 0.0
        %1164 = vmatprep.subr.mxu0 0.0
        %1165 = vmatpush1.xpose.msra.mxu0 0.0
        %1166 = vmatprep.subr.mxu0 0.0
        %1167 = vmatpush1.xpose.msra.mxu0 0.0
        %1168 = vmatprep.subr.mxu0 0.0
        %1169 = vmatpush1.xpose.msra.mxu0 0.0
        %1170 = vmatprep.subr.mxu0 0.0
        %1171 = vmatpush1.xpose.msra.mxu0 0.0
        %1172 = vmatprep.subr.mxu0 0.0
        %1173 = vmatpush1.xpose.msra.mxu0 0.0
        %1174 = vmatprep.subr.mxu0 0.0
        %1175 = vmatpush1.xpose.msra.mxu0 0.0
        %1176 = vmatprep.subr.mxu0 0.0
        %1177 = vmatpush1.xpose.msra.mxu0 0.0
        %1178 = vmatprep.subr.mxu0 0.0
        %1179 = vmatpush1.xpose.msra.mxu0 0.0
        %1180 = vmatprep.subr.mxu0 0.0
        %1181 = vmatpush1.xpose.msra.mxu0 0.0
        %1182 = vmatprep.subr.mxu0 0.0
        %1183 = vmatpush1.xpose.msra.mxu0 0.0
        %1184 = vmatprep.subr.mxu0 0.0
        %1185 = vmatpush1.xpose.msra.mxu0 0.0
        %1186 = vmatprep.subr.mxu0 0.0
        %1187 = vmatpush1.xpose.msra.mxu0 0.0
        %1188 = vmatprep.subr.mxu0 0.0
        %1189 = vmatpush1.xpose.msra.mxu0 0.0
        %1190 = vmatprep.subr.mxu0 0.0
        %1191 = vmatpush1.xpose.msra.mxu0 0.0
        %1192 = vmatprep.subr.mxu0 0.0
        %1193 = vmatpush1.xpose.msra.mxu0 0.0
        %1194 = vmatprep.subr.mxu0 0.0
        %1195 = vmatpush1.xpose.msra.mxu0 0.0
        %1196 = vmatprep.subr.mxu0 0.0
        %1197 = vmatpush1.xpose.msra.mxu0 0.0
        %1198 = vmatprep.mubr.f32.mxu0 0.0
        %1199 = vmatmul.mubr.f32.gmra.mrb[0].mxu0 %v1130
        %v1200 = vpop.f32.mrb[0].mxu0
        %v1201 = vadd.f32 %v1124, %v1200
        %v1202 = vpop.f32.mrb[0].mxu0
        %1203 = vdwg.mxu0
        %v1204 = vsel %vm397, %v1201, -inf
        %1205 = vmax.xlane.f32.xlu0 %v1204
        %v1206 = vpop.xlane.xlu0 %1205
        %v1207 = vsub.f32 %v1201, %v1206
        %v1208 = vmul.f32 %v1207, 1.442695
        %v1209 = vpow.pop %v1208
        %v1210 = vsel %vm397, %v1209, 0.0
        %1211 = vadd.xlane.f32.xlu0 %v1210
        %v1212 = vpop.xlane.xlu0 %1211
        %v1213 = vrcp.pop %v1212
        %v1214 = vmul.f32 %v1209, %v1213
        %s1215 = scalar_lea.vmem %s295, 24 [#allocation10]
        %1216 = vst.msk [vmem:[%s1215] sm:$0xff] %vm397, %v1214
        %1217 = vrot.lane.b32.xlu0 %v1123, 40
        %v1218 = vpop.permute.xlu0 %1217
        %v1221 = vsel %vm397, %v1214, 0
        %1223 = vmatprep.subr.mxu0 0.0
        %1224 = vmatpush1.msra.mxu0 %v1218
        %1225 = vmatprep.subr.mxu0 0.0
        %1226 = vmatpush1.msra.mxu0 0.0
        %1227 = vmatprep.subr.mxu0 0.0
        %1228 = vmatpush1.msra.mxu0 0.0
        %1229 = vmatprep.subr.mxu0 0.0
        %1230 = vmatpush1.msra.mxu0 0.0
        %1231 = vmatprep.subr.mxu0 0.0
        %1232 = vmatpush1.msra.mxu0 0.0
        %1233 = vmatprep.subr.mxu0 0.0
        %1234 = vmatpush1.msra.mxu0 0.0
        %1235 = vmatprep.subr.mxu0 0.0
        %1236 = vmatpush1.msra.mxu0 0.0
        %1237 = vmatprep.subr.mxu0 0.0
        %1238 = vmatpush1.msra.mxu0 0.0
        %1239 = vmatprep.subr.mxu0 0.0
        %1240 = vmatpush1.msra.mxu0 0.0
        %1241 = vmatprep.subr.mxu0 0.0
        %1242 = vmatpush1.msra.mxu0 0.0
        %1243 = vmatprep.subr.mxu0 0.0
        %1244 = vmatpush1.msra.mxu0 0.0
        %1245 = vmatprep.subr.mxu0 0.0
        %1246 = vmatpush1.msra.mxu0 0.0
        %1247 = vmatprep.subr.mxu0 0.0
        %1248 = vmatpush1.msra.mxu0 0.0
        %1249 = vmatprep.subr.mxu0 0.0
        %1250 = vmatpush1.msra.mxu0 0.0
        %1251 = vmatprep.subr.mxu0 0.0
        %1252 = vmatpush1.msra.mxu0 0.0
        %1253 = vmatprep.subr.mxu0 0.0
        %1254 = vmatpush1.msra.mxu0 0.0
        %1255 = vmatprep.subr.mxu0 0.0
        %1256 = vmatpush1.msra.mxu0 0.0
        %1257 = vmatprep.subr.mxu0 0.0
        %1258 = vmatpush1.msra.mxu0 0.0
        %1259 = vmatprep.subr.mxu0 0.0
        %1260 = vmatpush1.msra.mxu0 0.0
        %1261 = vmatprep.subr.mxu0 0.0
        %1262 = vmatpush1.msra.mxu0 0.0
        %1263 = vmatprep.subr.mxu0 0.0
        %1264 = vmatpush1.msra.mxu0 0.0
        %1265 = vmatprep.subr.mxu0 0.0
        %1266 = vmatpush1.msra.mxu0 0.0
        %1267 = vmatprep.subr.mxu0 0.0
        %1268 = vmatpush1.msra.mxu0 0.0
        %1269 = vmatprep.subr.mxu0 0.0
        %1270 = vmatpush1.msra.mxu0 0.0
        %1271 = vmatprep.subr.mxu0 0.0
        %1272 = vmatpush1.msra.mxu0 0.0
        %1273 = vmatprep.subr.mxu0 0.0
        %1274 = vmatpush1.msra.mxu0 0.0
        %1275 = vmatprep.subr.mxu0 0.0
        %1276 = vmatpush1.msra.mxu0 0.0
        %1277 = vmatprep.subr.mxu0 0.0
        %1278 = vmatpush1.msra.mxu0 0.0
        %1279 = vmatprep.subr.mxu0 0.0
        %1280 = vmatpush1.msra.mxu0 0.0
        %1281 = vmatprep.subr.mxu0 0.0
        %1282 = vmatpush1.msra.mxu0 0.0
        %1283 = vmatprep.subr.mxu0 0.0
        %1284 = vmatpush1.msra.mxu0 0.0
        %1285 = vmatprep.subr.mxu0 0.0
        %1286 = vmatpush1.msra.mxu0 0.0
        %1287 = vmatprep.mubr.f32.mxu0 0.0
        %1288 = vmatmul.mubr.f32.gmra.mrb[0].mxu0 %v1221
        %v1289 = vpop.f32.mrb[0].mxu0
        %v1290 = vadd.f32 0.0, %v1289
        %v1291 = vpop.f32.mrb[0].mxu0
        %1292 = vdwg.mxu0
        %v1293 = vld [vmem:[#allocation8 + $0x18] sm:$0xff]
        %v1295 = vsel %vm397, %v1290, 0
        %1297 = vmatprep.subr.mxu0 0.0
        %1298 = vmatpush1.msra.mxu0 %v1293
        %1299 = vmatprep.subr.mxu0 0.0
        %1300 = vmatpush1.msra.mxu0 0.0
        %1301 = vmatprep.subr.mxu0 0.0
        %1302 = vmatpush1.msra.mxu0 0.0
        %1303 = vmatprep.subr.mxu0 0.0
        %1304 = vmatpush1.msra.mxu0 0.0
        %1305 = vmatprep.subr.mxu0 0.0
        %1306 = vmatpush1.msra.mxu0 0.0
        %1307 = vmatprep.subr.mxu0 0.0
        %1308 = vmatpush1.msra.mxu0 0.0
        %1309 = vmatprep.subr.mxu0 0.0
        %1310 = vmatpush1.msra.mxu0 0.0
        %1311 = vmatprep.subr.mxu0 0.0
        %1312 = vmatpush1.msra.mxu0 0.0
        %1313 = vmatprep.subr.mxu0 0.0
        %1314 = vmatpush1.msra.mxu0 0.0
        %1315 = vmatprep.subr.mxu0 0.0
        %1316 = vmatpush1.msra.mxu0 0.0
        %1317 = vmatprep.subr.mxu0 0.0
        %1318 = vmatpush1.msra.mxu0 0.0
        %1319 = vmatprep.subr.mxu0 0.0
        %1320 = vmatpush1.msra.mxu0 0.0
        %1321 = vmatprep.subr.mxu0 0.0
        %1322 = vmatpush1.msra.mxu0 0.0
        %1323 = vmatprep.subr.mxu0 0.0
        %1324 = vmatpush1.msra.mxu0 0.0
        %1325 = vmatprep.subr.mxu0 0.0
        %1326 = vmatpush1.msra.mxu0 0.0
        %1327 = vmatprep.subr.mxu0 0.0
        %1328 = vmatpush1.msra.mxu0 0.0
        %1329 = vmatprep.subr.mxu0 0.0
        %1330 = vmatpush1.msra.mxu0 0.0
        %1331 = vmatprep.subr.mxu0 0.0
        %1332 = vmatpush1.msra.mxu0 0.0
        %1333 = vmatprep.subr.mxu0 0.0
        %1334 = vmatpush1.msra.mxu0 0.0
        %1335 = vmatprep.subr.mxu0 0.0
        %1336 = vmatpush1.msra.mxu0 0.0
        %1337 = vmatprep.subr.mxu0 0.0
        %1338 = vmatpush1.msra.mxu0 0.0
        %1339 = vmatprep.subr.mxu0 0.0
        %1340 = vmatpush1.msra.mxu0 0.0
        %1341 = vmatprep.subr.mxu0 0.0
        %1342 = vmatpush1.msra.mxu0 0.0
        %1343 = vmatprep.subr.mxu0 0.0
        %1344 = vmatpush1.msra.mxu0 0.0
        %1345 = vmatprep.subr.mxu0 0.0
        %1346 = vmatpush1.msra.mxu0 0.0
        %1347 = vmatprep.subr.mxu0 0.0
        %1348 = vmatpush1.msra.mxu0 0.0
        %1349 = vmatprep.subr.mxu0 0.0
        %1350 = vmatpush1.msra.mxu0 0.0
        %1351 = vmatprep.subr.mxu0 0.0
        %1352 = vmatpush1.msra.mxu0 0.0
        %1353 = vmatprep.subr.mxu0 0.0
        %1354 = vmatpush1.msra.mxu0 0.0
        %1355 = vmatprep.subr.mxu0 0.0
        %1356 = vmatpush1.msra.mxu0 0.0
        %1357 = vmatprep.subr.mxu0 0.0
        %1358 = vmatpush1.msra.mxu0 0.0
        %1359 = vmatprep.subr.mxu0 0.0
        %1360 = vmatpush1.msra.mxu0 0.0
        %1361 = vmatprep.mubr.f32.mxu0 0.0
        %1362 = vmatmul.mubr.f32.gmra.mrb[0].mxu0 %v1295
        %v1363 = vpop.f32.mrb[0].mxu0
        %v1364 = vadd.f32 0.0, %v1363
        %v1365 = vpop.f32.mrb[0].mxu0
        %1366 = vdwg.mxu0
        %v1367 = vadd.f32 %v1122, %v1364
        %v1368 = vld [vmem:[%s3] sm:$0x1]
        %v1370 = vlaneseq
        %v1371 = vshrl.u32 %v1370, 7
        %v1372 = vsub.s32 0, %v1371
        %v1373 = vrot.slane %v1368, %v1372
        %v1375 = vadd.f32 %v1367, %v1373
        %vm1376 = vcmask 261120
        %1377 = vst.msk [vmem:[%s288] sm:$0xff] %vm1376, %v1375
        %s1378 = sand.u32 %s138, 1
        %s1379 = scalar_lea.sflag [#allocation5], %s1378
        %s1380 = sand.u32 %s138, 1
        %s1381 = smul.addr %s1380, 8
        %s1382 = scalar_lea.vmem [#allocation9], %s1381
        %s1383 = sand.u32 %s166, 1
        %s1384 = scalar_lea.sflag [#allocation11], %s1383
        %s1385 = sand.u32 %s166, 1
        %s1386 = smul.addr %s1385, 32
        %s1387 = scalar_lea.vmem [#allocation10], %s1386
        // Predicated region
        $region53: #{tpu_custom_call.1} parent=35 // pred_check
          %p1388 = pneg %p148
        $region54: #{tpu_custom_call.1} parent=35 // pred_check_branch
          %1390 = sbr.rel (%p1388) target = $region56
        $region55: #{tpu_custom_call.1} parent=35 // pred_region
          %s1392 = ssub.s32 128, 128
          %1393 = vsyncadd %s1379, %s1392
          %s1394 = sadd.s32 %s32, %s31
          %s1395 = smul.addr %s1394, 128
          %s1396 = scalar_lea.hbm %s4, %s1395
          %s1398 = sshll.u32 %s1382, 4
          %s1399 = int_to_ptr.vmem [resolvable:$true] %s1398
          %1401 = dma.vmem_to_hbm [thread:$0]  %s1399, 128, %s1396, %s1379
        $region56: #{tpu_custom_call.1} parent=35 // pred_fallthru
          _
        // Predicated region
        $region57: #{tpu_custom_call.1} parent=35 // pred_check
          %p1402 = pneg %p176
        $region58: #{tpu_custom_call.1} parent=35 // pred_check_branch
          %1404 = sbr.rel (%p1402) target = $region60
        $region59: #{tpu_custom_call.1} parent=35 // pred_region
          %s1406 = ssub.s32 512, 512
          %1407 = vsyncadd %s1384, %s1406
          %s1408 = smul.addr %s31, 4
          %s1409 = sadd.s32 %s32, %s1408
          %s1410 = smul.addr %s1409, 128
          %s1411 = scalar_lea.hbm %s5, %s1410
          %s1412 = sshll.u32 %s1387, 4
          %s1413 = int_to_ptr.vmem [resolvable:$true] %s1412
          %1418 = dma.vmem_to_hbm [thread:$0]  %s1413, 512, %s1411, %s1384, 128, 128, 8
        $region60: #{tpu_custom_call.1} parent=35 // pred_fallthru
          _
      $region36: #{tpu_custom_call.1} parent=5 // pred_fallthru
        _
      %p1419 = scmp.le.s32.totalorder 2, %s22
      // Predicated region
      $region61: #{tpu_custom_call.1} parent=5 // pred_check
        %p1420 = pneg %p1419
      $region62: #{tpu_custom_call.1} parent=5 // pred_check_branch
        %1422 = sbr.rel (%p1420) target = $region64
      $region63: #{tpu_custom_call.1} parent=5 // pred_region
        %s1423 = ssub.s32 %s22, 2
        // Predicated region
        $region65: #{tpu_custom_call.1} parent=63 // pred_check
          %p1424 = pneg %p154
        $region66: #{tpu_custom_call.1} parent=63 // pred_check_branch
          %1426 = sbr.rel (%p1424) target = $region68
        $region67: #{tpu_custom_call.1} parent=63 // pred_region
          %s1427 = sand.u32 %s139, 1
          %s1428 = scalar_lea.sflag [#allocation5], %s1427
          %s1429 = sand.u32 %s139, 1
          %s1430 = smul.addr %s1429, 8
          %s1431 = scalar_lea.vmem [#allocation9], %s1430
          %1432 = dma.done %s1428, 128
        $region68: #{tpu_custom_call.1} parent=63 // pred_fallthru
          _
        // Predicated region
        $region69: #{tpu_custom_call.1} parent=63 // pred_check
          %p1433 = pneg %p182
        $region70: #{tpu_custom_call.1} parent=63 // pred_check_branch
          %1435 = sbr.rel (%p1433) target = $region72
        $region71: #{tpu_custom_call.1} parent=63 // pred_region
          %s1436 = sand.u32 %s167, 1
          %s1437 = scalar_lea.sflag [#allocation11], %s1436
          %s1438 = sand.u32 %s167, 1
          %s1439 = smul.addr %s1438, 32
          %s1440 = scalar_lea.vmem [#allocation10], %s1439
          %1441 = dma.done %s1437, 512
        $region72: #{tpu_custom_call.1} parent=63 // pred_fallthru
          _
      $region64: #{tpu_custom_call.1} parent=5 // pred_fallthru
        _
    $region6: #{tpu_custom_call.1} parent=1 // loop_footer
      %s26 = sadd.s32 1, %s22
    $region7: #{tpu_custom_call.1} parent=1 // loop_footer_branch
      %21 = sbr.rel target = $region3
    $region8: #{tpu_custom_call.1} parent=1 // loop_exit
      _
    %1442 = vsyncpa [#allocation4], 1
    %s1443 = scalar_lea.sflag [#allocation4], 1
    %1444 = vsyncpa %s1443, 1
    %1445 = vsyncpa [#allocation7], 1
    %1446 = vsyncpa [#allocation5], 1
    %s1447 = scalar_lea.sflag [#allocation5], 1
    %1448 = vsyncpa %s1447, 1
    %1449 = vsyncpa [#allocation11], 1
    %s1450 = scalar_lea.sflag [#allocation11], 1
    %1451 = vsyncpa %s1450, 1

// kernel: tpu_custom_call.1
$region0: #{tpu_custom_call.1}
  #allocation0 [shape = 'u32[]', space=smem, size = 0x4, offset = 0x4, fixed_abs, tag = 'smem constant byte address 0x4 - core index']
  #allocation1 [shape = 'u32[144,128]{1,0:T(1,128)}', space=vmem, size = 0x12000, scoped, tag = 'internal scratch']
  #allocation2 [shape = 'f32[8,96]{1,0:T(8,128)}', space=vmem, size = 0x1000, scoped, tag = 'scratch operand']
  %s0 = inlined_call_operand.hbm [shape: f32[2,8,32], index: 0, kind: input, shape index: {}]
  %s1 = inlined_call_operand.hbm [shape: f32[32,96], index: 1, kind: input, shape index: {}]
  %s2 = inlined_call_operand.hbm [shape: f32[32,32], index: 2, kind: input, shape index: {}]
  %s3 = inlined_call_operand.vmem [shape: f32[1,32], index: 3, kind: input, shape index: {}]
  %s4 = inlined_call_operand.hbm [shape: f32[2,8,32], index: 4, kind: output, shape index: {0}]
  %s5 = inlined_call_operand.hbm [shape: f32[2,4,8,8], index: 5, kind: output, shape index: {1}]
  %6 = xla_tuple %s4, %s5
  %s7 = sld [smem:[#allocation0]]
  $region73: #{tpu_custom_call.1} parent=0
    _
  %s9 = ssub.s32 1, %s7
  %s10 = scalar_select 0, %s9, %s7
  $region1: #{tpu_custom_call.1} parent=0
    #allocation3 [shape = 'u8[8192]{0}', space=vmem, size = 0x2000, scoped, tag = 'input window, operand 0']
    #allocation4 [shape = 's32[2]{0}', space=sflag, size = 0x8, scoped, tag = 'scoped memory for tpu_custom_call.1']
    #allocation5 [shape = 's32[2]{0}', space=sflag, size = 0x8, scoped, tag = 'scoped memory for tpu_custom_call.1']
    #allocation6 [shape = 'u8[16384]{0}', space=vmem, size = 0x4000, scoped, tag = 'input window, operand 1, single buffered']
    #allocation7 [shape = 's32[1]{0}', space=sflag, size = 0x4, scoped, tag = 'scoped memory for tpu_custom_call.1']
    #allocation8 [shape = 'u8[16384]{0}', space=vmem, size = 0x4000, scoped, tag = 'input window, operand 2, single buffered']
    #allocation9 [shape = 'u8[8192]{0}', space=vmem, size = 0x2000, scoped, tag = 'output window, operand 0']
    #allocation10 [shape = 'u8[32768]{0}', space=vmem, size = 0x8000, scoped, tag = 'output window, operand 1']
    #allocation11 [shape = 's32[2]{0}', space=sflag, size = 0x8, scoped, tag = 'scoped memory for tpu_custom_call.1']
    %11 = vsyncpa [#allocation4], 0
    %s12 = scalar_lea.sflag [#allocation4], 1
    %13 = vsyncpa %s12, 0
    %14 = vsyncpa [#allocation7], 0
    %15 = vsyncpa [#allocation5], 0
    %s16 = scalar_lea.sflag [#allocation5], 1
    %17 = vsyncpa %s16, 0
    %18 = vsyncpa [#allocation11], 0
    %s19 = scalar_lea.sflag [#allocation11], 1
    %20 = vsyncpa %s19, 0
    loop: start=0, step=1, limit=4
    $region2: #{tpu_custom_call.1} parent=1 // loop_pre_header
      _
    $region3: #{tpu_custom_call.1} parent=1 // loop_header
      %s22 = sphi 0, %s26
      %p23 = scmp.ge.s32.totalorder %s22, 4
      %s29 = sphi 0, %s41
      %s30 = sphi 0, %s37
      %s31 = sphi 0, %s29
      %s32 = sphi 0, %s30
      %s33 = sphi 0, %s31
      %s34 = sphi 0, %s32
      %s44 = sphi 0, %s46
      %s47 = sphi 0, %s44
      %s48 = sphi 0, %s47
      %s64 = sphi 0, %s48
      %s68 = sphi 0, %s68
      %s70 = sphi 0, %s68
      %s71 = sphi 0, %s70
      %s85 = sphi 0, %s71
      %s89 = sphi 0, %s89
      %s91 = sphi 0, %s89
      %s92 = sphi 0, %s91
      %s106 = sphi 0, %s92
      %s110 = sphi 0, %s110
      %s112 = sphi 0, %s110
      %s113 = sphi 0, %s112
      %s127 = sphi 0, %s113
      %s135 = sphi 0, %s137
      %s138 = sphi 0, %s135
      %s139 = sphi 0, %s138
      %s155 = sphi 0, %s139
      %s163 = sphi 0, %s165
      %s166 = sphi 0, %s163
      %s167 = sphi 0, %s166
      %s183 = sphi 0, %s167
    $region4: #{tpu_custom_call.1} parent=1 // loop_header_branch
      %25 = sbr.rel (%p23) target = $region8
    $region5: #{tpu_custom_call.1} parent=1 // loop_body
      %s27 = ssub.s32 %s22, 1
      %s28 = ssub.s32 %s22, 2
      %s35 = sadd.s32 1, %s30
      %p36 = scmp.ge.s32.totalorder %s35, 1
      %s37 = scalar_select %p36, 0, %s35
      %s38 = sadd.s32 1, %s29
      %s39 = scalar_select %p36, %s38, %s29
      %p40 = scmp.ge.s32.totalorder %s39, 2
      %s41 = scalar_select %p40, 0, %s39
      %s42 = ssub.s32 %s29, %s41
      %p43 = scmp.eq.s32.totalorder %s42, 0
      %s45 = sadd.s32 %s44, 1
      %s46 = scalar_select %p43, %s44, %s45
      %p49 = pneg %p43
      %p50 = scmp.eq.s32.totalorder %s22, 1
      %p51 = por %p49, %p50
      %p52 = scmp.ne.s32.totalorder %s44, %s47
      %p53 = scmp.eq.s32.totalorder %s22, 0
      %p54 = por %p52, %p53
      %p55 = scmp.ne.s32.totalorder %s44, %s47
      %p56 = scmp.eq.s32.totalorder %s27, 1
      %p57 = por %p55, %p56
      %p58 = scmp.ne.s32.totalorder %s47, %s48
      %p59 = scmp.eq.s32.totalorder %s27, 0
      %p60 = por %p58, %p59
      %p61 = scmp.ne.s32.totalorder %s47, %s48
      %p62 = scmp.eq.s32.totalorder %s28, 1
      %p63 = por %p61, %p62
      %p65 = scmp.ne.s32.totalorder %s48, %s64
      %p66 = scmp.eq.s32.totalorder %s28, 0
      %p67 = por %p65, %p66
      %s69 = sadd.s32 %s68, 1
      %p72 = scmp.eq.s32.totalorder %s22, 1
      %p73 = scmp.ne.s32.totalorder %s68, %s70
      %p74 = scmp.eq.s32.totalorder %s22, 0
      %p75 = por %p73, %p74
      %p76 = scmp.ne.s32.totalorder %s68, %s70
      %p77 = scmp.eq.s32.totalorder %s27, 1
      %p78 = por %p76, %p77
      %p79 = scmp.ne.s32.totalorder %s70, %s71
      %p80 = scmp.eq.s32.totalorder %s27, 0
      %p81 = por %p79, %p80
      %p82 = scmp.ne.s32.totalorder %s70, %s71
      %p83 = scmp.eq.s32.totalorder %s28, 1
      %p84 = por %p82, %p83
      %p86 = scmp.ne.s32.totalorder %s71, %s85
      %p87 = scmp.eq.s32.totalorder %s28, 0
      %p88 = por %p86, %p87
      %s90 = sadd.s32 %s89, 1
      %p93 = scmp.eq.s32.totalorder %s22, 1
      %p94 = scmp.ne.s32.totalorder %s89, %s91
      %p95 = scmp.eq.s32.totalorder %s22, 0
      %p96 = por %p94, %p95
      %p97 = scmp.ne.s32.totalorder %s89, %s91
      %p98 = scmp.eq.s32.totalorder %s27, 1
      %p99 = por %p97, %p98
      %p100 = scmp.ne.s32.totalorder %s91, %s92
      %p101 = scmp.eq.s32.totalorder %s27, 0
      %p102 = por %p100, %p101
      %p103 = scmp.ne.s32.totalorder %s91, %s92
      %p104 = scmp.eq.s32.totalorder %s28, 1
      %p105 = por %p103, %p104
      %p107 = scmp.ne.s32.totalorder %s92, %s106
      %p108 = scmp.eq.s32.totalorder %s28, 0
      %p109 = por %p107, %p108
      %s111 = sadd.s32 %s110, 1
      %p114 = scmp.eq.s32.totalorder %s22, 1
      %p115 = scmp.ne.s32.totalorder %s110, %s112
      %p116 = scmp.eq.s32.totalorder %s22, 0
      %p117 = por %p115, %p116
      %p118 = scmp.ne.s32.totalorder %s110, %s112
      %p119 = scmp.eq.s32.totalorder %s27, 1
      %p120 = por %p118, %p119
      %p121 = scmp.ne.s32.totalorder %s112, %s113
      %p122 = scmp.eq.s32.totalorder %s27, 0
      %p123 = por %p121, %p122
      %p124 = scmp.ne.s32.totalorder %s112, %s113
      %p125 = scmp.eq.s32.totalorder %s28, 1
      %p126 = por %p124, %p125
      %p128 = scmp.ne.s32.totalorder %s113, %s127
      %p129 = scmp.eq.s32.totalorder %s28, 0
      %p130 = por %p128, %p129
      %s131 = ssub.s32 %s29, %s41
      %s132 = ssub.s32 %s30, %s37
      %s133 = sor.u32 %s131, %s132
      %p134 = scmp.eq.s32.totalorder %s133, 0
      %s136 = sadd.s32 %s135, 1
      %s137 = scalar_select %p134, %s135, %s136
      %p140 = pneg %p134
      %p141 = scmp.eq.s32.totalorder %s22, 1
      %p142 = por %p140, %p141
      %p143 = scmp.ne.s32.totalorder %s135, %s138
      %p144 = scmp.eq.s32.totalorder %s22, 0
      %p145 = por %p143, %p144
      %p146 = scmp.ne.s32.totalorder %s135, %s138
      %p147 = scmp.eq.s32.totalorder %s27, 1
      %p148 = por %p146, %p147
      %p149 = scmp.ne.s32.totalorder %s138, %s139
      %p150 = scmp.eq.s32.totalorder %s27, 0
      %p151 = por %p149, %p150
      %p152 = scmp.ne.s32.totalorder %s138, %s139
      %p153 = scmp.eq.s32.totalorder %s28, 1
      %p154 = por %p152, %p153
      %p156 = scmp.ne.s32.totalorder %s139, %s155
      %p157 = scmp.eq.s32.totalorder %s28, 0
      %p158 = por %p156, %p157
      %s159 = ssub.s32 %s29, %s41
      %s160 = ssub.s32 %s30, %s37
      %s161 = sor.u32 %s159, %s160
      %p162 = scmp.eq.s32.totalorder %s161, 0
      %s164 = sadd.s32 %s163, 1
      %s165 = scalar_select %p162, %s163, %s164
      %p168 = pneg %p162
      %p169 = scmp.eq.s32.totalorder %s22, 1
      %p170 = por %p168, %p169
      %p171 = scmp.ne.s32.totalorder %s163, %s166
      %p172 = scmp.eq.s32.totalorder %s22, 0
      %p173 = por %p171, %p172
      %p174 = scmp.ne.s32.totalorder %s163, %s166
      %p175 = scmp.eq.s32.totalorder %s27, 1
      %p176 = por %p174, %p175
      %p177 = scmp.ne.s32.totalorder %s166, %s167
      %p178 = scmp.eq.s32.totalorder %s27, 0
      %p179 = por %p177, %p178
      %p180 = scmp.ne.s32.totalorder %s166, %s167
      %p181 = scmp.eq.s32.totalorder %s28, 1
      %p182 = por %p180, %p181
      %p184 = scmp.ne.s32.totalorder %s167, %s183
      %p185 = scmp.eq.s32.totalorder %s28, 0
      %p186 = por %p184, %p185
      %p187 = scmp.le.s32.totalorder 1, %s22
      %p188 = scmp.lt.s32.totalorder %s22, 3
      %p189 = pnand %p187, %p188
      %p190 = pneg %p189
      // Predicated region
      $region9: #{tpu_custom_call.1} parent=5 // pred_check
        _
      $region10: #{tpu_custom_call.1} parent=5 // pred_check_branch
        %192 = sbr.rel (%p189) target = $region12
      $region11: #{tpu_custom_call.1} parent=5 // pred_region
        %s193 = ssub.s32 %s22, 1
        // Predicated region
        $region13: #{tpu_custom_call.1} parent=11 // pred_check
          %p194 = pneg %p81
        $region14: #{tpu_custom_call.1} parent=11 // pred_check_branch
          %196 = sbr.rel (%p194) target = $region16
        $region15: #{tpu_custom_call.1} parent=11 // pred_region
          %s198 = ssub.s32 512, 512
          %199 = vsyncadd [#allocation7], %s198
          %s200 = sshll.u32 [#allocation6], 4
          %s201 = int_to_ptr.vmem [resolvable:$true] %s200
          %206 = dma.hbm_to_vmem [thread:$0]  %s1, 512, %s201, [#allocation7], 128, 128, 8
        $region16: #{tpu_custom_call.1} parent=11 // pred_fallthru
          _
        // Predicated region
        $region17: #{tpu_custom_call.1} parent=11 // pred_check
          %p207 = pneg %p102
        $region18: #{tpu_custom_call.1} parent=11 // pred_check_branch
          %209 = sbr.rel (%p207) target = $region20
        $region19: #{tpu_custom_call.1} parent=11 // pred_region
          %s211 = ssub.s32 512, 512
          %212 = vsyncadd [#allocation7], %s211
          %s213 = sshll.u32 [#allocation8], 4
          %s214 = int_to_ptr.vmem [resolvable:$true] %s213
          %219 = dma.hbm_to_vmem [thread:$0]  %s2, 512, %s214, [#allocation7], 128, 128, 8
        $region20: #{tpu_custom_call.1} parent=11 // pred_fallthru
          _
        // Predicated region
        $region21: #{tpu_custom_call.1} parent=11 // pred_check
          %p220 = pneg %p123
        $region22: #{tpu_custom_call.1} parent=11 // pred_check_branch
          %222 = sbr.rel (%p220) target = $region24
        $region23: #{tpu_custom_call.1} parent=11 // pred_region
          _
        $region24: #{tpu_custom_call.1} parent=11 // pred_fallthru
          _
      $region12: #{tpu_custom_call.1} parent=5 // pred_fallthru
        _
      %p223 = scmp.lt.s32.totalorder %s22, 2
      // Predicated region
      $region25: #{tpu_custom_call.1} parent=5 // pred_check
        %p224 = pneg %p223
      $region26: #{tpu_custom_call.1} parent=5 // pred_check_branch
        %226 = sbr.rel (%p224) target = $region28
      $region27: #{tpu_custom_call.1} parent=5 // pred_region
        // Predicated region
        $region29: #{tpu_custom_call.1} parent=27 // pred_check
          %p227 = pneg %p54
        $region30: #{tpu_custom_call.1} parent=27 // pred_check_branch
          %229 = sbr.rel (%p227) target = $region32
        $region31: #{tpu_custom_call.1} parent=27 // pred_region
          %s230 = sand.u32 %s44, 1
          %s231 = scalar_lea.sflag [#allocation4], %s230
          %s232 = sand.u32 %s44, 1
          %s233 = smul.addr %s232, 8
          %s234 = scalar_lea.vmem [#allocation3], %s233
          %s236 = ssub.s32 128, 128
          %237 = vsyncadd %s231, %s236
          %s238 = smul.addr %s29, 128
          %s239 = scalar_lea.hbm %s0, %s238
          %s241 = sshll.u32 %s234, 4
          %s242 = int_to_ptr.vmem [resolvable:$true] %s241
          %244 = dma.hbm_to_vmem [thread:$0]  %s239, 128, %s242, %s231
        $region32: #{tpu_custom_call.1} parent=27 // pred_fallthru
          _
      $region28: #{tpu_custom_call.1} parent=5 // pred_fallthru
        _
      %p245 = scmp.le.s32.totalorder 1, %s22
      %p246 = scmp.lt.s32.totalorder %s22, 3
      %p247 = pnand %p245, %p246
      %p248 = pneg %p247
      // Predicated region
      $region33: #{tpu_custom_call.1} parent=5 // pred_check
        _
      $region34: #{tpu_custom_call.1} parent=5 // pred_check_branch
        %250 = sbr.rel (%p247) target = $region36
      $region35: #{tpu_custom_call.1} parent=5 // pred_region
        %s251 = ssub.s32 %s22, 1
        %s252 = sand.u32 %s47, 1
        %s253 = scalar_lea.sflag [#allocation4], %s252
        %s254 = sand.u32 %s47, 1
        %s255 = smul.addr %s254, 8
        %s256 = scalar_lea.vmem [#allocation3], %s255
        // Predicated region
        $region37: #{tpu_custom_call.1} parent=35 // pred_check
          %p257 = pneg %p60
        $region38: #{tpu_custom_call.1} parent=35 // pred_check_branch
          %259 = sbr.rel (%p257) target = $region40
        $region39: #{tpu_custom_call.1} parent=35 // pred_region
          %260 = dma.done %s253, 128
        $region40: #{tpu_custom_call.1} parent=35 // pred_fallthru
          _
        // Predicated region
        $region41: #{tpu_custom_call.1} parent=35 // pred_check
          %p261 = pneg %p81
        $region42: #{tpu_custom_call.1} parent=35 // pred_check_branch
          %263 = sbr.rel (%p261) target = $region44
        $region43: #{tpu_custom_call.1} parent=35 // pred_region
          %264 = dma.done [#allocation7], 512
        $region44: #{tpu_custom_call.1} parent=35 // pred_fallthru
          _
        // Predicated region
        $region45: #{tpu_custom_call.1} parent=35 // pred_check
          %p265 = pneg %p102
        $region46: #{tpu_custom_call.1} parent=35 // pred_check_branch
          %267 = sbr.rel (%p265) target = $region48
        $region47: #{tpu_custom_call.1} parent=35 // pred_region
          %268 = dma.done [#allocation7], 512
        $region48: #{tpu_custom_call.1} parent=35 // pred_fallthru
          _
        %s269 = sand.u32 %s47, 1
        %s270 = scalar_lea.sflag [#allocation4], %s269
        %s271 = sand.u32 %s47, 1
        %s272 = smul.addr %s271, 8
        %s273 = scalar_lea.vmem [#allocation3], %s272
        %p274 = pneg %p60
        %p275 = pneg %p57
        %p276 = pneg %p81
        %p277 = pneg %p78
        %p278 = pneg %p102
        %p279 = pneg %p99
        %p280 = pneg %p123
        %p281 = pneg %p120
        %p282 = pneg %p151
        %p283 = pneg %p148
        %s284 = sand.u32 %s138, 1
        %s285 = scalar_lea.sflag [#allocation5], %s284
        %s286 = sand.u32 %s138, 1
        %s287 = smul.addr %s286, 8
        %s288 = scalar_lea.vmem [#allocation9], %s287
        %p289 = pneg %p179
        %p290 = pneg %p176
        %s291 = sand.u32 %s166, 1
        %s292 = scalar_lea.sflag [#allocation11], %s291
        %s293 = sand.u32 %s166, 1
        %s294 = smul.addr %s293, 32
        %s295 = scalar_lea.vmem [#allocation10], %s294
        %p296 = scmp.eq.s32.totalorder %s32, 0
        // Predicated region
        $region49: #{tpu_custom_call.1} parent=35 // pred_check
          %p297 = pneg %p296
        $region50: #{tpu_custom_call.1} parent=35 // pred_check_branch
          %299 = sbr.rel (%p297) target = $region52
        $region51: #{tpu_custom_call.1} parent=35 // pred_region
          %v300 = vld [vmem:[%s256] sm:$0xff]
          %v301 = vld [vmem:[#allocation6] sm:$0xff]
          %v302 = vld [vmem:[#allocation6 + $0x8] sm:$0xff]
          %v303 = vld [vmem:[#allocation6 + $0x10] sm:$0xff]
          %v304 = vld [vmem:[#allocation6 + $0x18] sm:$0xff]
          %vm305 = vcmask 261120
          %v307 = vsel %vm305, %v300, 0
          %309 = vmatprep.subr.mxu0 0.0
          %310 = vmatpush1.msra.mxu0 %v301
          %311 = vmatprep.subr.mxu0 0.0
          %312 = vmatpush1.msra.mxu0 %v302
          %313 = vmatprep.subr.mxu0 0.0
          %314 = vmatpush1.msra.mxu0 %v303
          %315 = vmatprep.subr.mxu0 0.0
          %316 = vmatpush1.msra.mxu0 %v304
          %317 = vmatprep.subr.mxu0 0.0
          %318 = vmatpush1.msra.mxu0 0.0
          %319 = vmatprep.subr.mxu0 0.0
          %320 = vmatpush1.msra.mxu0 0.0
          %321 = vmatprep.subr.mxu0 0.0
          %322 = vmatpush1.msra.mxu0 0.0
          %323 = vmatprep.subr.mxu0 0.0
          %324 = vmatpush1.msra.mxu0 0.0
          %325 = vmatprep.subr.mxu0 0.0
          %326 = vmatpush1.msra.mxu0 0.0
          %327 = vmatprep.subr.mxu0 0.0
          %328 = vmatpush1.msra.mxu0 0.0
          %329 = vmatprep.subr.mxu0 0.0
          %330 = vmatpush1.msra.mxu0 0.0
          %331 = vmatprep.subr.mxu0 0.0
          %332 = vmatpush1.msra.mxu0 0.0
          %333 = vmatprep.subr.mxu0 0.0
          %334 = vmatpush1.msra.mxu0 0.0
          %335 = vmatprep.subr.mxu0 0.0
          %336 = vmatpush1.msra.mxu0 0.0
          %337 = vmatprep.subr.mxu0 0.0
          %338 = vmatpush1.msra.mxu0 0.0
          %339 = vmatprep.subr.mxu0 0.0
          %340 = vmatpush1.msra.mxu0 0.0
          %341 = vmatprep.subr.mxu0 0.0
          %342 = vmatpush1.msra.mxu0 0.0
          %343 = vmatprep.subr.mxu0 0.0
          %344 = vmatpush1.msra.mxu0 0.0
          %345 = vmatprep.subr.mxu0 0.0
          %346 = vmatpush1.msra.mxu0 0.0
          %347 = vmatprep.subr.mxu0 0.0
          %348 = vmatpush1.msra.mxu0 0.0
          %349 = vmatprep.subr.mxu0 0.0
          %350 = vmatpush1.msra.mxu0 0.0
          %351 = vmatprep.subr.mxu0 0.0
          %352 = vmatpush1.msra.mxu0 0.0
          %353 = vmatprep.subr.mxu0 0.0
          %354 = vmatpush1.msra.mxu0 0.0
          %355 = vmatprep.subr.mxu0 0.0
          %356 = vmatpush1.msra.mxu0 0.0
          %357 = vmatprep.subr.mxu0 0.0
          %358 = vmatpush1.msra.mxu0 0.0
          %359 = vmatprep.subr.mxu0 0.0
          %360 = vmatpush1.msra.mxu0 0.0
          %361 = vmatprep.subr.mxu0 0.0
          %362 = vmatpush1.msra.mxu0 0.0
          %363 = vmatprep.subr.mxu0 0.0
          %364 = vmatpush1.msra.mxu0 0.0
          %365 = vmatprep.subr.mxu0 0.0
          %366 = vmatpush1.msra.mxu0 0.0
          %367 = vmatprep.subr.mxu0 0.0
          %368 = vmatpush1.msra.mxu0 0.0
          %369 = vmatprep.subr.mxu0 0.0
          %370 = vmatpush1.msra.mxu0 0.0
          %371 = vmatprep.subr.mxu0 0.0
          %372 = vmatpush1.msra.mxu0 0.0
          %373 = vmatprep.mubr.f32.mxu0 0.0
          %374 = vmatmul.mubr.f32.gmra.mrb[0].mxu0 %v307
          %v375 = vpop.f32.mrb[0].mxu0
          %v376 = vadd.f32 0.0, %v375
          %v377 = vpop.f32.mrb[0].mxu0
          %378 = vdwg.mxu0
          %vm379 = vcmask 785408
          %380 = vst.msk [vmem:[#allocation2] sm:$0xff] %vm379, %v376
        $region52: #{tpu_custom_call.1} parent=35 // pred_fallthru
          _
        %s381 = smul.u32 %s32, 8
        %v382 = vlaneseq
        %v383 = vshrl.u32 %v382, 7
        %v384 = vstv %s381
        %v385 = vadd.s32 %v384, %v383
        %v386 = vlaneseq
        %v387 = vand.u32 %v386, 127
        %v388 = vsub.s32 %v387, %v385
        %v389 = vcvt.s32.f32 %v388
        %vm390 = vcmp.gt.s32.totalorder %v387, %v385
        %v391 = vsel %vm390, -inf, %v389
        %v392 = vld [vmem:[#allocation2] sm:$0xff]
        %v393 = vmul.f32 %v391, 0.25
        %395 = vrot.lane.b32.xlu0 %v392, 96
        %v396 = vpop.permute.xlu0 %395
        %vm397 = vcmask 64512
        %v398 = vsel %vm397, %v392, 0
        %v400 = vsel %vm397, %v396, 0
        %402 = vmatprep.subr.mxu0 0.0
        %403 = vmatpush1.xpose.msra.mxu0 %v400
        %404 = vmatprep.subr.mxu0 0.0
        %405 = vmatpush1.xpose.msra.mxu0 0.0
        %406 = vmatprep.subr.mxu0 0.0
        %407 = vmatpush1.xpose.msra.mxu0 0.0
        %408 = vmatprep.subr.mxu0 0.0
        %409 = vmatpush1.xpose.msra.mxu0 0.0
        %410 = vmatprep.subr.mxu0 0.0
        %411 = vmatpush1.xpose.msra.mxu0 0.0
        %412 = vmatprep.subr.mxu0 0.0
        %413 = vmatpush1.xpose.msra.mxu0 0.0
        %414 = vmatprep.subr.mxu0 0.0
        %415 = vmatpush1.xpose.msra.mxu0 0.0
        %416 = vmatprep.subr.mxu0 0.0
        %417 = vmatpush1.xpose.msra.mxu0 0.0
        %418 = vmatprep.subr.mxu0 0.0
        %419 = vmatpush1.xpose.msra.mxu0 0.0
        %420 = vmatprep.subr.mxu0 0.0
        %421 = vmatpush1.xpose.msra.mxu0 0.0
        %422 = vmatprep.subr.mxu0 0.0
        %423 = vmatpush1.xpose.msra.mxu0 0.0
        %424 = vmatprep.subr.mxu0 0.0
        %425 = vmatpush1.xpose.msra.mxu0 0.0
        %426 = vmatprep.subr.mxu0 0.0
        %427 = vmatpush1.xpose.msra.mxu0 0.0
        %428 = vmatprep.subr.mxu0 0.0
        %429 = vmatpush1.xpose.msra.mxu0 0.0
        %430 = vmatprep.subr.mxu0 0.0
        %431 = vmatpush1.xpose.msra.mxu0 0.0
        %432 = vmatprep.subr.mxu0 0.0
        %433 = vmatpush1.xpose.msra.mxu0 0.0
        %434 = vmatprep.subr.mxu0 0.0
        %435 = vmatpush1.xpose.msra.mxu0 0.0
        %436 = vmatprep.subr.mxu0 0.0
        %437 = vmatpush1.xpose.msra.mxu0 0.0
        %438 = vmatprep.subr.mxu0 0.0
        %439 = vmatpush1.xpose.msra.mxu0 0.0
        %440 = vmatprep.subr.mxu0 0.0
        %441 = vmatpush1.xpose.msra.mxu0 0.0
        %442 = vmatprep.subr.mxu0 0.0
        %443 = vmatpush1.xpose.msra.mxu0 0.0
        %444 = vmatprep.subr.mxu0 0.0
        %445 = vmatpush1.xpose.msra.mxu0 0.0
        %446 = vmatprep.subr.mxu0 0.0
        %447 = vmatpush1.xpose.msra.mxu0 0.0
        %448 = vmatprep.subr.mxu0 0.0
        %449 = vmatpush1.xpose.msra.mxu0 0.0
        %450 = vmatprep.subr.mxu0 0.0
        %451 = vmatpush1.xpose.msra.mxu0 0.0
        %452 = vmatprep.subr.mxu0 0.0
        %453 = vmatpush1.xpose.msra.mxu0 0.0
        %454 = vmatprep.subr.mxu0 0.0
        %455 = vmatpush1.xpose.msra.mxu0 0.0
        %456 = vmatprep.subr.mxu0 0.0
        %457 = vmatpush1.xpose.msra.mxu0 0.0
        %458 = vmatprep.subr.mxu0 0.0
        %459 = vmatpush1.xpose.msra.mxu0 0.0
        %460 = vmatprep.subr.mxu0 0.0
        %461 = vmatpush1.xpose.msra.mxu0 0.0
        %462 = vmatprep.subr.mxu0 0.0
        %463 = vmatpush1.xpose.msra.mxu0 0.0
        %464 = vmatprep.subr.mxu0 0.0
        %465 = vmatpush1.xpose.msra.mxu0 0.0
        %466 = vmatprep.mubr.f32.mxu0 0.0
        %467 = vmatmul.mubr.f32.gmra.mrb[0].mxu0 %v398
        %v468 = vpop.f32.mrb[0].mxu0
        %v469 = vadd.f32 %v393, %v468
        %v470 = vpop.f32.mrb[0].mxu0
        %471 = vdwg.mxu0
        %v472 = vsel %vm397, %v469, -inf
        %473 = vmax.xlane.f32.xlu0 %v472
        %v474 = vpop.xlane.xlu0 %473
        %v475 = vsub.f32 %v469, %v474
        %v476 = vmul.f32 %v475, 1.442695
        %v477 = vpow.pop %v476
        %v478 = vsel %vm397, %v477, 0.0
        %479 = vadd.xlane.f32.xlu0 %v478
        %v480 = vpop.xlane.xlu0 %479
        %v481 = vrcp.pop %v480
        %v482 = vmul.f32 %v477, %v481
        %483 = vst.msk [vmem:[%s295] sm:$0xff] %vm397, %v482
        %484 = vrot.lane.b32.xlu0 %v392, 64
        %v485 = vpop.permute.xlu0 %484
        %v488 = vsel %vm397, %v482, 0
        %490 = vmatprep.subr.mxu0 0.0
        %491 = vmatpush1.msra.mxu0 %v485
        %492 = vmatprep.subr.mxu0 0.0
        %493 = vmatpush1.msra.mxu0 0.0
        %494 = vmatprep.subr.mxu0 0.0
        %495 = vmatpush1.msra.mxu0 0.0
        %496 = vmatprep.subr.mxu0 0.0
        %497 = vmatpush1.msra.mxu0 0.0
        %498 = vmatprep.subr.mxu0 0.0
        %499 = vmatpush1.msra.mxu0 0.0
        %500 = vmatprep.subr.mxu0 0.0
        %501 = vmatpush1.msra.mxu0 0.0
        %502 = vmatprep.subr.mxu0 0.0
        %503 = vmatpush1.msra.mxu0 0.0
        %504 = vmatprep.subr.mxu0 0.0
        %505 = vmatpush1.msra.mxu0 0.0
        %506 = vmatprep.subr.mxu0 0.0
        %507 = vmatpush1.msra.mxu0 0.0
        %508 = vmatprep.subr.mxu0 0.0
        %509 = vmatpush1.msra.mxu0 0.0
        %510 = vmatprep.subr.mxu0 0.0
        %511 = vmatpush1.msra.mxu0 0.0
        %512 = vmatprep.subr.mxu0 0.0
        %513 = vmatpush1.msra.mxu0 0.0
        %514 = vmatprep.subr.mxu0 0.0
        %515 = vmatpush1.msra.mxu0 0.0
        %516 = vmatprep.subr.mxu0 0.0
        %517 = vmatpush1.msra.mxu0 0.0
        %518 = vmatprep.subr.mxu0 0.0
        %519 = vmatpush1.msra.mxu0 0.0
        %520 = vmatprep.subr.mxu0 0.0
        %521 = vmatpush1.msra.mxu0 0.0
        %522 = vmatprep.subr.mxu0 0.0
        %523 = vmatpush1.msra.mxu0 0.0
        %524 = vmatprep.subr.mxu0 0.0
        %525 = vmatpush1.msra.mxu0 0.0
        %526 = vmatprep.subr.mxu0 0.0
        %527 = vmatpush1.msra.mxu0 0.0
        %528 = vmatprep.subr.mxu0 0.0
        %529 = vmatpush1.msra.mxu0 0.0
        %530 = vmatprep.subr.mxu0 0.0
        %531 = vmatpush1.msra.mxu0 0.0
        %532 = vmatprep.subr.mxu0 0.0
        %533 = vmatpush1.msra.mxu0 0.0
        %534 = vmatprep.subr.mxu0 0.0
        %535 = vmatpush1.msra.mxu0 0.0
        %536 = vmatprep.subr.mxu0 0.0
        %537 = vmatpush1.msra.mxu0 0.0
        %538 = vmatprep.subr.mxu0 0.0
        %539 = vmatpush1.msra.mxu0 0.0
        %540 = vmatprep.subr.mxu0 0.0
        %541 = vmatpush1.msra.mxu0 0.0
        %542 = vmatprep.subr.mxu0 0.0
        %543 = vmatpush1.msra.mxu0 0.0
        %544 = vmatprep.subr.mxu0 0.0
        %545 = vmatpush1.msra.mxu0 0.0
        %546 = vmatprep.subr.mxu0 0.0
        %547 = vmatpush1.msra.mxu0 0.0
        %548 = vmatprep.subr.mxu0 0.0
        %549 = vmatpush1.msra.mxu0 0.0
        %550 = vmatprep.subr.mxu0 0.0
        %551 = vmatpush1.msra.mxu0 0.0
        %552 = vmatprep.subr.mxu0 0.0
        %553 = vmatpush1.msra.mxu0 0.0
        %554 = vmatprep.mubr.f32.mxu0 0.0
        %555 = vmatmul.mubr.f32.gmra.mrb[0].mxu0 %v488
        %v556 = vpop.f32.mrb[0].mxu0
        %v557 = vadd.f32 0.0, %v556
        %v558 = vpop.f32.mrb[0].mxu0
        %559 = vdwg.mxu0
        %v560 = vld [vmem:[#allocation8] sm:$0xff]
        %v561 = vld [vmem:[#allocation2] sm:$0xff]
        %v562 = vmul.f32 %v391, 0.0625
        %564 = vrot.lane.b32.xlu0 %v561, 120
        %v565 = vpop.permute.xlu0 %564
        %566 = vrot.lane.b32.xlu0 %v561, 88
        %v567 = vpop.permute.xlu0 %566
        %v568 = vsel %vm397, %v565, 0
        %v570 = vsel %vm397, %v567, 0
        %572 = vmatprep.subr.mxu0 0.0
        %573 = vmatpush1.xpose.msra.mxu0 %v570
        %574 = vmatprep.subr.mxu0 0.0
        %575 = vmatpush1.xpose.msra.mxu0 0.0
        %576 = vmatprep.subr.mxu0 0.0
        %577 = vmatpush1.xpose.msra.mxu0 0.0
        %578 = vmatprep.subr.mxu0 0.0
        %579 = vmatpush1.xpose.msra.mxu0 0.0
        %580 = vmatprep.subr.mxu0 0.0
        %581 = vmatpush1.xpose.msra.mxu0 0.0
        %582 = vmatprep.subr.mxu0 0.0
        %583 = vmatpush1.xpose.msra.mxu0 0.0
        %584 = vmatprep.subr.mxu0 0.0
        %585 = vmatpush1.xpose.msra.mxu0 0.0
        %586 = vmatprep.subr.mxu0 0.0
        %587 = vmatpush1.xpose.msra.mxu0 0.0
        %588 = vmatprep.subr.mxu0 0.0
        %589 = vmatpush1.xpose.msra.mxu0 0.0
        %590 = vmatprep.subr.mxu0 0.0
        %591 = vmatpush1.xpose.msra.mxu0 0.0
        %592 = vmatprep.subr.mxu0 0.0
        %593 = vmatpush1.xpose.msra.mxu0 0.0
        %594 = vmatprep.subr.mxu0 0.0
        %595 = vmatpush1.xpose.msra.mxu0 0.0
        %596 = vmatprep.subr.mxu0 0.0
        %597 = vmatpush1.xpose.msra.mxu0 0.0
        %598 = vmatprep.subr.mxu0 0.0
        %599 = vmatpush1.xpose.msra.mxu0 0.0
        %600 = vmatprep.subr.mxu0 0.0
        %601 = vmatpush1.xpose.msra.mxu0 0.0
        %602 = vmatprep.subr.mxu0 0.0
        %603 = vmatpush1.xpose.msra.mxu0 0.0
        %604 = vmatprep.subr.mxu0 0.0
        %605 = vmatpush1.xpose.msra.mxu0 0.0
        %606 = vmatprep.subr.mxu0 0.0
        %607 = vmatpush1.xpose.msra.mxu0 0.0
        %608 = vmatprep.subr.mxu0 0.0
        %609 = vmatpush1.xpose.msra.mxu0 0.0
        %610 = vmatprep.subr.mxu0 0.0
        %611 = vmatpush1.xpose.msra.mxu0 0.0
        %612 = vmatprep.subr.mxu0 0.0
        %613 = vmatpush1.xpose.msra.mxu0 0.0
        %614 = vmatprep.subr.mxu0 0.0
        %615 = vmatpush1.xpose.msra.mxu0 0.0
        %616 = vmatprep.subr.mxu0 0.0
        %617 = vmatpush1.xpose.msra.mxu0 0.0
        %618 = vmatprep.subr.mxu0 0.0
        %619 = vmatpush1.xpose.msra.mxu0 0.0
        %620 = vmatprep.subr.mxu0 0.0
        %621 = vmatpush1.xpose.msra.mxu0 0.0
        %622 = vmatprep.subr.mxu0 0.0
        %623 = vmatpush1.xpose.msra.mxu0 0.0
        %624 = vmatprep.subr.mxu0 0.0
        %625 = vmatpush1.xpose.msra.mxu0 0.0
        %626 = vmatprep.subr.mxu0 0.0
        %627 = vmatpush1.xpose.msra.mxu0 0.0
        %628 = vmatprep.subr.mxu0 0.0
        %629 = vmatpush1.xpose.msra.mxu0 0.0
        %630 = vmatprep.subr.mxu0 0.0
        %631 = vmatpush1.xpose.msra.mxu0 0.0
        %632 = vmatprep.subr.mxu0 0.0
        %633 = vmatpush1.xpose.msra.mxu0 0.0
        %634 = vmatprep.subr.mxu0 0.0
        %635 = vmatpush1.xpose.msra.mxu0 0.0
        %636 = vmatprep.mubr.f32.mxu0 0.0
        %637 = vmatmul.mubr.f32.gmra.mrb[0].mxu0 %v568
        %v638 = vpop.f32.mrb[0].mxu0
        %v639 = vadd.f32 %v562, %v638
        %v640 = vpop.f32.mrb[0].mxu0
        %641 = vdwg.mxu0
        %v642 = vsel %vm397, %v639, -inf
        %643 = vmax.xlane.f32.xlu0 %v642
        %v644 = vpop.xlane.xlu0 %643
        %v645 = vsub.f32 %v639, %v644
        %v646 = vmul.f32 %v645, 1.442695
        %v647 = vpow.pop %v646
        %v648 = vsel %vm397, %v647, 0.0
        %649 = vadd.xlane.f32.xlu0 %v648
        %v650 = vpop.xlane.xlu0 %649
        %v651 = vrcp.pop %v650
        %v652 = vmul.f32 %v647, %v651
        %s653 = scalar_lea.vmem %s295, 8 [#allocation10]
        %654 = vst.msk [vmem:[%s653] sm:$0xff] %vm397, %v652
        %655 = vrot.lane.b32.xlu0 %v561, 56
        %v656 = vpop.permute.xlu0 %655
        %v659 = vsel %vm397, %v652, 0
        %661 = vmatprep.subr.mxu0 0.0
        %662 = vmatpush1.msra.mxu0 %v656
        %663 = vmatprep.subr.mxu0 0.0
        %664 = vmatpush1.msra.mxu0 0.0
        %665 = vmatprep.subr.mxu0 0.0
        %666 = vmatpush1.msra.mxu0 0.0
        %667 = vmatprep.subr.mxu0 0.0
        %668 = vmatpush1.msra.mxu0 0.0
        %669 = vmatprep.subr.mxu0 0.0
        %670 = vmatpush1.msra.mxu0 0.0
        %671 = vmatprep.subr.mxu0 0.0
        %672 = vmatpush1.msra.mxu0 0.0
        %673 = vmatprep.subr.mxu0 0.0
        %674 = vmatpush1.msra.mxu0 0.0
        %675 = vmatprep.subr.mxu0 0.0
        %676 = vmatpush1.msra.mxu0 0.0
        %677 = vmatprep.subr.mxu0 0.0
        %678 = vmatpush1.msra.mxu0 0.0
        %679 = vmatprep.subr.mxu0 0.0
        %680 = vmatpush1.msra.mxu0 0.0
        %681 = vmatprep.subr.mxu0 0.0
        %682 = vmatpush1.msra.mxu0 0.0
        %683 = vmatprep.subr.mxu0 0.0
        %684 = vmatpush1.msra.mxu0 0.0
        %685 = vmatprep.subr.mxu0 0.0
        %686 = vmatpush1.msra.mxu0 0.0
        %687 = vmatprep.subr.mxu0 0.0
        %688 = vmatpush1.msra.mxu0 0.0
        %689 = vmatprep.subr.mxu0 0.0
        %690 = vmatpush1.msra.mxu0 0.0
        %691 = vmatprep.subr.mxu0 0.0
        %692 = vmatpush1.msra.mxu0 0.0
        %693 = vmatprep.subr.mxu0 0.0
        %694 = vmatpush1.msra.mxu0 0.0
        %695 = vmatprep.subr.mxu0 0.0
        %696 = vmatpush1.msra.mxu0 0.0
        %697 = vmatprep.subr.mxu0 0.0
        %698 = vmatpush1.msra.mxu0 0.0
        %699 = vmatprep.subr.mxu0 0.0
        %700 = vmatpush1.msra.mxu0 0.0
        %701 = vmatprep.subr.mxu0 0.0
        %702 = vmatpush1.msra.mxu0 0.0
        %703 = vmatprep.subr.mxu0 0.0
        %704 = vmatpush1.msra.mxu0 0.0
        %705 = vmatprep.subr.mxu0 0.0
        %706 = vmatpush1.msra.mxu0 0.0
        %707 = vmatprep.subr.mxu0 0.0
        %708 = vmatpush1.msra.mxu0 0.0
        %709 = vmatprep.subr.mxu0 0.0
        %710 = vmatpush1.msra.mxu0 0.0
        %711 = vmatprep.subr.mxu0 0.0
        %712 = vmatpush1.msra.mxu0 0.0
        %713 = vmatprep.subr.mxu0 0.0
        %714 = vmatpush1.msra.mxu0 0.0
        %715 = vmatprep.subr.mxu0 0.0
        %716 = vmatpush1.msra.mxu0 0.0
        %717 = vmatprep.subr.mxu0 0.0
        %718 = vmatpush1.msra.mxu0 0.0
        %719 = vmatprep.subr.mxu0 0.0
        %720 = vmatpush1.msra.mxu0 0.0
        %721 = vmatprep.subr.mxu0 0.0
        %722 = vmatpush1.msra.mxu0 0.0
        %723 = vmatprep.subr.mxu0 0.0
        %724 = vmatpush1.msra.mxu0 0.0
        %725 = vmatprep.mubr.f32.mxu0 0.0
        %726 = vmatmul.mubr.f32.gmra.mrb[0].mxu0 %v659
        %v727 = vpop.f32.mrb[0].mxu0
        %v728 = vadd.f32 0.0, %v727
        %v729 = vpop.f32.mrb[0].mxu0
        %730 = vdwg.mxu0
        %v731 = vld [vmem:[#allocation8 + $0x8] sm:$0xff]
        %v733 = vsel %vm397, %v728, 0
        %735 = vmatprep.subr.mxu0 0.0
        %736 = vmatpush1.msra.mxu0 %v731
        %737 = vmatprep.subr.mxu0 0.0
        %738 = vmatpush1.msra.mxu0 0.0
        %739 = vmatprep.subr.mxu0 0.0
        %740 = vmatpush1.msra.mxu0 0.0
        %741 = vmatprep.subr.mxu0 0.0
        %742 = vmatpush1.msra.mxu0 0.0
        %743 = vmatprep.subr.mxu0 0.0
        %744 = vmatpush1.msra.mxu0 0.0
        %745 = vmatprep.subr.mxu0 0.0
        %746 = vmatpush1.msra.mxu0 0.0
        %747 = vmatprep.subr.mxu0 0.0
        %748 = vmatpush1.msra.mxu0 0.0
        %749 = vmatprep.subr.mxu0 0.0
        %750 = vmatpush1.msra.mxu0 0.0
        %751 = vmatprep.subr.mxu0 0.0
        %752 = vmatpush1.msra.mxu0 0.0
        %753 = vmatprep.subr.mxu0 0.0
        %754 = vmatpush1.msra.mxu0 0.0
        %755 = vmatprep.subr.mxu0 0.0
        %756 = vmatpush1.msra.mxu0 0.0
        %757 = vmatprep.subr.mxu0 0.0
        %758 = vmatpush1.msra.mxu0 0.0
        %759 = vmatprep.subr.mxu0 0.0
        %760 = vmatpush1.msra.mxu0 0.0
        %761 = vmatprep.subr.mxu0 0.0
        %762 = vmatpush1.msra.mxu0 0.0
        %763 = vmatprep.subr.mxu0 0.0
        %764 = vmatpush1.msra.mxu0 0.0
        %765 = vmatprep.subr.mxu0 0.0
        %766 = vmatpush1.msra.mxu0 0.0
        %767 = vmatprep.subr.mxu0 0.0
        %768 = vmatpush1.msra.mxu0 0.0
        %769 = vmatprep.subr.mxu0 0.0
        %770 = vmatpush1.msra.mxu0 0.0
        %771 = vmatprep.subr.mxu0 0.0
        %772 = vmatpush1.msra.mxu0 0.0
        %773 = vmatprep.subr.mxu0 0.0
        %774 = vmatpush1.msra.mxu0 0.0
        %775 = vmatprep.subr.mxu0 0.0
        %776 = vmatpush1.msra.mxu0 0.0
        %777 = vmatprep.subr.mxu0 0.0
        %778 = vmatpush1.msra.mxu0 0.0
        %779 = vmatprep.subr.mxu0 0.0
        %780 = vmatpush1.msra.mxu0 0.0
        %781 = vmatprep.subr.mxu0 0.0
        %782 = vmatpush1.msra.mxu0 0.0
        %783 = vmatprep.subr.mxu0 0.0
        %784 = vmatpush1.msra.mxu0 0.0
        %785 = vmatprep.subr.mxu0 0.0
        %786 = vmatpush1.msra.mxu0 0.0
        %787 = vmatprep.subr.mxu0 0.0
        %788 = vmatpush1.msra.mxu0 0.0
        %789 = vmatprep.subr.mxu0 0.0
        %790 = vmatpush1.msra.mxu0 0.0
        %791 = vmatprep.subr.mxu0 0.0
        %792 = vmatpush1.msra.mxu0 0.0
        %793 = vmatprep.subr.mxu0 0.0
        %794 = vmatpush1.msra.mxu0 0.0
        %795 = vmatprep.subr.mxu0 0.0
        %796 = vmatpush1.msra.mxu0 0.0
        %797 = vmatprep.subr.mxu0 0.0
        %798 = vmatpush1.msra.mxu0 0.0
        %799 = vmatprep.mubr.f32.mxu0 0.0
        %800 = vmatmul.mubr.f32.gmra.mrb[0].mxu0 %v733
        %v801 = vpop.f32.mrb[0].mxu0
        %v802 = vadd.f32 0.0, %v801
        %v803 = vpop.f32.mrb[0].mxu0
        %804 = vdwg.mxu0
        %v806 = vsel %vm397, %v557, 0
        %808 = vmatprep.subr.mxu0 0.0
        %809 = vmatpush1.msra.mxu0 %v560
        %810 = vmatprep.subr.mxu0 0.0
        %811 = vmatpush1.msra.mxu0 0.0
        %812 = vmatprep.subr.mxu0 0.0
        %813 = vmatpush1.msra.mxu0 0.0
        %814 = vmatprep.subr.mxu0 0.0
        %815 = vmatpush1.msra.mxu0 0.0
        %816 = vmatprep.subr.mxu0 0.0
        %817 = vmatpush1.msra.mxu0 0.0
        %818 = vmatprep.subr.mxu0 0.0
        %819 = vmatpush1.msra.mxu0 0.0
        %820 = vmatprep.subr.mxu0 0.0
        %821 = vmatpush1.msra.mxu0 0.0
        %822 = vmatprep.subr.mxu0 0.0
        %823 = vmatpush1.msra.mxu0 0.0
        %824 = vmatprep.subr.mxu0 0.0
        %825 = vmatpush1.msra.mxu0 0.0
        %826 = vmatprep.subr.mxu0 0.0
        %827 = vmatpush1.msra.mxu0 0.0
        %828 = vmatprep.subr.mxu0 0.0
        %829 = vmatpush1.msra.mxu0 0.0
        %830 = vmatprep.subr.mxu0 0.0
        %831 = vmatpush1.msra.mxu0 0.0
        %832 = vmatprep.subr.mxu0 0.0
        %833 = vmatpush1.msra.mxu0 0.0
        %834 = vmatprep.subr.mxu0 0.0
        %835 = vmatpush1.msra.mxu0 0.0
        %836 = vmatprep.subr.mxu0 0.0
        %837 = vmatpush1.msra.mxu0 0.0
        %838 = vmatprep.subr.mxu0 0.0
        %839 = vmatpush1.msra.mxu0 0.0
        %840 = vmatprep.subr.mxu0 0.0
        %841 = vmatpush1.msra.mxu0 0.0
        %842 = vmatprep.subr.mxu0 0.0
        %843 = vmatpush1.msra.mxu0 0.0
        %844 = vmatprep.subr.mxu0 0.0
        %845 = vmatpush1.msra.mxu0 0.0
        %846 = vmatprep.subr.mxu0 0.0
        %847 = vmatpush1.msra.mxu0 0.0
        %848 = vmatprep.subr.mxu0 0.0
        %849 = vmatpush1.msra.mxu0 0.0
        %850 = vmatprep.subr.mxu0 0.0
        %851 = vmatpush1.msra.mxu0 0.0
        %852 = vmatprep.subr.mxu0 0.0
        %853 = vmatpush1.msra.mxu0 0.0
        %854 = vmatprep.subr.mxu0 0.0
        %855 = vmatpush1.msra.mxu0 0.0
        %856 = vmatprep.subr.mxu0 0.0
        %857 = vmatpush1.msra.mxu0 0.0
        %858 = vmatprep.subr.mxu0 0.0
        %859 = vmatpush1.msra.mxu0 0.0
        %860 = vmatprep.subr.mxu0 0.0
        %861 = vmatpush1.msra.mxu0 0.0
        %862 = vmatprep.subr.mxu0 0.0
        %863 = vmatpush1.msra.mxu0 0.0
        %864 = vmatprep.subr.mxu0 0.0
        %865 = vmatpush1.msra.mxu0 0.0
        %866 = vmatprep.subr.mxu0 0.0
        %867 = vmatpush1.msra.mxu0 0.0
        %868 = vmatprep.subr.mxu0 0.0
        %869 = vmatpush1.msra.mxu0 0.0
        %870 = vmatprep.subr.mxu0 0.0
        %871 = vmatpush1.msra.mxu0 0.0
        %872 = vmatprep.mubr.f32.mxu0 0.0
        %873 = vmatmul.mubr.f32.gmra.mrb[0].mxu0 %v806
        %v874 = vpop.f32.mrb[0].mxu0
        %v875 = vadd.f32 %v802, %v874
        %v876 = vpop.f32.mrb[0].mxu0
        %877 = vdwg.mxu0
        %v878 = vld [vmem:[#allocation2] sm:$0xff]
        %v879 = vmul.f32 %v391, 0.015625
        %881 = vrot.lane.b32.xlu0 %v878, 112
        %v882 = vpop.permute.xlu0 %881
        %883 = vrot.lane.b32.xlu0 %v878, 80
        %v884 = vpop.permute.xlu0 %883
        %v885 = vsel %vm397, %v882, 0
        %v887 = vsel %vm397, %v884, 0
        %889 = vmatprep.subr.mxu0 0.0
        %890 = vmatpush1.xpose.msra.mxu0 %v887
        %891 = vmatprep.subr.mxu0 0.0
        %892 = vmatpush1.xpose.msra.mxu0 0.0
        %893 = vmatprep.subr.mxu0 0.0
        %894 = vmatpush1.xpose.msra.mxu0 0.0
        %895 = vmatprep.subr.mxu0 0.0
        %896 = vmatpush1.xpose.msra.mxu0 0.0
        %897 = vmatprep.subr.mxu0 0.0
        %898 = vmatpush1.xpose.msra.mxu0 0.0
        %899 = vmatprep.subr.mxu0 0.0
        %900 = vmatpush1.xpose.msra.mxu0 0.0
        %901 = vmatprep.subr.mxu0 0.0
        %902 = vmatpush1.xpose.msra.mxu0 0.0
        %903 = vmatprep.subr.mxu0 0.0
        %904 = vmatpush1.xpose.msra.mxu0 0.0
        %905 = vmatprep.subr.mxu0 0.0
        %906 = vmatpush1.xpose.msra.mxu0 0.0
        %907 = vmatprep.subr.mxu0 0.0
        %908 = vmatpush1.xpose.msra.mxu0 0.0
        %909 = vmatprep.subr.mxu0 0.0
        %910 = vmatpush1.xpose.msra.mxu0 0.0
        %911 = vmatprep.subr.mxu0 0.0
        %912 = vmatpush1.xpose.msra.mxu0 0.0
        %913 = vmatprep.subr.mxu0 0.0
        %914 = vmatpush1.xpose.msra.mxu0 0.0
        %915 = vmatprep.subr.mxu0 0.0
        %916 = vmatpush1.xpose.msra.mxu0 0.0
        %917 = vmatprep.subr.mxu0 0.0
        %918 = vmatpush1.xpose.msra.mxu0 0.0
        %919 = vmatprep.subr.mxu0 0.0
        %920 = vmatpush1.xpose.msra.mxu0 0.0
        %921 = vmatprep.subr.mxu0 0.0
        %922 = vmatpush1.xpose.msra.mxu0 0.0
        %923 = vmatprep.subr.mxu0 0.0
        %924 = vmatpush1.xpose.msra.mxu0 0.0
        %925 = vmatprep.subr.mxu0 0.0
        %926 = vmatpush1.xpose.msra.mxu0 0.0
        %927 = vmatprep.subr.mxu0 0.0
        %928 = vmatpush1.xpose.msra.mxu0 0.0
        %929 = vmatprep.subr.mxu0 0.0
        %930 = vmatpush1.xpose.msra.mxu0 0.0
        %931 = vmatprep.subr.mxu0 0.0
        %932 = vmatpush1.xpose.msra.mxu0 0.0
        %933 = vmatprep.subr.mxu0 0.0
        %934 = vmatpush1.xpose.msra.mxu0 0.0
        %935 = vmatprep.subr.mxu0 0.0
        %936 = vmatpush1.xpose.msra.mxu0 0.0
        %937 = vmatprep.subr.mxu0 0.0
        %938 = vmatpush1.xpose.msra.mxu0 0.0
        %939 = vmatprep.subr.mxu0 0.0
        %940 = vmatpush1.xpose.msra.mxu0 0.0
        %941 = vmatprep.subr.mxu0 0.0
        %942 = vmatpush1.xpose.msra.mxu0 0.0
        %943 = vmatprep.subr.mxu0 0.0
        %944 = vmatpush1.xpose.msra.mxu0 0.0
        %945 = vmatprep.subr.mxu0 0.0
        %946 = vmatpush1.xpose.msra.mxu0 0.0
        %947 = vmatprep.subr.mxu0 0.0
        %948 = vmatpush1.xpose.msra.mxu0 0.0
        %949 = vmatprep.subr.mxu0 0.0
        %950 = vmatpush1.xpose.msra.mxu0 0.0
        %951 = vmatprep.subr.mxu0 0.0
        %952 = vmatpush1.xpose.msra.mxu0 0.0
        %953 = vmatprep.mubr.f32.mxu0 0.0
        %954 = vmatmul.mubr.f32.gmra.mrb[0].mxu0 %v885
        %v955 = vpop.f32.mrb[0].mxu0
        %v956 = vadd.f32 %v879, %v955
        %v957 = vpop.f32.mrb[0].mxu0
        %958 = vdwg.mxu0
        %v959 = vsel %vm397, %v956, -inf
        %960 = vmax.xlane.f32.xlu0 %v959
        %v961 = vpop.xlane.xlu0 %960
        %v962 = vsub.f32 %v956, %v961
        %v963 = vmul.f32 %v962, 1.442695
        %v964 = vpow.pop %v963
        %v965 = vsel %vm397, %v964, 0.0
        %966 = vadd.xlane.f32.xlu0 %v965
        %v967 = vpop.xlane.xlu0 %966
        %v968 = vrcp.pop %v967
        %v969 = vmul.f32 %v964, %v968
        %s970 = scalar_lea.vmem %s295, 16 [#allocation10]
        %971 = vst.msk [vmem:[%s970] sm:$0xff] %vm397, %v969
        %972 = vrot.lane.b32.xlu0 %v878, 48
        %v973 = vpop.permute.xlu0 %972
        %v976 = vsel %vm397, %v969, 0
        %978 = vmatprep.subr.mxu0 0.0
        %979 = vmatpush1.msra.mxu0 %v973
        %980 = vmatprep.subr.mxu0 0.0
        %981 = vmatpush1.msra.mxu0 0.0
        %982 = vmatprep.subr.mxu0 0.0
        %983 = vmatpush1.msra.mxu0 0.0
        %984 = vmatprep.subr.mxu0 0.0
        %985 = vmatpush1.msra.mxu0 0.0
        %986 = vmatprep.subr.mxu0 0.0
        %987 = vmatpush1.msra.mxu0 0.0
        %988 = vmatprep.subr.mxu0 0.0
        %989 = vmatpush1.msra.mxu0 0.0
        %990 = vmatprep.subr.mxu0 0.0
        %991 = vmatpush1.msra.mxu0 0.0
        %992 = vmatprep.subr.mxu0 0.0
        %993 = vmatpush1.msra.mxu0 0.0
        %994 = vmatprep.subr.mxu0 0.0
        %995 = vmatpush1.msra.mxu0 0.0
        %996 = vmatprep.subr.mxu0 0.0
        %997 = vmatpush1.msra.mxu0 0.0
        %998 = vmatprep.subr.mxu0 0.0
        %999 = vmatpush1.msra.mxu0 0.0
        %1000 = vmatprep.subr.mxu0 0.0
        %1001 = vmatpush1.msra.mxu0 0.0
        %1002 = vmatprep.subr.mxu0 0.0
        %1003 = vmatpush1.msra.mxu0 0.0
        %1004 = vmatprep.subr.mxu0 0.0
        %1005 = vmatpush1.msra.mxu0 0.0
        %1006 = vmatprep.subr.mxu0 0.0
        %1007 = vmatpush1.msra.mxu0 0.0
        %1008 = vmatprep.subr.mxu0 0.0
        %1009 = vmatpush1.msra.mxu0 0.0
        %1010 = vmatprep.subr.mxu0 0.0
        %1011 = vmatpush1.msra.mxu0 0.0
        %1012 = vmatprep.subr.mxu0 0.0
        %1013 = vmatpush1.msra.mxu0 0.0
        %1014 = vmatprep.subr.mxu0 0.0
        %1015 = vmatpush1.msra.mxu0 0.0
        %1016 = vmatprep.subr.mxu0 0.0
        %1017 = vmatpush1.msra.mxu0 0.0
        %1018 = vmatprep.subr.mxu0 0.0
        %1019 = vmatpush1.msra.mxu0 0.0
        %1020 = vmatprep.subr.mxu0 0.0
        %1021 = vmatpush1.msra.mxu0 0.0
        %1022 = vmatprep.subr.mxu0 0.0
        %1023 = vmatpush1.msra.mxu0 0.0
        %1024 = vmatprep.subr.mxu0 0.0
        %1025 = vmatpush1.msra.mxu0 0.0
        %1026 = vmatprep.subr.mxu0 0.0
        %1027 = vmatpush1.msra.mxu0 0.0
        %1028 = vmatprep.subr.mxu0 0.0
        %1029 = vmatpush1.msra.mxu0 0.0
        %1030 = vmatprep.subr.mxu0 0.0
        %1031 = vmatpush1.msra.mxu0 0.0
        %1032 = vmatprep.subr.mxu0 0.0
        %1033 = vmatpush1.msra.mxu0 0.0
        %1034 = vmatprep.subr.mxu0 0.0
        %1035 = vmatpush1.msra.mxu0 0.0
        %1036 = vmatprep.subr.mxu0 0.0
        %1037 = vmatpush1.msra.mxu0 0.0
        %1038 = vmatprep.subr.mxu0 0.0
        %1039 = vmatpush1.msra.mxu0 0.0
        %1040 = vmatprep.subr.mxu0 0.0
        %1041 = vmatpush1.msra.mxu0 0.0
        %1042 = vmatprep.mubr.f32.mxu0 0.0
        %1043 = vmatmul.mubr.f32.gmra.mrb[0].mxu0 %v976
        %v1044 = vpop.f32.mrb[0].mxu0
        %v1045 = vadd.f32 0.0, %v1044
        %v1046 = vpop.f32.mrb[0].mxu0
        %1047 = vdwg.mxu0
        %v1048 = vld [vmem:[#allocation8 + $0x10] sm:$0xff]
        %v1050 = vsel %vm397, %v1045, 0
        %1052 = vmatprep.subr.mxu0 0.0
        %1053 = vmatpush1.msra.mxu0 %v1048
        %1054 = vmatprep.subr.mxu0 0.0
        %1055 = vmatpush1.msra.mxu0 0.0
        %1056 = vmatprep.subr.mxu0 0.0
        %1057 = vmatpush1.msra.mxu0 0.0
        %1058 = vmatprep.subr.mxu0 0.0
        %1059 = vmatpush1.msra.mxu0 0.0
        %1060 = vmatprep.subr.mxu0 0.0
        %1061 = vmatpush1.msra.mxu0 0.0
        %1062 = vmatprep.subr.mxu0 0.0
        %1063 = vmatpush1.msra.mxu0 0.0
        %1064 = vmatprep.subr.mxu0 0.0
        %1065 = vmatpush1.msra.mxu0 0.0
        %1066 = vmatprep.subr.mxu0 0.0
        %1067 = vmatpush1.msra.mxu0 0.0
        %1068 = vmatprep.subr.mxu0 0.0
        %1069 = vmatpush1.msra.mxu0 0.0
        %1070 = vmatprep.subr.mxu0 0.0
        %1071 = vmatpush1.msra.mxu0 0.0
        %1072 = vmatprep.subr.mxu0 0.0
        %1073 = vmatpush1.msra.mxu0 0.0
        %1074 = vmatprep.subr.mxu0 0.0
        %1075 = vmatpush1.msra.mxu0 0.0
        %1076 = vmatprep.subr.mxu0 0.0
        %1077 = vmatpush1.msra.mxu0 0.0
        %1078 = vmatprep.subr.mxu0 0.0
        %1079 = vmatpush1.msra.mxu0 0.0
        %1080 = vmatprep.subr.mxu0 0.0
        %1081 = vmatpush1.msra.mxu0 0.0
        %1082 = vmatprep.subr.mxu0 0.0
        %1083 = vmatpush1.msra.mxu0 0.0
        %1084 = vmatprep.subr.mxu0 0.0
        %1085 = vmatpush1.msra.mxu0 0.0
        %1086 = vmatprep.subr.mxu0 0.0
        %1087 = vmatpush1.msra.mxu0 0.0
        %1088 = vmatprep.subr.mxu0 0.0
        %1089 = vmatpush1.msra.mxu0 0.0
        %1090 = vmatprep.subr.mxu0 0.0
        %1091 = vmatpush1.msra.mxu0 0.0
        %1092 = vmatprep.subr.mxu0 0.0
        %1093 = vmatpush1.msra.mxu0 0.0
        %1094 = vmatprep.subr.mxu0 0.0
        %1095 = vmatpush1.msra.mxu0 0.0
        %1096 = vmatprep.subr.mxu0 0.0
        %1097 = vmatpush1.msra.mxu0 0.0
        %1098 = vmatprep.subr.mxu0 0.0
        %1099 = vmatpush1.msra.mxu0 0.0
        %1100 = vmatprep.subr.mxu0 0.0
        %1101 = vmatpush1.msra.mxu0 0.0
        %1102 = vmatprep.subr.mxu0 0.0
        %1103 = vmatpush1.msra.mxu0 0.0
        %1104 = vmatprep.subr.mxu0 0.0
        %1105 = vmatpush1.msra.mxu0 0.0
        %1106 = vmatprep.subr.mxu0 0.0
        %1107 = vmatpush1.msra.mxu0 0.0
        %1108 = vmatprep.subr.mxu0 0.0
        %1109 = vmatpush1.msra.mxu0 0.0
        %1110 = vmatprep.subr.mxu0 0.0
        %1111 = vmatpush1.msra.mxu0 0.0
        %1112 = vmatprep.subr.mxu0 0.0
        %1113 = vmatpush1.msra.mxu0 0.0
        %1114 = vmatprep.subr.mxu0 0.0
        %1115 = vmatpush1.msra.mxu0 0.0
        %1116 = vmatprep.mubr.f32.mxu0 0.0
        %1117 = vmatmul.mubr.f32.gmra.mrb[0].mxu0 %v1050
        %v1118 = vpop.f32.mrb[0].mxu0
        %v1119 = vadd.f32 0.0, %v1118
        %v1120 = vpop.f32.mrb[0].mxu0
        %1121 = vdwg.mxu0
        %v1122 = vadd.f32 %v875, %v1119
        %v1123 = vld [vmem:[#allocation2] sm:$0xff]
        %v1124 = vmul.f32 %v391, 0.00390625
        %1126 = vrot.lane.b32.xlu0 %v1123, 104
        %v1127 = vpop.permute.xlu0 %1126
        %1128 = vrot.lane.b32.xlu0 %v1123, 72
        %v1129 = vpop.permute.xlu0 %1128
        %v1130 = vsel %vm397, %v1127, 0
        %v1132 = vsel %vm397, %v1129, 0
        %1134 = vmatprep.subr.mxu0 0.0
        %1135 = vmatpush1.xpose.msra.mxu0 %v1132
        %1136 = vmatprep.subr.mxu0 0.0
        %1137 = vmatpush1.xpose.msra.mxu0 0.0
        %1138 = vmatprep.subr.mxu0 0.0
        %1139 = vmatpush1.xpose.msra.mxu0 0.0
        %1140 = vmatprep.subr.mxu0 0.0
        %1141 = vmatpush1.xpose.msra.mxu0 0.0
        %1142 = vmatprep.subr.mxu0 0.0
        %1143 = vmatpush1.xpose.msra.mxu0 0.0
        %1144 = vmatprep.subr.mxu0 0.0
        %1145 = vmatpush1.xpose.msra.mxu0 0.0
        %1146 = vmatprep.subr.mxu0 0.0
        %1147 = vmatpush1.xpose.msra.mxu0 0.0
        %1148 = vmatprep.subr.mxu0 0.0
        %1149 = vmatpush1.xpose.msra.mxu0 0.0
        %1150 = vmatprep.subr.mxu0 0.0
        %1151 = vmatpush1.xpose.msra.mxu0 0.0
        %1152 = vmatprep.subr.mxu0 0.0
        %1153 = vmatpush1.xpose.msra.mxu0 0.0
        %1154 = vmatprep.subr.mxu0 0.0
        %1155 = vmatpush1.xpose.msra.mxu0 0.0
        %1156 = vmatprep.subr.mxu0 0.0
        %1157 = vmatpush1.xpose.msra.mxu0 0.0
        %1158 = vmatprep.subr.mxu0 0.0
        %1159 = vmatpush1.xpose.msra.mxu0 0.0
        %1160 = vmatprep.subr.mxu0 0.0
        %1161 = vmatpush1.xpose.msra.mxu0 0.0
        %1162 = vmatprep.subr.mxu0 0.0
        %1163 = vmatpush1.xpose.msra.mxu0 0.0
        %1164 = vmatprep.subr.mxu0 0.0
        %1165 = vmatpush1.xpose.msra.mxu0 0.0
        %1166 = vmatprep.subr.mxu0 0.0
        %1167 = vmatpush1.xpose.msra.mxu0 0.0
        %1168 = vmatprep.subr.mxu0 0.0
        %1169 = vmatpush1.xpose.msra.mxu0 0.0
        %1170 = vmatprep.subr.mxu0 0.0
        %1171 = vmatpush1.xpose.msra.mxu0 0.0
        %1172 = vmatprep.subr.mxu0 0.0
        %1173 = vmatpush1.xpose.msra.mxu0 0.0
        %1174 = vmatprep.subr.mxu0 0.0
        %1175 = vmatpush1.xpose.msra.mxu0 0.0
        %1176 = vmatprep.subr.mxu0 0.0
        %1177 = vmatpush1.xpose.msra.mxu0 0.0
        %1178 = vmatprep.subr.mxu0 0.0
        %1179 = vmatpush1.xpose.msra.mxu0 0.0
        %1180 = vmatprep.subr.mxu0 0.0
        %1181 = vmatpush1.xpose.msra.mxu0 0.0
        %1182 = vmatprep.subr.mxu0 0.0
        %1183 = vmatpush1.xpose.msra.mxu0 0.0
        %1184 = vmatprep.subr.mxu0 0.0
        %1185 = vmatpush1.xpose.msra.mxu0 0.0
        %1186 = vmatprep.subr.mxu0 0.0
        %1187 = vmatpush1.xpose.msra.mxu0 0.0
        %1188 = vmatprep.subr.mxu0 0.0
        %1189 = vmatpush1.xpose.msra.mxu0 0.0
        %1190 = vmatprep.subr.mxu0 0.0
        %1191 = vmatpush1.xpose.msra.mxu0 0.0
        %1192 = vmatprep.subr.mxu0 0.0
        %1193 = vmatpush1.xpose.msra.mxu0 0.0
        %1194 = vmatprep.subr.mxu0 0.0
        %1195 = vmatpush1.xpose.msra.mxu0 0.0
        %1196 = vmatprep.subr.mxu0 0.0
        %1197 = vmatpush1.xpose.msra.mxu0 0.0
        %1198 = vmatprep.mubr.f32.mxu0 0.0
        %1199 = vmatmul.mubr.f32.gmra.mrb[0].mxu0 %v1130
        %v1200 = vpop.f32.mrb[0].mxu0
        %v1201 = vadd.f32 %v1124, %v1200
        %v1202 = vpop.f32.mrb[0].mxu0
        %1203 = vdwg.mxu0
        %v1204 = vsel %vm397, %v1201, -inf
        %1205 = vmax.xlane.f32.xlu0 %v1204
        %v1206 = vpop.xlane.xlu0 %1205
        %v1207 = vsub.f32 %v1201, %v1206
        %v1208 = vmul.f32 %v1207, 1.442695
        %v1209 = vpow.pop %v1208
        %v1210 = vsel %vm397, %v1209, 0.0
        %1211 = vadd.xlane.f32.xlu0 %v1210
        %v1212 = vpop.xlane.xlu0 %1211
        %v1213 = vrcp.pop %v1212
        %v1214 = vmul.f32 %v1209, %v1213
        %s1215 = scalar_lea.vmem %s295, 24 [#allocation10]
        %1216 = vst.msk [vmem:[%s1215] sm:$0xff] %vm397, %v1214
        %1217 = vrot.lane.b32.xlu0 %v1123, 40
        %v1218 = vpop.permute.xlu0 %1217
        %v1221 = vsel %vm397, %v1214, 0
        %1223 = vmatprep.subr.mxu0 0.0
        %1224 = vmatpush1.msra.mxu0 %v1218
        %1225 = vmatprep.subr.mxu0 0.0
        %1226 = vmatpush1.msra.mxu0 0.0
        %1227 = vmatprep.subr.mxu0 0.0
        %1228 = vmatpush1.msra.mxu0 0.0
        %1229 = vmatprep.subr.mxu0 0.0
        %1230 = vmatpush1.msra.mxu0 0.0
        %1231 = vmatprep.subr.mxu0 0.0
        %1232 = vmatpush1.msra.mxu0 0.0
        %1233 = vmatprep.subr.mxu0 0.0
        %1234 = vmatpush1.msra.mxu0 0.0
        %1235 = vmatprep.subr.mxu0 0.0
        %1236 = vmatpush1.msra.mxu0 0.0
        %1237 = vmatprep.subr.mxu0 0.0
        %1238 = vmatpush1.msra.mxu0 0.0
        %1239 = vmatprep.subr.mxu0 0.0
        %1240 = vmatpush1.msra.mxu0 0.0
        %1241 = vmatprep.subr.mxu0 0.0
        %1242 = vmatpush1.msra.mxu0 0.0
        %1243 = vmatprep.subr.mxu0 0.0
        %1244 = vmatpush1.msra.mxu0 0.0
        %1245 = vmatprep.subr.mxu0 0.0
        %1246 = vmatpush1.msra.mxu0 0.0
        %1247 = vmatprep.subr.mxu0 0.0
        %1248 = vmatpush1.msra.mxu0 0.0
        %1249 = vmatprep.subr.mxu0 0.0
        %1250 = vmatpush1.msra.mxu0 0.0
        %1251 = vmatprep.subr.mxu0 0.0
        %1252 = vmatpush1.msra.mxu0 0.0
        %1253 = vmatprep.subr.mxu0 0.0
        %1254 = vmatpush1.msra.mxu0 0.0
        %1255 = vmatprep.subr.mxu0 0.0
        %1256 = vmatpush1.msra.mxu0 0.0
        %1257 = vmatprep.subr.mxu0 0.0
        %1258 = vmatpush1.msra.mxu0 0.0
        %1259 = vmatprep.subr.mxu0 0.0
        %1260 = vmatpush1.msra.mxu0 0.0
        %1261 = vmatprep.subr.mxu0 0.0
        %1262 = vmatpush1.msra.mxu0 0.0
        %1263 = vmatprep.subr.mxu0 0.0
        %1264 = vmatpush1.msra.mxu0 0.0
        %1265 = vmatprep.subr.mxu0 0.0
        %1266 = vmatpush1.msra.mxu0 0.0
        %1267 = vmatprep.subr.mxu0 0.0
        %1268 = vmatpush1.msra.mxu0 0.0
        %1269 = vmatprep.subr.mxu0 0.0
        %1270 = vmatpush1.msra.mxu0 0.0
        %1271 = vmatprep.subr.mxu0 0.0
        %1272 = vmatpush1.msra.mxu0 0.0
        %1273 = vmatprep.subr.mxu0 0.0
        %1274 = vmatpush1.msra.mxu0 0.0
        %1275 = vmatprep.subr.mxu0 0.0
        %1276 = vmatpush1.msra.mxu0 0.0
        %1277 = vmatprep.subr.mxu0 0.0
        %1278 = vmatpush1.msra.mxu0 0.0
        %1279 = vmatprep.subr.mxu0 0.0
        %1280 = vmatpush1.msra.mxu0 0.0
        %1281 = vmatprep.subr.mxu0 0.0
        %1282 = vmatpush1.msra.mxu0 0.0
        %1283 = vmatprep.subr.mxu0 0.0
        %1284 = vmatpush1.msra.mxu0 0.0
        %1285 = vmatprep.subr.mxu0 0.0
        %1286 = vmatpush1.msra.mxu0 0.0
        %1287 = vmatprep.mubr.f32.mxu0 0.0
        %1288 = vmatmul.mubr.f32.gmra.mrb[0].mxu0 %v1221
        %v1289 = vpop.f32.mrb[0].mxu0
        %v1290 = vadd.f32 0.0, %v1289
        %v1291 = vpop.f32.mrb[0].mxu0
        %1292 = vdwg.mxu0
        %v1293 = vld [vmem:[#allocation8 + $0x18] sm:$0xff]
        %v1295 = vsel %vm397, %v1290, 0
        %1297 = vmatprep.subr.mxu0 0.0
        %1298 = vmatpush1.msra.mxu0 %v1293
        %1299 = vmatprep.subr.mxu0 0.0
        %1300 = vmatpush1.msra.mxu0 0.0
        %1301 = vmatprep.subr.mxu0 0.0
        %1302 = vmatpush1.msra.mxu0 0.0
        %1303 = vmatprep.subr.mxu0 0.0
        %1304 = vmatpush1.msra.mxu0 0.0
        %1305 = vmatprep.subr.mxu0 0.0
        %1306 = vmatpush1.msra.mxu0 0.0
        %1307 = vmatprep.subr.mxu0 0.0
        %1308 = vmatpush1.msra.mxu0 0.0
        %1309 = vmatprep.subr.mxu0 0.0
        %1310 = vmatpush1.msra.mxu0 0.0
        %1311 = vmatprep.subr.mxu0 0.0
        %1312 = vmatpush1.msra.mxu0 0.0
        %1313 = vmatprep.subr.mxu0 0.0
        %1314 = vmatpush1.msra.mxu0 0.0
        %1315 = vmatprep.subr.mxu0 0.0
        %1316 = vmatpush1.msra.mxu0 0.0
        %1317 = vmatprep.subr.mxu0 0.0
        %1318 = vmatpush1.msra.mxu0 0.0
        %1319 = vmatprep.subr.mxu0 0.0
        %1320 = vmatpush1.msra.mxu0 0.0
        %1321 = vmatprep.subr.mxu0 0.0
        %1322 = vmatpush1.msra.mxu0 0.0
        %1323 = vmatprep.subr.mxu0 0.0
        %1324 = vmatpush1.msra.mxu0 0.0
        %1325 = vmatprep.subr.mxu0 0.0
        %1326 = vmatpush1.msra.mxu0 0.0
        %1327 = vmatprep.subr.mxu0 0.0
        %1328 = vmatpush1.msra.mxu0 0.0
        %1329 = vmatprep.subr.mxu0 0.0
        %1330 = vmatpush1.msra.mxu0 0.0
        %1331 = vmatprep.subr.mxu0 0.0
        %1332 = vmatpush1.msra.mxu0 0.0
        %1333 = vmatprep.subr.mxu0 0.0
        %1334 = vmatpush1.msra.mxu0 0.0
        %1335 = vmatprep.subr.mxu0 0.0
        %1336 = vmatpush1.msra.mxu0 0.0
        %1337 = vmatprep.subr.mxu0 0.0
        %1338 = vmatpush1.msra.mxu0 0.0
        %1339 = vmatprep.subr.mxu0 0.0
        %1340 = vmatpush1.msra.mxu0 0.0
        %1341 = vmatprep.subr.mxu0 0.0
        %1342 = vmatpush1.msra.mxu0 0.0
        %1343 = vmatprep.subr.mxu0 0.0
        %1344 = vmatpush1.msra.mxu0 0.0
        %1345 = vmatprep.subr.mxu0 0.0
        %1346 = vmatpush1.msra.mxu0 0.0
        %1347 = vmatprep.subr.mxu0 0.0
        %1348 = vmatpush1.msra.mxu0 0.0
        %1349 = vmatprep.subr.mxu0 0.0
        %1350 = vmatpush1.msra.mxu0 0.0
        %1351 = vmatprep.subr.mxu0 0.0
        %1352 = vmatpush1.msra.mxu0 0.0
        %1353 = vmatprep.subr.mxu0 0.0
        %1354 = vmatpush1.msra.mxu0 0.0
        %1355 = vmatprep.subr.mxu0 0.0
        %1356 = vmatpush1.msra.mxu0 0.0
        %1357 = vmatprep.subr.mxu0 0.0
        %1358 = vmatpush1.msra.mxu0 0.0
        %1359 = vmatprep.subr.mxu0 0.0
        %1360 = vmatpush1.msra.mxu0 0.0
        %1361 = vmatprep.mubr.f32.mxu0 0.0
        %1362 = vmatmul.mubr.f32.gmra.mrb[0].mxu0 %v1295
        %v1363 = vpop.f32.mrb[0].mxu0
        %v1364 = vadd.f32 0.0, %v1363
        %v1365 = vpop.f32.mrb[0].mxu0
        %1366 = vdwg.mxu0
        %v1367 = vadd.f32 %v1122, %v1364
        %v1368 = vld [vmem:[%s3] sm:$0x1]
        %v1370 = vlaneseq
        %v1371 = vshrl.u32 %v1370, 7
        %v1372 = vsub.s32 0, %v1371
        %v1373 = vrot.slane %v1368, %v1372
        %v1375 = vadd.f32 %v1367, %v1373
        %vm1376 = vcmask 261120
        %1377 = vst.msk [vmem:[%s288] sm:$0xff] %vm1376, %v1375
        %s1378 = sand.u32 %s138, 1
        %s1379 = scalar_lea.sflag [#allocation5], %s1378
        %s1380 = sand.u32 %s138, 1
        %s1381 = smul.addr %s1380, 8
        %s1382 = scalar_lea.vmem [#allocation9], %s1381
        %s1383 = sand.u32 %s166, 1
        %s1384 = scalar_lea.sflag [#allocation11], %s1383
        %s1385 = sand.u32 %s166, 1
        %s1386 = smul.addr %s1385, 32
        %s1387 = scalar_lea.vmem [#allocation10], %s1386
        // Predicated region
        $region53: #{tpu_custom_call.1} parent=35 // pred_check
          %p1388 = pneg %p148
        $region54: #{tpu_custom_call.1} parent=35 // pred_check_branch
          %1390 = sbr.rel (%p1388) target = $region56
        $region55: #{tpu_custom_call.1} parent=35 // pred_region
          %s1392 = ssub.s32 128, 128
          %1393 = vsyncadd %s1379, %s1392
          %s1394 = sadd.s32 %s32, %s31
          %s1395 = smul.addr %s1394, 128
          %s1396 = scalar_lea.hbm %s4, %s1395
          %s1398 = sshll.u32 %s1382, 4
          %s1399 = int_to_ptr.vmem [resolvable:$true] %s1398
          %1401 = dma.vmem_to_hbm [thread:$0]  %s1399, 128, %s1396, %s1379
        $region56: #{tpu_custom_call.1} parent=35 // pred_fallthru
          _
        // Predicated region
        $region57: #{tpu_custom_call.1} parent=35 // pred_check
          %p1402 = pneg %p176
        $region58: #{tpu_custom_call.1} parent=35 // pred_check_branch
          %1404 = sbr.rel (%p1402) target = $region60
        $region59: #{tpu_custom_call.1} parent=35 // pred_region
          %s1406 = ssub.s32 512, 512
          %1407 = vsyncadd %s1384, %s1406
          %s1408 = smul.addr %s31, 4
          %s1409 = sadd.s32 %s32, %s1408
          %s1410 = smul.addr %s1409, 128
          %s1411 = scalar_lea.hbm %s5, %s1410
          %s1412 = sshll.u32 %s1387, 4
          %s1413 = int_to_ptr.vmem [resolvable:$true] %s1412
          %1418 = dma.vmem_to_hbm [thread:$0]  %s1413, 512, %s1411, %s1384, 128, 128, 8
        $region60: #{tpu_custom_call.1} parent=35 // pred_fallthru
          _
      $region36: #{tpu_custom_call.1} parent=5 // pred_fallthru
        _
      %p1419 = scmp.le.s32.totalorder 2, %s22
      // Predicated region
      $region61: #{tpu_custom_call.1} parent=5 // pred_check
        %p1420 = pneg %p1419
      $region62: #{tpu_custom_call.1} parent=5 // pred_check_branch
        %1422 = sbr.rel (%p1420) target = $region64
      $region63: #{tpu_custom_call.1} parent=5 // pred_region
        %s1423 = ssub.s32 %s22, 2
        // Predicated region
        $region65: #{tpu_custom_call.1} parent=63 // pred_check
          %p1424 = pneg %p154
        $region66: #{tpu_custom_call.1} parent=63 // pred_check_branch
          %1426 = sbr.rel (%p1424) target = $region68
        $region67: #{tpu_custom_call.1} parent=63 // pred_region
          %s1427 = sand.u32 %s139, 1
          %s1428 = scalar_lea.sflag [#allocation5], %s1427
          %s1429 = sand.u32 %s139, 1
          %s1430 = smul.addr %s1429, 8
          %s1431 = scalar_lea.vmem [#allocation9], %s1430
          %1432 = dma.done %s1428, 128
        $region68: #{tpu_custom_call.1} parent=63 // pred_fallthru
          _
        // Predicated region
        $region69: #{tpu_custom_call.1} parent=63 // pred_check
          %p1433 = pneg %p182
        $region70: #{tpu_custom_call.1} parent=63 // pred_check_branch
          %1435 = sbr.rel (%p1433) target = $region72
        $region71: #{tpu_custom_call.1} parent=63 // pred_region
          %s1436 = sand.u32 %s167, 1
          %s1437 = scalar_lea.sflag [#allocation11], %s1436
          %s1438 = sand.u32 %s167, 1
          %s1439 = smul.addr %s1438, 32
          %s1440 = scalar_lea.vmem [#allocation10], %s1439
          %1441 = dma.done %s1437, 512
        $region72: #{tpu_custom_call.1} parent=63 // pred_fallthru
          _
      $region64: #{tpu_custom_call.1} parent=5 // pred_fallthru
        _
    $region6: #{tpu_custom_call.1} parent=1 // loop_footer
      %s26 = sadd.s32 1, %s22
    $region7: #{tpu_custom_call.1} parent=1 // loop_footer_branch
      %21 = sbr.rel target = $region3
    $region8: #{tpu_custom_call.1} parent=1 // loop_exit
      _
    %1442 = vsyncpa [#allocation4], 1
    %s1443 = scalar_lea.sflag [#allocation4], 1
    %1444 = vsyncpa %s1443, 1
    %1445 = vsyncpa [#allocation7], 1
    %1446 = vsyncpa [#allocation5], 1
    %s1447 = scalar_lea.sflag [#allocation5], 1
    %1448 = vsyncpa %s1447, 1
    %1449 = vsyncpa [#allocation11], 1
    %s1450 = scalar_lea.sflag [#allocation11], 1
    %1451 = vsyncpa %s1450, 1

</llo_original>
